<compile_context>
chip_gen: v7x
topology: tpu7x:2x2x1
jax: 0.10.0
libtpu: 0.0.40
codegen_flags: <defaults>
</compile_context>

<pallas_src>
import functools

import jax
import jax.numpy as jnp
from jax.experimental import pallas as pl
from jax.experimental.pallas import tpu as pltpu


# ---------------------------------------------------------------------------
# Fused kernel factory
# ---------------------------------------------------------------------------

def _make_fused_kernel(*, H, W, Wo, stride, TO, has_expand, use_res):
    """Build the fused expand->depthwise->project kernel for static config."""
    RH = (TO - 1) * stride + 3          # padded input rows needed per row tile

    def kernel(*refs):
        x_ref = refs[0]                 # (H+2, Wp, Cin) padded input, resident per image
        if has_expand:
            w1_ref, s1_ref, b1_ref = refs[1:4]
            rest = refs[4:]
        else:
            rest = refs[1:]
        wdw_ref, s2_ref, b2_ref, w3_ref, s3_ref, b3_ref, o_ref, hp_ref = rest

        t = pl.program_id(1)
        p0 = t * (TO * stride)          # first padded-input row of this row tile
        Wp = x_ref.shape[1]             # padded, 8-aligned width

        # ---- stage 1: expand 1x1 + BN + ReLU6 into the padded-hidden scratch.
        # The spatial zero padding of the *hidden* tensor is rebuilt by masking:
        # padded rows 0 / H+1 and padded cols 0 / >W must stay exactly zero.
        if has_expand:
            col = jax.lax.broadcasted_iota(jnp.int32, (Wp, 1), 0)
            col_mask = ((col >= 1) & (col <= W)).astype(jnp.float32)
        for r in range(RH):
            pr = p0 + r                 # padded row index in [0, H+1]
            xrow = x_ref[pr]            # (Wp, Cin)
            if has_expand:
                hrow = jnp.dot(xrow, w1_ref[...],
                               preferred_element_type=jnp.float32)
                hrow = jnp.clip(hrow * s1_ref[...] + b1_ref[...], 0.0, 6.0)
                interior = jnp.logical_and(pr >= 1, pr <= H).astype(jnp.float32)
                hp_ref[r] = hrow * (col_mask * interior)
            else:
                # expand_ratio == 1: hidden == input, halo already zero in x_pad
                hp_ref[r] = xrow.astype(jnp.float32)

        # ---- stages 2+3: depthwise 3x3 (stride folded in) + BN + ReLU6, then
        # project 1x1 + BN (+ residual), one output row at a time.
        for i in range(TO):
            acc = jnp.zeros((Wo, hp_ref.shape[-1]), jnp.float32)
            for dy in range(3):
                row = i * stride + dy
                for dx in range(3):
                    if stride == 1:
                        tap = hp_ref[row, pl.ds(dx, Wo), :]
                    else:
                        tap = hp_ref[row, pl.ds(dx, Wo, stride=stride), :]
                    acc = acc + tap * wdw_ref[pl.ds(3 * dy + dx, 1), :]
            hrow = jnp.clip(acc * s2_ref[...] + b2_ref[...], 0.0, 6.0)
            yrow = jnp.dot(hrow, w3_ref[...], preferred_element_type=jnp.float32)
            yrow = yrow * s3_ref[...] + b3_ref[...]
            if use_res:
                # residual comes from the resident padded input (interior slice)
                yrow = yrow + x_ref[p0 + i + 1, pl.ds(1, W), :]
            o_ref[i] = yrow.astype(o_ref.dtype)

    return kernel


def _pick_row_tile(ho, max_rows=8):
    """Largest row tile <= max_rows dividing ho, preferring >= 4 tiles/image."""
    for min_tiles in (4, 2, 1):
        best = 0
        for d in range(1, min(ho, max_rows) + 1):
            if ho % d == 0 and ho // d >= min_tiles:
                best = d
        if best:
            return best
    return ho


# ---------------------------------------------------------------------------
# Wrappers
# ---------------------------------------------------------------------------

def inverted_residual_nhwc(x_nhwc, params, stride, expand_ratio):
    n, h, w, cin = x_nhwc.shape
    chid = params["w_dw"].shape[-1]
    oup = params["w3"].shape[1]
    ho = (h - 1) // stride + 1
    wo = (w - 1) // stride + 1
    use_res = (stride == 1) and (cin == oup)
    has_expand = expand_ratio != 1

    to = _pick_row_tile(ho)
    n_row_tiles = ho // to
    rh = (to - 1) * stride + 3

    # 1px halo pad of the SMALL pre-expansion input; right-pad width to a
    # sublane-friendly multiple of 8 (extra columns are zero, masked in-kernel).
    wp = ((w + 2 + 7) // 8) * 8
    x_pad = jnp.pad(x_nhwc, ((0, 0), (1, 1), (1, wp - (w + 1)), (0, 0)))

    kernel = _make_fused_kernel(H=h, W=w, Wo=wo, stride=stride, TO=to,
                                has_expand=has_expand, use_res=use_res)

    args = [x_pad]
    in_specs = [pl.BlockSpec((None, h + 2, wp, cin), lambda ni, ti: (ni, 0, 0, 0))]
    if has_expand:
        args += [params["w1"], params["s1"].reshape(1, chid),
                 params["b1"].reshape(1, chid)]
        in_specs += [pl.BlockSpec((cin, chid), lambda ni, ti: (0, 0)),
                     pl.BlockSpec((1, chid), lambda ni, ti: (0, 0)),
                     pl.BlockSpec((1, chid), lambda ni, ti: (0, 0))]
    args += [params["w_dw"].reshape(9, chid),
             params["s2"].reshape(1, chid), params["b2"].reshape(1, chid),
             params["w3"],
             params["s3"].reshape(1, oup), params["b3"].reshape(1, oup)]
    in_specs += [pl.BlockSpec((9, chid), lambda ni, ti: (0, 0)),
                 pl.BlockSpec((1, chid), lambda ni, ti: (0, 0)),
                 pl.BlockSpec((1, chid), lambda ni, ti: (0, 0)),
                 pl.BlockSpec((chid, oup), lambda ni, ti: (0, 0)),
                 pl.BlockSpec((1, oup), lambda ni, ti: (0, 0)),
                 pl.BlockSpec((1, oup), lambda ni, ti: (0, 0))]

    return pl.pallas_call(
        kernel,
        grid=(n, n_row_tiles),
        in_specs=in_specs,
        out_specs=pl.BlockSpec((None, to, wo, oup), lambda ni, ti: (ni, ti, 0, 0)),
        out_shape=jax.ShapeDtypeStruct((n, ho, wo, oup), x_nhwc.dtype),
        scratch_shapes=[pltpu.VMEM((rh, wp, chid), jnp.float32)],
        compiler_params=pltpu.CompilerParams(
            dimension_semantics=("parallel", "parallel")),
    )(*args)


@functools.partial(jax.jit, static_argnames=("stride", "expand_ratio"))
def inverted_residual(x_nchw, params, stride, expand_ratio):
    """Module-compatible entry point (NCHW in / NCHW out, like PyTorch)."""
    x = jnp.transpose(x_nchw, (0, 2, 3, 1))   # NCHW -> NHWC (boundary only)
    y = inverted_residual_nhwc(x, params, stride, expand_ratio)
    return jnp.transpose(y, (0, 3, 1, 2))     # NHWC -> NCHW


# ---------------------------------------------------------------------------
# Pure-JAX reference (correctness check)
# ---------------------------------------------------------------------------

def reference(x_nchw, p, stride, expand_ratio):
    x = jnp.transpose(x_nchw, (0, 2, 3, 1))
    h = x
    if expand_ratio != 1:
        h = jnp.einsum("nhwc,co->nhwo", h, p["w1"])
        h = jnp.clip(h * p["s1"] + p["b1"], 0.0, 6.0)
    c = h.shape[-1]
    dw = p["w_dw"].reshape(3, 3, 1, c)
    h = jax.lax.conv_general_dilated(
        h, dw, window_strides=(stride, stride), padding=((1, 1), (1, 1)),
        dimension_numbers=("NHWC", "HWIO", "NHWC"), feature_group_count=c)
    h = jnp.clip(h * p["s2"] + p["b2"], 0.0, 6.0)
    h = jnp.einsum("nhwc,co->nhwo", h, p["w3"])
    h = h * p["s3"] + p["b3"]
    if stride == 1 and x_nchw.shape[1] == p["w3"].shape[1]:
        h = h + x
    return jnp.transpose(h, (0, 3, 1, 2))


# ---------------------------------------------------------------------------
# Deterministic parameter init (matches the PyTorch module's shapes)
# ---------------------------------------------------------------------------

def _make_bn(key, c, eps=1e-5):
    k1, k2, k3, k4 = jax.random.split(key, 4)
    gamma = 1.0 + 0.1 * jax.random.normal(k1, (c,), jnp.float32)
    beta = 0.1 * jax.random.normal(k2, (c,), jnp.float32)
    mean = 0.1 * jax.random.normal(k3, (c,), jnp.float32)
    var = jnp.abs(jax.random.normal(k4, (c,), jnp.float32)) + 0.5
    scale = gamma / jnp.sqrt(var + eps)
    bias = beta - mean * scale
    return scale, bias


def init_params(key, inp, oup, expand_ratio):
    hidden = int(round(expand_ratio * inp))
    ks = jax.random.split(key, 6)
    p = {}
    if expand_ratio != 1:
        # PyTorch Conv2d weight (hidden, inp, 1, 1) -> (inp, hidden) matmul layout
        p["w1"] = 0.1 * jax.random.normal(ks[0], (inp, hidden), jnp.float32)
        p["s1"], p["b1"] = _make_bn(ks[1], hidden)
    # depthwise weight (hidden, 1, 3, 3) -> (3, 3, hidden)
    p["w_dw"] = 0.1 * jax.random.normal(ks[2], (3, 3, hidden), jnp.float32)
    p["s2"], p["b2"] = _make_bn(ks[3], hidden)
    # PyTorch Conv2d weight (oup, hidden, 1, 1) -> (hidden, oup)
    p["w3"] = 0.1 * jax.random.normal(ks[4], (hidden, oup), jnp.float32)
    p["s3"], p["b3"] = _make_bn(ks[5], oup)
    return p


# ---------------------------------------------------------------------------

if __name__ == "__main__":
    key = jax.random.PRNGKey(0)
    kp, kx = jax.random.split(key)

    # InvertedResidual(inp=4, oup=4, stride=1, expand_ratio=4) -> hidden_dim=16,
    # use_res_connect=True
    inp, oup, stride, expand_ratio = 4, 4, 1, 4
    N, H, W = 2, 16, 16

    params = init_params(kp, inp, oup, expand_ratio)
    x = jax.random.normal(kx, (N, inp, H, W), jnp.float32)  # NCHW like PyTorch

    y = inverted_residual(x, params, stride, expand_ratio)
    y = jax.block_until_ready(y)

    y_ref = reference(x, params, stride, expand_ratio)
    assert y.shape == y_ref.shape == (N, oup, H, W)
    assert jnp.allclose(y, y_ref, atol=2e-4, rtol=2e-4), "Pallas output mismatch"

    print("KERNEL_OK")
</pallas_src>

<mosaic_0001>
module attributes {stable_mosaic.version = 11 : i64} {
  func.func @kernel(%arg0: i32, %arg1: i32, %arg2: memref<1x18x24x4xf32, #tpu.memory_space<vmem>>, %arg3: memref<4x16xf32, #tpu.memory_space<vmem>>, %arg4: memref<1x16xf32, #tpu.memory_space<vmem>>, %arg5: memref<1x16xf32, #tpu.memory_space<vmem>>, %arg6: memref<9x16xf32, #tpu.memory_space<vmem>>, %arg7: memref<1x16xf32, #tpu.memory_space<vmem>>, %arg8: memref<1x16xf32, #tpu.memory_space<vmem>>, %arg9: memref<16x4xf32, #tpu.memory_space<vmem>>, %arg10: memref<1x4xf32, #tpu.memory_space<vmem>>, %arg11: memref<1x4xf32, #tpu.memory_space<vmem>>, %arg12: memref<1x4x16x4xf32, #tpu.memory_space<vmem>>, %arg13: memref<6x24x16xf32, #tpu.memory_space<vmem>>) attributes {dimension_semantics = [#tpu.dimension_semantics<parallel>, #tpu.dimension_semantics<parallel>], iteration_bounds = array<i64: 2, 4>, scalar_prefetch = 0 : i64, scratch_operands = 1 : i64, tpu.core_type = #tpu.core_type<tc>, window_params = [{transform_indices = @transform_0, window_bounds = array<i64: 1, 18, 24, 4>}, {pipeline_mode = #tpu.pipeline_mode<synchronous>, transform_indices = @transform_1, window_bounds = array<i64: 4, 16>}, {pipeline_mode = #tpu.pipeline_mode<synchronous>, transform_indices = @transform_2, window_bounds = array<i64: 1, 16>}, {pipeline_mode = #tpu.pipeline_mode<synchronous>, transform_indices = @transform_3, window_bounds = array<i64: 1, 16>}, {pipeline_mode = #tpu.pipeline_mode<synchronous>, transform_indices = @transform_4, window_bounds = array<i64: 9, 16>}, {pipeline_mode = #tpu.pipeline_mode<synchronous>, transform_indices = @transform_5, window_bounds = array<i64: 1, 16>}, {pipeline_mode = #tpu.pipeline_mode<synchronous>, transform_indices = @transform_6, window_bounds = array<i64: 1, 16>}, {pipeline_mode = #tpu.pipeline_mode<synchronous>, transform_indices = @transform_7, window_bounds = array<i64: 16, 4>}, {pipeline_mode = #tpu.pipeline_mode<synchronous>, transform_indices = @transform_8, window_bounds = array<i64: 1, 4>}, {pipeline_mode = #tpu.pipeline_mode<synchronous>, transform_indices = @transform_9, window_bounds = array<i64: 1, 4>}, {transform_indices = @transform_10, window_bounds = array<i64: 1, 4, 16, 4>}]} {
    %c4_i32 = arith.constant 4 : i32
    %0 = arith.muli %arg1, %c4_i32 : i32
    %1 = tpu.iota {dimensions = array<i32: 0>} : vector<24x1xi32>
    %c1_i32 = arith.constant 1 : i32
    %2 = vector.broadcast %c1_i32 : i32 to vector<24x1xi32>
    %3 = arith.cmpi sge, %1, %2 : vector<24x1xi32>
    %c16_i32 = arith.constant 16 : i32
    %4 = vector.broadcast %c16_i32 : i32 to vector<24x1xi32>
    %5 = arith.cmpi sle, %1, %4 : vector<24x1xi32>
    %6 = arith.andi %3, %5 : vector<24x1xi1>
    %7 = arith.extui %6 : vector<24x1xi1> to vector<24x1xi32>
    %8 = arith.sitofp %7 : vector<24x1xi32> to vector<24x1xf32>
    %c0_i32 = arith.constant 0 : i32
    %9 = arith.addi %0, %c0_i32 : i32
    %c0 = arith.constant 0 : index
    %10 = arith.index_cast %9 : i32 to index
    %c0_0 = arith.constant 0 : index
    %c0_1 = arith.constant 0 : index
    %11 = vector.load %arg2[%c0, %10, %c0_0, %c0_1] : memref<1x18x24x4xf32, #tpu.memory_space<vmem>>, vector<1x1x24x4xf32>
    %12 = vector.shape_cast %11 : vector<1x1x24x4xf32> to vector<24x4xf32>
    %c0_2 = arith.constant 0 : index
    %c0_3 = arith.constant 0 : index
    %13 = vector.load %arg3[%c0_2, %c0_3] : memref<4x16xf32, #tpu.memory_space<vmem>>, vector<4x16xf32>
    %cst = arith.constant dense<0.000000e+00> : vector<24x16xf32>
    %14 = tpu.matmul %12, %13, %cst {dimension_numbers = #tpu.dot_dimension_numbers<[1], [0], [0], [1], [0, 0, 1, 1], [], []>} : vector<24x4xf32>, vector<4x16xf32>, vector<24x16xf32> -> vector<24x16xf32>
    %c0_4 = arith.constant 0 : index
    %c0_5 = arith.constant 0 : index
    %15 = vector.load %arg4[%c0_4, %c0_5] : memref<1x16xf32, #tpu.memory_space<vmem>>, vector<1x16xf32>
    %16 = vector.broadcast %15 : vector<1x16xf32> to vector<24x16xf32>
    %17 = arith.mulf %14, %16 : vector<24x16xf32>
    %c0_6 = arith.constant 0 : index
    %c0_7 = arith.constant 0 : index
    %18 = vector.load %arg5[%c0_6, %c0_7] : memref<1x16xf32, #tpu.memory_space<vmem>>, vector<1x16xf32>
    %19 = vector.broadcast %18 : vector<1x16xf32> to vector<24x16xf32>
    %20 = arith.addf %17, %19 : vector<24x16xf32>
    %cst_8 = arith.constant 0.000000e+00 : f32
    %cst_9 = arith.constant 6.000000e+00 : f32
    %21 = vector.broadcast %cst_8 : f32 to vector<24x16xf32>
    %22 = arith.maximumf %21, %20 : vector<24x16xf32>
    %23 = vector.broadcast %cst_9 : f32 to vector<24x16xf32>
    %24 = arith.minimumf %23, %22 : vector<24x16xf32>
    %c1_i32_10 = arith.constant 1 : i32
    %25 = arith.cmpi sge, %9, %c1_i32_10 : i32
    %c16_i32_11 = arith.constant 16 : i32
    %26 = arith.cmpi sle, %9, %c16_i32_11 : i32
    %27 = arith.andi %25, %26 : i1
    %28 = arith.extui %27 : i1 to i32
    %29 = arith.sitofp %28 : i32 to f32
    %30 = vector.broadcast %29 : f32 to vector<24x1xf32>
    %31 = arith.mulf %8, %30 : vector<24x1xf32>
    %32 = vector.broadcast %31 : vector<24x1xf32> to vector<24x16xf32>
    %33 = arith.mulf %24, %32 : vector<24x16xf32>
    %c0_12 = arith.constant 0 : index
    %c0_13 = arith.constant 0 : index
    %c0_14 = arith.constant 0 : index
    %34 = vector.load %arg13[%c0_12, %c0_13, %c0_14] : memref<6x24x16xf32, #tpu.memory_space<vmem>>, vector<1x24x16xf32>
    %35 = vector.shape_cast %34 : vector<1x24x16xf32> to vector<24x16xf32>
    %36 = vector.shape_cast %33 : vector<24x16xf32> to vector<1x24x16xf32>
    tpu.vector_store %arg13[%c0_12, %c0_13, %c0_14], %36 {strides = array<i32>} : memref<6x24x16xf32, #tpu.memory_space<vmem>>, vector<1x24x16xf32>,
    %c1_i32_15 = arith.constant 1 : i32
    %37 = arith.addi %0, %c1_i32_15 : i32
    %c0_16 = arith.constant 0 : index
    %38 = arith.index_cast %37 : i32 to index
    %c0_17 = arith.constant 0 : index
    %c0_18 = arith.constant 0 : index
    %39 = vector.load %arg2[%c0_16, %38, %c0_17, %c0_18] : memref<1x18x24x4xf32, #tpu.memory_space<vmem>>, vector<1x1x24x4xf32>
    %40 = vector.shape_cast %39 : vector<1x1x24x4xf32> to vector<24x4xf32>
    %c0_19 = arith.constant 0 : index
    %c0_20 = arith.constant 0 : index
    %41 = vector.load %arg3[%c0_19, %c0_20] : memref<4x16xf32, #tpu.memory_space<vmem>>, vector<4x16xf32>
    %cst_21 = arith.constant dense<0.000000e+00> : vector<24x16xf32>
    %42 = tpu.matmul %40, %41, %cst_21 {dimension_numbers = #tpu.dot_dimension_numbers<[1], [0], [0], [1], [0, 0, 1, 1], [], []>} : vector<24x4xf32>, vector<4x16xf32>, vector<24x16xf32> -> vector<24x16xf32>
    %c0_22 = arith.constant 0 : index
    %c0_23 = arith.constant 0 : index
    %43 = vector.load %arg4[%c0_22, %c0_23] : memref<1x16xf32, #tpu.memory_space<vmem>>, vector<1x16xf32>
    %44 = vector.broadcast %43 : vector<1x16xf32> to vector<24x16xf32>
    %45 = arith.mulf %42, %44 : vector<24x16xf32>
    %c0_24 = arith.constant 0 : index
    %c0_25 = arith.constant 0 : index
    %46 = vector.load %arg5[%c0_24, %c0_25] : memref<1x16xf32, #tpu.memory_space<vmem>>, vector<1x16xf32>
    %47 = vector.broadcast %46 : vector<1x16xf32> to vector<24x16xf32>
    %48 = arith.addf %45, %47 : vector<24x16xf32>
    %cst_26 = arith.constant 0.000000e+00 : f32
    %cst_27 = arith.constant 6.000000e+00 : f32
    %49 = vector.broadcast %cst_26 : f32 to vector<24x16xf32>
    %50 = arith.maximumf %49, %48 : vector<24x16xf32>
    %51 = vector.broadcast %cst_27 : f32 to vector<24x16xf32>
    %52 = arith.minimumf %51, %50 : vector<24x16xf32>
    %c1_i32_28 = arith.constant 1 : i32
    %53 = arith.cmpi sge, %37, %c1_i32_28 : i32
    %c16_i32_29 = arith.constant 16 : i32
    %54 = arith.cmpi sle, %37, %c16_i32_29 : i32
    %55 = arith.andi %53, %54 : i1
    %56 = arith.extui %55 : i1 to i32
    %57 = arith.sitofp %56 : i32 to f32
    %58 = vector.broadcast %57 : f32 to vector<24x1xf32>
    %59 = arith.mulf %8, %58 : vector<24x1xf32>
    %60 = vector.broadcast %59 : vector<24x1xf32> to vector<24x16xf32>
    %61 = arith.mulf %52, %60 : vector<24x16xf32>
    %c1 = arith.constant 1 : index
    %c0_30 = arith.constant 0 : index
    %c0_31 = arith.constant 0 : index
    %62 = vector.load %arg13[%c1, %c0_30, %c0_31] : memref<6x24x16xf32, #tpu.memory_space<vmem>>, vector<1x24x16xf32>
    %63 = vector.shape_cast %62 : vector<1x24x16xf32> to vector<24x16xf32>
    %64 = vector.shape_cast %61 : vector<24x16xf32> to vector<1x24x16xf32>
    tpu.vector_store %arg13[%c1, %c0_30, %c0_31], %64 {strides = array<i32>} : memref<6x24x16xf32, #tpu.memory_space<vmem>>, vector<1x24x16xf32>,
    %c2_i32 = arith.constant 2 : i32
    %65 = arith.addi %0, %c2_i32 : i32
    %c0_32 = arith.constant 0 : index
    %66 = arith.index_cast %65 : i32 to index
    %c0_33 = arith.constant 0 : index
    %c0_34 = arith.constant 0 : index
    %67 = vector.load %arg2[%c0_32, %66, %c0_33, %c0_34] : memref<1x18x24x4xf32, #tpu.memory_space<vmem>>, vector<1x1x24x4xf32>
    %68 = vector.shape_cast %67 : vector<1x1x24x4xf32> to vector<24x4xf32>
    %c0_35 = arith.constant 0 : index
    %c0_36 = arith.constant 0 : index
    %69 = vector.load %arg3[%c0_35, %c0_36] : memref<4x16xf32, #tpu.memory_space<vmem>>, vector<4x16xf32>
    %cst_37 = arith.constant dense<0.000000e+00> : vector<24x16xf32>
    %70 = tpu.matmul %68, %69, %cst_37 {dimension_numbers = #tpu.dot_dimension_numbers<[1], [0], [0], [1], [0, 0, 1, 1], [], []>} : vector<24x4xf32>, vector<4x16xf32>, vector<24x16xf32> -> vector<24x16xf32>
    %c0_38 = arith.constant 0 : index
    %c0_39 = arith.constant 0 : index
    %71 = vector.load %arg4[%c0_38, %c0_39] : memref<1x16xf32, #tpu.memory_space<vmem>>, vector<1x16xf32>
    %72 = vector.broadcast %71 : vector<1x16xf32> to vector<24x16xf32>
    %73 = arith.mulf %70, %72 : vector<24x16xf32>
    %c0_40 = arith.constant 0 : index
    %c0_41 = arith.constant 0 : index
    %74 = vector.load %arg5[%c0_40, %c0_41] : memref<1x16xf32, #tpu.memory_space<vmem>>, vector<1x16xf32>
    %75 = vector.broadcast %74 : vector<1x16xf32> to vector<24x16xf32>
    %76 = arith.addf %73, %75 : vector<24x16xf32>
    %cst_42 = arith.constant 0.000000e+00 : f32
    %cst_43 = arith.constant 6.000000e+00 : f32
    %77 = vector.broadcast %cst_42 : f32 to vector<24x16xf32>
    %78 = arith.maximumf %77, %76 : vector<24x16xf32>
    %79 = vector.broadcast %cst_43 : f32 to vector<24x16xf32>
    %80 = arith.minimumf %79, %78 : vector<24x16xf32>
    %c1_i32_44 = arith.constant 1 : i32
    %81 = arith.cmpi sge, %65, %c1_i32_44 : i32
    %c16_i32_45 = arith.constant 16 : i32
    %82 = arith.cmpi sle, %65, %c16_i32_45 : i32
    %83 = arith.andi %81, %82 : i1
    %84 = arith.extui %83 : i1 to i32
    %85 = arith.sitofp %84 : i32 to f32
    %86 = vector.broadcast %85 : f32 to vector<24x1xf32>
    %87 = arith.mulf %8, %86 : vector<24x1xf32>
    %88 = vector.broadcast %87 : vector<24x1xf32> to vector<24x16xf32>
    %89 = arith.mulf %80, %88 : vector<24x16xf32>
    %c2 = arith.constant 2 : index
    %c0_46 = arith.constant 0 : index
    %c0_47 = arith.constant 0 : index
    %90 = vector.load %arg13[%c2, %c0_46, %c0_47] : memref<6x24x16xf32, #tpu.memory_space<vmem>>, vector<1x24x16xf32>
    %91 = vector.shape_cast %90 : vector<1x24x16xf32> to vector<24x16xf32>
    %92 = vector.shape_cast %89 : vector<24x16xf32> to vector<1x24x16xf32>
    tpu.vector_store %arg13[%c2, %c0_46, %c0_47], %92 {strides = array<i32>} : memref<6x24x16xf32, #tpu.memory_space<vmem>>, vector<1x24x16xf32>,
    %c3_i32 = arith.constant 3 : i32
    %93 = arith.addi %0, %c3_i32 : i32
    %c0_48 = arith.constant 0 : index
    %94 = arith.index_cast %93 : i32 to index
    %c0_49 = arith.constant 0 : index
    %c0_50 = arith.constant 0 : index
    %95 = vector.load %arg2[%c0_48, %94, %c0_49, %c0_50] : memref<1x18x24x4xf32, #tpu.memory_space<vmem>>, vector<1x1x24x4xf32>
    %96 = vector.shape_cast %95 : vector<1x1x24x4xf32> to vector<24x4xf32>
    %c0_51 = arith.constant 0 : index
    %c0_52 = arith.constant 0 : index
    %97 = vector.load %arg3[%c0_51, %c0_52] : memref<4x16xf32, #tpu.memory_space<vmem>>, vector<4x16xf32>
    %cst_53 = arith.constant dense<0.000000e+00> : vector<24x16xf32>
    %98 = tpu.matmul %96, %97, %cst_53 {dimension_numbers = #tpu.dot_dimension_numbers<[1], [0], [0], [1], [0, 0, 1, 1], [], []>} : vector<24x4xf32>, vector<4x16xf32>, vector<24x16xf32> -> vector<24x16xf32>
    %c0_54 = arith.constant 0 : index
    %c0_55 = arith.constant 0 : index
    %99 = vector.load %arg4[%c0_54, %c0_55] : memref<1x16xf32, #tpu.memory_space<vmem>>, vector<1x16xf32>
    %100 = vector.broadcast %99 : vector<1x16xf32> to vector<24x16xf32>
    %101 = arith.mulf %98, %100 : vector<24x16xf32>
    %c0_56 = arith.constant 0 : index
    %c0_57 = arith.constant 0 : index
    %102 = vector.load %arg5[%c0_56, %c0_57] : memref<1x16xf32, #tpu.memory_space<vmem>>, vector<1x16xf32>
    %103 = vector.broadcast %102 : vector<1x16xf32> to vector<24x16xf32>
    %104 = arith.addf %101, %103 : vector<24x16xf32>
    %cst_58 = arith.constant 0.000000e+00 : f32
    %cst_59 = arith.constant 6.000000e+00 : f32
    %105 = vector.broadcast %cst_58 : f32 to vector<24x16xf32>
    %106 = arith.maximumf %105, %104 : vector<24x16xf32>
    %107 = vector.broadcast %cst_59 : f32 to vector<24x16xf32>
    %108 = arith.minimumf %107, %106 : vector<24x16xf32>
    %c1_i32_60 = arith.constant 1 : i32
    %109 = arith.cmpi sge, %93, %c1_i32_60 : i32
    %c16_i32_61 = arith.constant 16 : i32
    %110 = arith.cmpi sle, %93, %c16_i32_61 : i32
    %111 = arith.andi %109, %110 : i1
    %112 = arith.extui %111 : i1 to i32
    %113 = arith.sitofp %112 : i32 to f32
    %114 = vector.broadcast %113 : f32 to vector<24x1xf32>
    %115 = arith.mulf %8, %114 : vector<24x1xf32>
    %116 = vector.broadcast %115 : vector<24x1xf32> to vector<24x16xf32>
    %117 = arith.mulf %108, %116 : vector<24x16xf32>
    %c3 = arith.constant 3 : index
    %c0_62 = arith.constant 0 : index
    %c0_63 = arith.constant 0 : index
    %118 = vector.load %arg13[%c3, %c0_62, %c0_63] : memref<6x24x16xf32, #tpu.memory_space<vmem>>, vector<1x24x16xf32>
    %119 = vector.shape_cast %118 : vector<1x24x16xf32> to vector<24x16xf32>
    %120 = vector.shape_cast %117 : vector<24x16xf32> to vector<1x24x16xf32>
    tpu.vector_store %arg13[%c3, %c0_62, %c0_63], %120 {strides = array<i32>} : memref<6x24x16xf32, #tpu.memory_space<vmem>>, vector<1x24x16xf32>,
    %c4_i32_64 = arith.constant 4 : i32
    %121 = arith.addi %0, %c4_i32_64 : i32
    %c0_65 = arith.constant 0 : index
    %122 = arith.index_cast %121 : i32 to index
    %c0_66 = arith.constant 0 : index
    %c0_67 = arith.constant 0 : index
    %123 = vector.load %arg2[%c0_65, %122, %c0_66, %c0_67] : memref<1x18x24x4xf32, #tpu.memory_space<vmem>>, vector<1x1x24x4xf32>
    %124 = vector.shape_cast %123 : vector<1x1x24x4xf32> to vector<24x4xf32>
    %c0_68 = arith.constant 0 : index
    %c0_69 = arith.constant 0 : index
    %125 = vector.load %arg3[%c0_68, %c0_69] : memref<4x16xf32, #tpu.memory_space<vmem>>, vector<4x16xf32>
    %cst_70 = arith.constant dense<0.000000e+00> : vector<24x16xf32>
    %126 = tpu.matmul %124, %125, %cst_70 {dimension_numbers = #tpu.dot_dimension_numbers<[1], [0], [0], [1], [0, 0, 1, 1], [], []>} : vector<24x4xf32>, vector<4x16xf32>, vector<24x16xf32> -> vector<24x16xf32>
    %c0_71 = arith.constant 0 : index
    %c0_72 = arith.constant 0 : index
    %127 = vector.load %arg4[%c0_71, %c0_72] : memref<1x16xf32, #tpu.memory_space<vmem>>, vector<1x16xf32>
    %128 = vector.broadcast %127 : vector<1x16xf32> to vector<24x16xf32>
    %129 = arith.mulf %126, %128 : vector<24x16xf32>
    %c0_73 = arith.constant 0 : index
    %c0_74 = arith.constant 0 : index
    %130 = vector.load %arg5[%c0_73, %c0_74] : memref<1x16xf32, #tpu.memory_space<vmem>>, vector<1x16xf32>
    %131 = vector.broadcast %130 : vector<1x16xf32> to vector<24x16xf32>
    %132 = arith.addf %129, %131 : vector<24x16xf32>
    %cst_75 = arith.constant 0.000000e+00 : f32
    %cst_76 = arith.constant 6.000000e+00 : f32
    %133 = vector.broadcast %cst_75 : f32 to vector<24x16xf32>
    %134 = arith.maximumf %133, %132 : vector<24x16xf32>
    %135 = vector.broadcast %cst_76 : f32 to vector<24x16xf32>
    %136 = arith.minimumf %135, %134 : vector<24x16xf32>
    %c1_i32_77 = arith.constant 1 : i32
    %137 = arith.cmpi sge, %121, %c1_i32_77 : i32
    %c16_i32_78 = arith.constant 16 : i32
    %138 = arith.cmpi sle, %121, %c16_i32_78 : i32
    %139 = arith.andi %137, %138 : i1
    %140 = arith.extui %139 : i1 to i32
    %141 = arith.sitofp %140 : i32 to f32
    %142 = vector.broadcast %141 : f32 to vector<24x1xf32>
    %143 = arith.mulf %8, %142 : vector<24x1xf32>
    %144 = vector.broadcast %143 : vector<24x1xf32> to vector<24x16xf32>
    %145 = arith.mulf %136, %144 : vector<24x16xf32>
    %c4 = arith.constant 4 : index
    %c0_79 = arith.constant 0 : index
    %c0_80 = arith.constant 0 : index
    %146 = vector.load %arg13[%c4, %c0_79, %c0_80] : memref<6x24x16xf32, #tpu.memory_space<vmem>>, vector<1x24x16xf32>
    %147 = vector.shape_cast %146 : vector<1x24x16xf32> to vector<24x16xf32>
    %148 = vector.shape_cast %145 : vector<24x16xf32> to vector<1x24x16xf32>
    tpu.vector_store %arg13[%c4, %c0_79, %c0_80], %148 {strides = array<i32>} : memref<6x24x16xf32, #tpu.memory_space<vmem>>, vector<1x24x16xf32>,
    %c5_i32 = arith.constant 5 : i32
    %149 = arith.addi %0, %c5_i32 : i32
    %c0_81 = arith.constant 0 : index
    %150 = arith.index_cast %149 : i32 to index
    %c0_82 = arith.constant 0 : index
    %c0_83 = arith.constant 0 : index
    %151 = vector.load %arg2[%c0_81, %150, %c0_82, %c0_83] : memref<1x18x24x4xf32, #tpu.memory_space<vmem>>, vector<1x1x24x4xf32>
    %152 = vector.shape_cast %151 : vector<1x1x24x4xf32> to vector<24x4xf32>
    %c0_84 = arith.constant 0 : index
    %c0_85 = arith.constant 0 : index
    %153 = vector.load %arg3[%c0_84, %c0_85] : memref<4x16xf32, #tpu.memory_space<vmem>>, vector<4x16xf32>
    %cst_86 = arith.constant dense<0.000000e+00> : vector<24x16xf32>
    %154 = tpu.matmul %152, %153, %cst_86 {dimension_numbers = #tpu.dot_dimension_numbers<[1], [0], [0], [1], [0, 0, 1, 1], [], []>} : vector<24x4xf32>, vector<4x16xf32>, vector<24x16xf32> -> vector<24x16xf32>
    %c0_87 = arith.constant 0 : index
    %c0_88 = arith.constant 0 : index
    %155 = vector.load %arg4[%c0_87, %c0_88] : memref<1x16xf32, #tpu.memory_space<vmem>>, vector<1x16xf32>
    %156 = vector.broadcast %155 : vector<1x16xf32> to vector<24x16xf32>
    %157 = arith.mulf %154, %156 : vector<24x16xf32>
    %c0_89 = arith.constant 0 : index
    %c0_90 = arith.constant 0 : index
    %158 = vector.load %arg5[%c0_89, %c0_90] : memref<1x16xf32, #tpu.memory_space<vmem>>, vector<1x16xf32>
    %159 = vector.broadcast %158 : vector<1x16xf32> to vector<24x16xf32>
    %160 = arith.addf %157, %159 : vector<24x16xf32>
    %cst_91 = arith.constant 0.000000e+00 : f32
    %cst_92 = arith.constant 6.000000e+00 : f32
    %161 = vector.broadcast %cst_91 : f32 to vector<24x16xf32>
    %162 = arith.maximumf %161, %160 : vector<24x16xf32>
    %163 = vector.broadcast %cst_92 : f32 to vector<24x16xf32>
    %164 = arith.minimumf %163, %162 : vector<24x16xf32>
    %c1_i32_93 = arith.constant 1 : i32
    %165 = arith.cmpi sge, %149, %c1_i32_93 : i32
    %c16_i32_94 = arith.constant 16 : i32
    %166 = arith.cmpi sle, %149, %c16_i32_94 : i32
    %167 = arith.andi %165, %166 : i1
    %168 = arith.extui %167 : i1 to i32
    %169 = arith.sitofp %168 : i32 to f32
    %170 = vector.broadcast %169 : f32 to vector<24x1xf32>
    %171 = arith.mulf %8, %170 : vector<24x1xf32>
    %172 = vector.broadcast %171 : vector<24x1xf32> to vector<24x16xf32>
    %173 = arith.mulf %164, %172 : vector<24x16xf32>
    %c5 = arith.constant 5 : index
    %c0_95 = arith.constant 0 : index
    %c0_96 = arith.constant 0 : index
    %174 = vector.load %arg13[%c5, %c0_95, %c0_96] : memref<6x24x16xf32, #tpu.memory_space<vmem>>, vector<1x24x16xf32>
    %175 = vector.shape_cast %174 : vector<1x24x16xf32> to vector<24x16xf32>
    %176 = vector.shape_cast %173 : vector<24x16xf32> to vector<1x24x16xf32>
    tpu.vector_store %arg13[%c5, %c0_95, %c0_96], %176 {strides = array<i32>} : memref<6x24x16xf32, #tpu.memory_space<vmem>>, vector<1x24x16xf32>,
    %cst_97 = arith.constant 0.000000e+00 : f32
    %177 = vector.broadcast %cst_97 : f32 to vector<16x16xf32>
    %c0_98 = arith.constant 0 : index
    %c0_99 = arith.constant 0 : index
    %c0_100 = arith.constant 0 : index
    %178 = vector.load %arg13[%c0_98, %c0_99, %c0_100] : memref<6x24x16xf32, #tpu.memory_space<vmem>>, vector<1x16x16xf32>
    %179 = vector.shape_cast %178 : vector<1x16x16xf32> to vector<16x16xf32>
    %c0_101 = arith.constant 0 : index
    %c0_102 = arith.constant 0 : index
    %180 = vector.load %arg6[%c0_101, %c0_102] : memref<9x16xf32, #tpu.memory_space<vmem>>, vector<1x16xf32>
    %181 = vector.broadcast %180 : vector<1x16xf32> to vector<16x16xf32>
    %182 = arith.mulf %179, %181 : vector<16x16xf32>
    %183 = arith.addf %177, %182 : vector<16x16xf32>
    %c0_103 = arith.constant 0 : index
    %c1_104 = arith.constant 1 : index
    %c0_105 = arith.constant 0 : index
    %184 = vector.load %arg13[%c0_103, %c1_104, %c0_105] : memref<6x24x16xf32, #tpu.memory_space<vmem>>, vector<1x16x16xf32>
    %185 = vector.shape_cast %184 : vector<1x16x16xf32> to vector<16x16xf32>
    %c1_106 = arith.constant 1 : index
    %c0_107 = arith.constant 0 : index
    %186 = vector.load %arg6[%c1_106, %c0_107] : memref<9x16xf32, #tpu.memory_space<vmem>>, vector<1x16xf32>
    %187 = vector.broadcast %186 : vector<1x16xf32> to vector<16x16xf32>
    %188 = arith.mulf %185, %187 : vector<16x16xf32>
    %189 = arith.addf %183, %188 : vector<16x16xf32>
    %c0_108 = arith.constant 0 : index
    %c2_109 = arith.constant 2 : index
    %c0_110 = arith.constant 0 : index
    %190 = vector.load %arg13[%c0_108, %c2_109, %c0_110] : memref<6x24x16xf32, #tpu.memory_space<vmem>>, vector<1x16x16xf32>
    %191 = vector.shape_cast %190 : vector<1x16x16xf32> to vector<16x16xf32>
    %c2_111 = arith.constant 2 : index
    %c0_112 = arith.constant 0 : index
    %192 = vector.load %arg6[%c2_111, %c0_112] : memref<9x16xf32, #tpu.memory_space<vmem>>, vector<1x16xf32>
    %193 = vector.broadcast %192 : vector<1x16xf32> to vector<16x16xf32>
    %194 = arith.mulf %191, %193 : vector<16x16xf32>
    %195 = arith.addf %189, %194 : vector<16x16xf32>
    %c1_113 = arith.constant 1 : index
    %c0_114 = arith.constant 0 : index
    %c0_115 = arith.constant 0 : index
    %196 = vector.load %arg13[%c1_113, %c0_114, %c0_115] : memref<6x24x16xf32, #tpu.memory_space<vmem>>, vector<1x16x16xf32>
    %197 = vector.shape_cast %196 : vector<1x16x16xf32> to vector<16x16xf32>
    %c3_116 = arith.constant 3 : index
    %c0_117 = arith.constant 0 : index
    %198 = vector.load %arg6[%c3_116, %c0_117] : memref<9x16xf32, #tpu.memory_space<vmem>>, vector<1x16xf32>
    %199 = vector.broadcast %198 : vector<1x16xf32> to vector<16x16xf32>
    %200 = arith.mulf %197, %199 : vector<16x16xf32>
    %201 = arith.addf %195, %200 : vector<16x16xf32>
    %c1_118 = arith.constant 1 : index
    %c1_119 = arith.constant 1 : index
    %c0_120 = arith.constant 0 : index
    %202 = vector.load %arg13[%c1_118, %c1_119, %c0_120] : memref<6x24x16xf32, #tpu.memory_space<vmem>>, vector<1x16x16xf32>
    %203 = vector.shape_cast %202 : vector<1x16x16xf32> to vector<16x16xf32>
    %c4_121 = arith.constant 4 : index
    %c0_122 = arith.constant 0 : index
    %204 = vector.load %arg6[%c4_121, %c0_122] : memref<9x16xf32, #tpu.memory_space<vmem>>, vector<1x16xf32>
    %205 = vector.broadcast %204 : vector<1x16xf32> to vector<16x16xf32>
    %206 = arith.mulf %203, %205 : vector<16x16xf32>
    %207 = arith.addf %201, %206 : vector<16x16xf32>
    %c1_123 = arith.constant 1 : index
    %c2_124 = arith.constant 2 : index
    %c0_125 = arith.constant 0 : index
    %208 = vector.load %arg13[%c1_123, %c2_124, %c0_125] : memref<6x24x16xf32, #tpu.memory_space<vmem>>, vector<1x16x16xf32>
    %209 = vector.shape_cast %208 : vector<1x16x16xf32> to vector<16x16xf32>
    %c5_126 = arith.constant 5 : index
    %c0_127 = arith.constant 0 : index
    %210 = vector.load %arg6[%c5_126, %c0_127] : memref<9x16xf32, #tpu.memory_space<vmem>>, vector<1x16xf32>
    %211 = vector.broadcast %210 : vector<1x16xf32> to vector<16x16xf32>
    %212 = arith.mulf %209, %211 : vector<16x16xf32>
    %213 = arith.addf %207, %212 : vector<16x16xf32>
    %c2_128 = arith.constant 2 : index
    %c0_129 = arith.constant 0 : index
    %c0_130 = arith.constant 0 : index
    %214 = vector.load %arg13[%c2_128, %c0_129, %c0_130] : memref<6x24x16xf32, #tpu.memory_space<vmem>>, vector<1x16x16xf32>
    %215 = vector.shape_cast %214 : vector<1x16x16xf32> to vector<16x16xf32>
    %c6 = arith.constant 6 : index
    %c0_131 = arith.constant 0 : index
    %216 = vector.load %arg6[%c6, %c0_131] : memref<9x16xf32, #tpu.memory_space<vmem>>, vector<1x16xf32>
    %217 = vector.broadcast %216 : vector<1x16xf32> to vector<16x16xf32>
    %218 = arith.mulf %215, %217 : vector<16x16xf32>
    %219 = arith.addf %213, %218 : vector<16x16xf32>
    %c2_132 = arith.constant 2 : index
    %c1_133 = arith.constant 1 : index
    %c0_134 = arith.constant 0 : index
    %220 = vector.load %arg13[%c2_132, %c1_133, %c0_134] : memref<6x24x16xf32, #tpu.memory_space<vmem>>, vector<1x16x16xf32>
    %221 = vector.shape_cast %220 : vector<1x16x16xf32> to vector<16x16xf32>
    %c7 = arith.constant 7 : index
    %c0_135 = arith.constant 0 : index
    %222 = vector.load %arg6[%c7, %c0_135] : memref<9x16xf32, #tpu.memory_space<vmem>>, vector<1x16xf32>
    %223 = vector.broadcast %222 : vector<1x16xf32> to vector<16x16xf32>
    %224 = arith.mulf %221, %223 : vector<16x16xf32>
    %225 = arith.addf %219, %224 : vector<16x16xf32>
    %c2_136 = arith.constant 2 : index
    %c2_137 = arith.constant 2 : index
    %c0_138 = arith.constant 0 : index
    %226 = vector.load %arg13[%c2_136, %c2_137, %c0_138] : memref<6x24x16xf32, #tpu.memory_space<vmem>>, vector<1x16x16xf32>
    %227 = vector.shape_cast %226 : vector<1x16x16xf32> to vector<16x16xf32>
    %c8 = arith.constant 8 : index
    %c0_139 = arith.constant 0 : index
    %228 = vector.load %arg6[%c8, %c0_139] : memref<9x16xf32, #tpu.memory_space<vmem>>, vector<1x16xf32>
    %229 = vector.broadcast %228 : vector<1x16xf32> to vector<16x16xf32>
    %230 = arith.mulf %227, %229 : vector<16x16xf32>
    %231 = arith.addf %225, %230 : vector<16x16xf32>
    %c0_140 = arith.constant 0 : index
    %c0_141 = arith.constant 0 : index
    %232 = vector.load %arg7[%c0_140, %c0_141] : memref<1x16xf32, #tpu.memory_space<vmem>>, vector<1x16xf32>
    %233 = vector.broadcast %232 : vector<1x16xf32> to vector<16x16xf32>
    %234 = arith.mulf %231, %233 : vector<16x16xf32>
    %c0_142 = arith.constant 0 : index
    %c0_143 = arith.constant 0 : index
    %235 = vector.load %arg8[%c0_142, %c0_143] : memref<1x16xf32, #tpu.memory_space<vmem>>, vector<1x16xf32>
    %236 = vector.broadcast %235 : vector<1x16xf32> to vector<16x16xf32>
    %237 = arith.addf %234, %236 : vector<16x16xf32>
    %cst_144 = arith.constant 0.000000e+00 : f32
    %cst_145 = arith.constant 6.000000e+00 : f32
    %238 = vector.broadcast %cst_144 : f32 to vector<16x16xf32>
    %239 = arith.maximumf %238, %237 : vector<16x16xf32>
    %240 = vector.broadcast %cst_145 : f32 to vector<16x16xf32>
    %241 = arith.minimumf %240, %239 : vector<16x16xf32>
    %c0_146 = arith.constant 0 : index
    %c0_147 = arith.constant 0 : index
    %242 = vector.load %arg9[%c0_146, %c0_147] : memref<16x4xf32, #tpu.memory_space<vmem>>, vector<16x4xf32>
    %cst_148 = arith.constant dense<0.000000e+00> : vector<16x4xf32>
    %243 = tpu.matmul %241, %242, %cst_148 {dimension_numbers = #tpu.dot_dimension_numbers<[1], [0], [0], [1], [0, 0, 1, 1], [], []>} : vector<16x16xf32>, vector<16x4xf32>, vector<16x4xf32> -> vector<16x4xf32>
    %c0_149 = arith.constant 0 : index
    %c0_150 = arith.constant 0 : index
    %244 = vector.load %arg10[%c0_149, %c0_150] : memref<1x4xf32, #tpu.memory_space<vmem>>, vector<1x4xf32>
    %245 = vector.broadcast %244 : vector<1x4xf32> to vector<16x4xf32>
    %246 = arith.mulf %243, %245 : vector<16x4xf32>
    %c0_151 = arith.constant 0 : index
    %c0_152 = arith.constant 0 : index
    %247 = vector.load %arg11[%c0_151, %c0_152] : memref<1x4xf32, #tpu.memory_space<vmem>>, vector<1x4xf32>
    %248 = vector.broadcast %247 : vector<1x4xf32> to vector<16x4xf32>
    %249 = arith.addf %246, %248 : vector<16x4xf32>
    %c0_i32_153 = arith.constant 0 : i32
    %250 = arith.addi %0, %c0_i32_153 : i32
    %c1_i32_154 = arith.constant 1 : i32
    %251 = arith.addi %250, %c1_i32_154 : i32
    %c0_155 = arith.constant 0 : index
    %252 = arith.index_cast %251 : i32 to index
    %c1_156 = arith.constant 1 : index
    %c0_157 = arith.constant 0 : index
    %253 = vector.load %arg2[%c0_155, %252, %c1_156, %c0_157] : memref<1x18x24x4xf32, #tpu.memory_space<vmem>>, vector<1x1x16x4xf32>
    %254 = vector.shape_cast %253 : vector<1x1x16x4xf32> to vector<16x4xf32>
    %255 = arith.addf %249, %254 : vector<16x4xf32>
    %c0_158 = arith.constant 0 : index
    %c0_159 = arith.constant 0 : index
    %c0_160 = arith.constant 0 : index
    %c0_161 = arith.constant 0 : index
    %256 = vector.load %arg12[%c0_158, %c0_159, %c0_160, %c0_161] : memref<1x4x16x4xf32, #tpu.memory_space<vmem>>, vector<1x1x16x4xf32>
    %257 = vector.shape_cast %256 : vector<1x1x16x4xf32> to vector<16x4xf32>
    %258 = vector.shape_cast %255 : vector<16x4xf32> to vector<1x1x16x4xf32>
    tpu.vector_store %arg12[%c0_158, %c0_159, %c0_160, %c0_161], %258 {strides = array<i32>} : memref<1x4x16x4xf32, #tpu.memory_space<vmem>>, vector<1x1x16x4xf32>,
    %cst_162 = arith.constant 0.000000e+00 : f32
    %259 = vector.broadcast %cst_162 : f32 to vector<16x16xf32>
    %c1_163 = arith.constant 1 : index
    %c0_164 = arith.constant 0 : index
    %c0_165 = arith.constant 0 : index
    %260 = vector.load %arg13[%c1_163, %c0_164, %c0_165] : memref<6x24x16xf32, #tpu.memory_space<vmem>>, vector<1x16x16xf32>
    %261 = vector.shape_cast %260 : vector<1x16x16xf32> to vector<16x16xf32>
    %c0_166 = arith.constant 0 : index
    %c0_167 = arith.constant 0 : index
    %262 = vector.load %arg6[%c0_166, %c0_167] : memref<9x16xf32, #tpu.memory_space<vmem>>, vector<1x16xf32>
    %263 = vector.broadcast %262 : vector<1x16xf32> to vector<16x16xf32>
    %264 = arith.mulf %261, %263 : vector<16x16xf32>
    %265 = arith.addf %259, %264 : vector<16x16xf32>
    %c1_168 = arith.constant 1 : index
    %c1_169 = arith.constant 1 : index
    %c0_170 = arith.constant 0 : index
    %266 = vector.load %arg13[%c1_168, %c1_169, %c0_170] : memref<6x24x16xf32, #tpu.memory_space<vmem>>, vector<1x16x16xf32>
    %267 = vector.shape_cast %266 : vector<1x16x16xf32> to vector<16x16xf32>
    %c1_171 = arith.constant 1 : index
    %c0_172 = arith.constant 0 : index
    %268 = vector.load %arg6[%c1_171, %c0_172] : memref<9x16xf32, #tpu.memory_space<vmem>>, vector<1x16xf32>
    %269 = vector.broadcast %268 : vector<1x16xf32> to vector<16x16xf32>
    %270 = arith.mulf %267, %269 : vector<16x16xf32>
    %271 = arith.addf %265, %270 : vector<16x16xf32>
    %c1_173 = arith.constant 1 : index
    %c2_174 = arith.constant 2 : index
    %c0_175 = arith.constant 0 : index
    %272 = vector.load %arg13[%c1_173, %c2_174, %c0_175] : memref<6x24x16xf32, #tpu.memory_space<vmem>>, vector<1x16x16xf32>
    %273 = vector.shape_cast %272 : vector<1x16x16xf32> to vector<16x16xf32>
    %c2_176 = arith.constant 2 : index
    %c0_177 = arith.constant 0 : index
    %274 = vector.load %arg6[%c2_176, %c0_177] : memref<9x16xf32, #tpu.memory_space<vmem>>, vector<1x16xf32>
    %275 = vector.broadcast %274 : vector<1x16xf32> to vector<16x16xf32>
    %276 = arith.mulf %273, %275 : vector<16x16xf32>
    %277 = arith.addf %271, %276 : vector<16x16xf32>
    %c2_178 = arith.constant 2 : index
    %c0_179 = arith.constant 0 : index
    %c0_180 = arith.constant 0 : index
    %278 = vector.load %arg13[%c2_178, %c0_179, %c0_180] : memref<6x24x16xf32, #tpu.memory_space<vmem>>, vector<1x16x16xf32>
    %279 = vector.shape_cast %278 : vector<1x16x16xf32> to vector<16x16xf32>
    %c3_181 = arith.constant 3 : index
    %c0_182 = arith.constant 0 : index
    %280 = vector.load %arg6[%c3_181, %c0_182] : memref<9x16xf32, #tpu.memory_space<vmem>>, vector<1x16xf32>
    %281 = vector.broadcast %280 : vector<1x16xf32> to vector<16x16xf32>
    %282 = arith.mulf %279, %281 : vector<16x16xf32>
    %283 = arith.addf %277, %282 : vector<16x16xf32>
    %c2_183 = arith.constant 2 : index
    %c1_184 = arith.constant 1 : index
    %c0_185 = arith.constant 0 : index
    %284 = vector.load %arg13[%c2_183, %c1_184, %c0_185] : memref<6x24x16xf32, #tpu.memory_space<vmem>>, vector<1x16x16xf32>
    %285 = vector.shape_cast %284 : vector<1x16x16xf32> to vector<16x16xf32>
    %c4_186 = arith.constant 4 : index
    %c0_187 = arith.constant 0 : index
    %286 = vector.load %arg6[%c4_186, %c0_187] : memref<9x16xf32, #tpu.memory_space<vmem>>, vector<1x16xf32>
    %287 = vector.broadcast %286 : vector<1x16xf32> to vector<16x16xf32>
    %288 = arith.mulf %285, %287 : vector<16x16xf32>
    %289 = arith.addf %283, %288 : vector<16x16xf32>
    %c2_188 = arith.constant 2 : index
    %c2_189 = arith.constant 2 : index
    %c0_190 = arith.constant 0 : index
    %290 = vector.load %arg13[%c2_188, %c2_189, %c0_190] : memref<6x24x16xf32, #tpu.memory_space<vmem>>, vector<1x16x16xf32>
    %291 = vector.shape_cast %290 : vector<1x16x16xf32> to vector<16x16xf32>
    %c5_191 = arith.constant 5 : index
    %c0_192 = arith.constant 0 : index
    %292 = vector.load %arg6[%c5_191, %c0_192] : memref<9x16xf32, #tpu.memory_space<vmem>>, vector<1x16xf32>
    %293 = vector.broadcast %292 : vector<1x16xf32> to vector<16x16xf32>
    %294 = arith.mulf %291, %293 : vector<16x16xf32>
    %295 = arith.addf %289, %294 : vector<16x16xf32>
    %c3_193 = arith.constant 3 : index
    %c0_194 = arith.constant 0 : index
    %c0_195 = arith.constant 0 : index
    %296 = vector.load %arg13[%c3_193, %c0_194, %c0_195] : memref<6x24x16xf32, #tpu.memory_space<vmem>>, vector<1x16x16xf32>
    %297 = vector.shape_cast %296 : vector<1x16x16xf32> to vector<16x16xf32>
    %c6_196 = arith.constant 6 : index
    %c0_197 = arith.constant 0 : index
    %298 = vector.load %arg6[%c6_196, %c0_197] : memref<9x16xf32, #tpu.memory_space<vmem>>, vector<1x16xf32>
    %299 = vector.broadcast %298 : vector<1x16xf32> to vector<16x16xf32>
    %300 = arith.mulf %297, %299 : vector<16x16xf32>
    %301 = arith.addf %295, %300 : vector<16x16xf32>
    %c3_198 = arith.constant 3 : index
    %c1_199 = arith.constant 1 : index
    %c0_200 = arith.constant 0 : index
    %302 = vector.load %arg13[%c3_198, %c1_199, %c0_200] : memref<6x24x16xf32, #tpu.memory_space<vmem>>, vector<1x16x16xf32>
    %303 = vector.shape_cast %302 : vector<1x16x16xf32> to vector<16x16xf32>
    %c7_201 = arith.constant 7 : index
    %c0_202 = arith.constant 0 : index
    %304 = vector.load %arg6[%c7_201, %c0_202] : memref<9x16xf32, #tpu.memory_space<vmem>>, vector<1x16xf32>
    %305 = vector.broadcast %304 : vector<1x16xf32> to vector<16x16xf32>
    %306 = arith.mulf %303, %305 : vector<16x16xf32>
    %307 = arith.addf %301, %306 : vector<16x16xf32>
    %c3_203 = arith.constant 3 : index
    %c2_204 = arith.constant 2 : index
    %c0_205 = arith.constant 0 : index
    %308 = vector.load %arg13[%c3_203, %c2_204, %c0_205] : memref<6x24x16xf32, #tpu.memory_space<vmem>>, vector<1x16x16xf32>
    %309 = vector.shape_cast %308 : vector<1x16x16xf32> to vector<16x16xf32>
    %c8_206 = arith.constant 8 : index
    %c0_207 = arith.constant 0 : index
    %310 = vector.load %arg6[%c8_206, %c0_207] : memref<9x16xf32, #tpu.memory_space<vmem>>, vector<1x16xf32>
    %311 = vector.broadcast %310 : vector<1x16xf32> to vector<16x16xf32>
    %312 = arith.mulf %309, %311 : vector<16x16xf32>
    %313 = arith.addf %307, %312 : vector<16x16xf32>
    %c0_208 = arith.constant 0 : index
    %c0_209 = arith.constant 0 : index
    %314 = vector.load %arg7[%c0_208, %c0_209] : memref<1x16xf32, #tpu.memory_space<vmem>>, vector<1x16xf32>
    %315 = vector.broadcast %314 : vector<1x16xf32> to vector<16x16xf32>
    %316 = arith.mulf %313, %315 : vector<16x16xf32>
    %c0_210 = arith.constant 0 : index
    %c0_211 = arith.constant 0 : index
    %317 = vector.load %arg8[%c0_210, %c0_211] : memref<1x16xf32, #tpu.memory_space<vmem>>, vector<1x16xf32>
    %318 = vector.broadcast %317 : vector<1x16xf32> to vector<16x16xf32>
    %319 = arith.addf %316, %318 : vector<16x16xf32>
    %cst_212 = arith.constant 0.000000e+00 : f32
    %cst_213 = arith.constant 6.000000e+00 : f32
    %320 = vector.broadcast %cst_212 : f32 to vector<16x16xf32>
    %321 = arith.maximumf %320, %319 : vector<16x16xf32>
    %322 = vector.broadcast %cst_213 : f32 to vector<16x16xf32>
    %323 = arith.minimumf %322, %321 : vector<16x16xf32>
    %c0_214 = arith.constant 0 : index
    %c0_215 = arith.constant 0 : index
    %324 = vector.load %arg9[%c0_214, %c0_215] : memref<16x4xf32, #tpu.memory_space<vmem>>, vector<16x4xf32>
    %cst_216 = arith.constant dense<0.000000e+00> : vector<16x4xf32>
    %325 = tpu.matmul %323, %324, %cst_216 {dimension_numbers = #tpu.dot_dimension_numbers<[1], [0], [0], [1], [0, 0, 1, 1], [], []>} : vector<16x16xf32>, vector<16x4xf32>, vector<16x4xf32> -> vector<16x4xf32>
    %c0_217 = arith.constant 0 : index
    %c0_218 = arith.constant 0 : index
    %326 = vector.load %arg10[%c0_217, %c0_218] : memref<1x4xf32, #tpu.memory_space<vmem>>, vector<1x4xf32>
    %327 = vector.broadcast %326 : vector<1x4xf32> to vector<16x4xf32>
    %328 = arith.mulf %325, %327 : vector<16x4xf32>
    %c0_219 = arith.constant 0 : index
    %c0_220 = arith.constant 0 : index
    %329 = vector.load %arg11[%c0_219, %c0_220] : memref<1x4xf32, #tpu.memory_space<vmem>>, vector<1x4xf32>
    %330 = vector.broadcast %329 : vector<1x4xf32> to vector<16x4xf32>
    %331 = arith.addf %328, %330 : vector<16x4xf32>
    %c1_i32_221 = arith.constant 1 : i32
    %332 = arith.addi %0, %c1_i32_221 : i32
    %c1_i32_222 = arith.constant 1 : i32
    %333 = arith.addi %332, %c1_i32_222 : i32
    %c0_223 = arith.constant 0 : index
    %334 = arith.index_cast %333 : i32 to index
    %c1_224 = arith.constant 1 : index
    %c0_225 = arith.constant 0 : index
    %335 = vector.load %arg2[%c0_223, %334, %c1_224, %c0_225] : memref<1x18x24x4xf32, #tpu.memory_space<vmem>>, vector<1x1x16x4xf32>
    %336 = vector.shape_cast %335 : vector<1x1x16x4xf32> to vector<16x4xf32>
    %337 = arith.addf %331, %336 : vector<16x4xf32>
    %c0_226 = arith.constant 0 : index
    %c1_227 = arith.constant 1 : index
    %c0_228 = arith.constant 0 : index
    %c0_229 = arith.constant 0 : index
    %338 = vector.load %arg12[%c0_226, %c1_227, %c0_228, %c0_229] : memref<1x4x16x4xf32, #tpu.memory_space<vmem>>, vector<1x1x16x4xf32>
    %339 = vector.shape_cast %338 : vector<1x1x16x4xf32> to vector<16x4xf32>
    %340 = vector.shape_cast %337 : vector<16x4xf32> to vector<1x1x16x4xf32>
    tpu.vector_store %arg12[%c0_226, %c1_227, %c0_228, %c0_229], %340 {strides = array<i32>} : memref<1x4x16x4xf32, #tpu.memory_space<vmem>>, vector<1x1x16x4xf32>,
    %cst_230 = arith.constant 0.000000e+00 : f32
    %341 = vector.broadcast %cst_230 : f32 to vector<16x16xf32>
    %c2_231 = arith.constant 2 : index
    %c0_232 = arith.constant 0 : index
    %c0_233 = arith.constant 0 : index
    %342 = vector.load %arg13[%c2_231, %c0_232, %c0_233] : memref<6x24x16xf32, #tpu.memory_space<vmem>>, vector<1x16x16xf32>
    %343 = vector.shape_cast %342 : vector<1x16x16xf32> to vector<16x16xf32>
    %c0_234 = arith.constant 0 : index
    %c0_235 = arith.constant 0 : index
    %344 = vector.load %arg6[%c0_234, %c0_235] : memref<9x16xf32, #tpu.memory_space<vmem>>, vector<1x16xf32>
    %345 = vector.broadcast %344 : vector<1x16xf32> to vector<16x16xf32>
    %346 = arith.mulf %343, %345 : vector<16x16xf32>
    %347 = arith.addf %341, %346 : vector<16x16xf32>
    %c2_236 = arith.constant 2 : index
    %c1_237 = arith.constant 1 : index
    %c0_238 = arith.constant 0 : index
    %348 = vector.load %arg13[%c2_236, %c1_237, %c0_238] : memref<6x24x16xf32, #tpu.memory_space<vmem>>, vector<1x16x16xf32>
    %349 = vector.shape_cast %348 : vector<1x16x16xf32> to vector<16x16xf32>
    %c1_239 = arith.constant 1 : index
    %c0_240 = arith.constant 0 : index
    %350 = vector.load %arg6[%c1_239, %c0_240] : memref<9x16xf32, #tpu.memory_space<vmem>>, vector<1x16xf32>
    %351 = vector.broadcast %350 : vector<1x16xf32> to vector<16x16xf32>
    %352 = arith.mulf %349, %351 : vector<16x16xf32>
    %353 = arith.addf %347, %352 : vector<16x16xf32>
    %c2_241 = arith.constant 2 : index
    %c2_242 = arith.constant 2 : index
    %c0_243 = arith.constant 0 : index
    %354 = vector.load %arg13[%c2_241, %c2_242, %c0_243] : memref<6x24x16xf32, #tpu.memory_space<vmem>>, vector<1x16x16xf32>
    %355 = vector.shape_cast %354 : vector<1x16x16xf32> to vector<16x16xf32>
    %c2_244 = arith.constant 2 : index
    %c0_245 = arith.constant 0 : index
    %356 = vector.load %arg6[%c2_244, %c0_245] : memref<9x16xf32, #tpu.memory_space<vmem>>, vector<1x16xf32>
    %357 = vector.broadcast %356 : vector<1x16xf32> to vector<16x16xf32>
    %358 = arith.mulf %355, %357 : vector<16x16xf32>
    %359 = arith.addf %353, %358 : vector<16x16xf32>
    %c3_246 = arith.constant 3 : index
    %c0_247 = arith.constant 0 : index
    %c0_248 = arith.constant 0 : index
    %360 = vector.load %arg13[%c3_246, %c0_247, %c0_248] : memref<6x24x16xf32, #tpu.memory_space<vmem>>, vector<1x16x16xf32>
    %361 = vector.shape_cast %360 : vector<1x16x16xf32> to vector<16x16xf32>
    %c3_249 = arith.constant 3 : index
    %c0_250 = arith.constant 0 : index
    %362 = vector.load %arg6[%c3_249, %c0_250] : memref<9x16xf32, #tpu.memory_space<vmem>>, vector<1x16xf32>
    %363 = vector.broadcast %362 : vector<1x16xf32> to vector<16x16xf32>
    %364 = arith.mulf %361, %363 : vector<16x16xf32>
    %365 = arith.addf %359, %364 : vector<16x16xf32>
    %c3_251 = arith.constant 3 : index
    %c1_252 = arith.constant 1 : index
    %c0_253 = arith.constant 0 : index
    %366 = vector.load %arg13[%c3_251, %c1_252, %c0_253] : memref<6x24x16xf32, #tpu.memory_space<vmem>>, vector<1x16x16xf32>
    %367 = vector.shape_cast %366 : vector<1x16x16xf32> to vector<16x16xf32>
    %c4_254 = arith.constant 4 : index
    %c0_255 = arith.constant 0 : index
    %368 = vector.load %arg6[%c4_254, %c0_255] : memref<9x16xf32, #tpu.memory_space<vmem>>, vector<1x16xf32>
    %369 = vector.broadcast %368 : vector<1x16xf32> to vector<16x16xf32>
    %370 = arith.mulf %367, %369 : vector<16x16xf32>
    %371 = arith.addf %365, %370 : vector<16x16xf32>
    %c3_256 = arith.constant 3 : index
    %c2_257 = arith.constant 2 : index
    %c0_258 = arith.constant 0 : index
    %372 = vector.load %arg13[%c3_256, %c2_257, %c0_258] : memref<6x24x16xf32, #tpu.memory_space<vmem>>, vector<1x16x16xf32>
    %373 = vector.shape_cast %372 : vector<1x16x16xf32> to vector<16x16xf32>
    %c5_259 = arith.constant 5 : index
    %c0_260 = arith.constant 0 : index
    %374 = vector.load %arg6[%c5_259, %c0_260] : memref<9x16xf32, #tpu.memory_space<vmem>>, vector<1x16xf32>
    %375 = vector.broadcast %374 : vector<1x16xf32> to vector<16x16xf32>
    %376 = arith.mulf %373, %375 : vector<16x16xf32>
    %377 = arith.addf %371, %376 : vector<16x16xf32>
    %c4_261 = arith.constant 4 : index
    %c0_262 = arith.constant 0 : index
    %c0_263 = arith.constant 0 : index
    %378 = vector.load %arg13[%c4_261, %c0_262, %c0_263] : memref<6x24x16xf32, #tpu.memory_space<vmem>>, vector<1x16x16xf32>
    %379 = vector.shape_cast %378 : vector<1x16x16xf32> to vector<16x16xf32>
    %c6_264 = arith.constant 6 : index
    %c0_265 = arith.constant 0 : index
    %380 = vector.load %arg6[%c6_264, %c0_265] : memref<9x16xf32, #tpu.memory_space<vmem>>, vector<1x16xf32>
    %381 = vector.broadcast %380 : vector<1x16xf32> to vector<16x16xf32>
    %382 = arith.mulf %379, %381 : vector<16x16xf32>
    %383 = arith.addf %377, %382 : vector<16x16xf32>
    %c4_266 = arith.constant 4 : index
    %c1_267 = arith.constant 1 : index
    %c0_268 = arith.constant 0 : index
    %384 = vector.load %arg13[%c4_266, %c1_267, %c0_268] : memref<6x24x16xf32, #tpu.memory_space<vmem>>, vector<1x16x16xf32>
    %385 = vector.shape_cast %384 : vector<1x16x16xf32> to vector<16x16xf32>
    %c7_269 = arith.constant 7 : index
    %c0_270 = arith.constant 0 : index
    %386 = vector.load %arg6[%c7_269, %c0_270] : memref<9x16xf32, #tpu.memory_space<vmem>>, vector<1x16xf32>
    %387 = vector.broadcast %386 : vector<1x16xf32> to vector<16x16xf32>
    %388 = arith.mulf %385, %387 : vector<16x16xf32>
    %389 = arith.addf %383, %388 : vector<16x16xf32>
    %c4_271 = arith.constant 4 : index
    %c2_272 = arith.constant 2 : index
    %c0_273 = arith.constant 0 : index
    %390 = vector.load %arg13[%c4_271, %c2_272, %c0_273] : memref<6x24x16xf32, #tpu.memory_space<vmem>>, vector<1x16x16xf32>
    %391 = vector.shape_cast %390 : vector<1x16x16xf32> to vector<16x16xf32>
    %c8_274 = arith.constant 8 : index
    %c0_275 = arith.constant 0 : index
    %392 = vector.load %arg6[%c8_274, %c0_275] : memref<9x16xf32, #tpu.memory_space<vmem>>, vector<1x16xf32>
    %393 = vector.broadcast %392 : vector<1x16xf32> to vector<16x16xf32>
    %394 = arith.mulf %391, %393 : vector<16x16xf32>
    %395 = arith.addf %389, %394 : vector<16x16xf32>
    %c0_276 = arith.constant 0 : index
    %c0_277 = arith.constant 0 : index
    %396 = vector.load %arg7[%c0_276, %c0_277] : memref<1x16xf32, #tpu.memory_space<vmem>>, vector<1x16xf32>
    %397 = vector.broadcast %396 : vector<1x16xf32> to vector<16x16xf32>
    %398 = arith.mulf %395, %397 : vector<16x16xf32>
    %c0_278 = arith.constant 0 : index
    %c0_279 = arith.constant 0 : index
    %399 = vector.load %arg8[%c0_278, %c0_279] : memref<1x16xf32, #tpu.memory_space<vmem>>, vector<1x16xf32>
    %400 = vector.broadcast %399 : vector<1x16xf32> to vector<16x16xf32>
    %401 = arith.addf %398, %400 : vector<16x16xf32>
    %cst_280 = arith.constant 0.000000e+00 : f32
    %cst_281 = arith.constant 6.000000e+00 : f32
    %402 = vector.broadcast %cst_280 : f32 to vector<16x16xf32>
    %403 = arith.maximumf %402, %401 : vector<16x16xf32>
    %404 = vector.broadcast %cst_281 : f32 to vector<16x16xf32>
    %405 = arith.minimumf %404, %403 : vector<16x16xf32>
    %c0_282 = arith.constant 0 : index
    %c0_283 = arith.constant 0 : index
    %406 = vector.load %arg9[%c0_282, %c0_283] : memref<16x4xf32, #tpu.memory_space<vmem>>, vector<16x4xf32>
    %cst_284 = arith.constant dense<0.000000e+00> : vector<16x4xf32>
    %407 = tpu.matmul %405, %406, %cst_284 {dimension_numbers = #tpu.dot_dimension_numbers<[1], [0], [0], [1], [0, 0, 1, 1], [], []>} : vector<16x16xf32>, vector<16x4xf32>, vector<16x4xf32> -> vector<16x4xf32>
    %c0_285 = arith.constant 0 : index
    %c0_286 = arith.constant 0 : index
    %408 = vector.load %arg10[%c0_285, %c0_286] : memref<1x4xf32, #tpu.memory_space<vmem>>, vector<1x4xf32>
    %409 = vector.broadcast %408 : vector<1x4xf32> to vector<16x4xf32>
    %410 = arith.mulf %407, %409 : vector<16x4xf32>
    %c0_287 = arith.constant 0 : index
    %c0_288 = arith.constant 0 : index
    %411 = vector.load %arg11[%c0_287, %c0_288] : memref<1x4xf32, #tpu.memory_space<vmem>>, vector<1x4xf32>
    %412 = vector.broadcast %411 : vector<1x4xf32> to vector<16x4xf32>
    %413 = arith.addf %410, %412 : vector<16x4xf32>
    %c2_i32_289 = arith.constant 2 : i32
    %414 = arith.addi %0, %c2_i32_289 : i32
    %c1_i32_290 = arith.constant 1 : i32
    %415 = arith.addi %414, %c1_i32_290 : i32
    %c0_291 = arith.constant 0 : index
    %416 = arith.index_cast %415 : i32 to index
    %c1_292 = arith.constant 1 : index
    %c0_293 = arith.constant 0 : index
    %417 = vector.load %arg2[%c0_291, %416, %c1_292, %c0_293] : memref<1x18x24x4xf32, #tpu.memory_space<vmem>>, vector<1x1x16x4xf32>
    %418 = vector.shape_cast %417 : vector<1x1x16x4xf32> to vector<16x4xf32>
    %419 = arith.addf %413, %418 : vector<16x4xf32>
    %c0_294 = arith.constant 0 : index
    %c2_295 = arith.constant 2 : index
    %c0_296 = arith.constant 0 : index
    %c0_297 = arith.constant 0 : index
    %420 = vector.load %arg12[%c0_294, %c2_295, %c0_296, %c0_297] : memref<1x4x16x4xf32, #tpu.memory_space<vmem>>, vector<1x1x16x4xf32>
    %421 = vector.shape_cast %420 : vector<1x1x16x4xf32> to vector<16x4xf32>
    %422 = vector.shape_cast %419 : vector<16x4xf32> to vector<1x1x16x4xf32>
    tpu.vector_store %arg12[%c0_294, %c2_295, %c0_296, %c0_297], %422 {strides = array<i32>} : memref<1x4x16x4xf32, #tpu.memory_space<vmem>>, vector<1x1x16x4xf32>,
    %cst_298 = arith.constant 0.000000e+00 : f32
    %423 = vector.broadcast %cst_298 : f32 to vector<16x16xf32>
    %c3_299 = arith.constant 3 : index
    %c0_300 = arith.constant 0 : index
    %c0_301 = arith.constant 0 : index
    %424 = vector.load %arg13[%c3_299, %c0_300, %c0_301] : memref<6x24x16xf32, #tpu.memory_space<vmem>>, vector<1x16x16xf32>
    %425 = vector.shape_cast %424 : vector<1x16x16xf32> to vector<16x16xf32>
    %c0_302 = arith.constant 0 : index
    %c0_303 = arith.constant 0 : index
    %426 = vector.load %arg6[%c0_302, %c0_303] : memref<9x16xf32, #tpu.memory_space<vmem>>, vector<1x16xf32>
    %427 = vector.broadcast %426 : vector<1x16xf32> to vector<16x16xf32>
    %428 = arith.mulf %425, %427 : vector<16x16xf32>
    %429 = arith.addf %423, %428 : vector<16x16xf32>
    %c3_304 = arith.constant 3 : index
    %c1_305 = arith.constant 1 : index
    %c0_306 = arith.constant 0 : index
    %430 = vector.load %arg13[%c3_304, %c1_305, %c0_306] : memref<6x24x16xf32, #tpu.memory_space<vmem>>, vector<1x16x16xf32>
    %431 = vector.shape_cast %430 : vector<1x16x16xf32> to vector<16x16xf32>
    %c1_307 = arith.constant 1 : index
    %c0_308 = arith.constant 0 : index
    %432 = vector.load %arg6[%c1_307, %c0_308] : memref<9x16xf32, #tpu.memory_space<vmem>>, vector<1x16xf32>
    %433 = vector.broadcast %432 : vector<1x16xf32> to vector<16x16xf32>
    %434 = arith.mulf %431, %433 : vector<16x16xf32>
    %435 = arith.addf %429, %434 : vector<16x16xf32>
    %c3_309 = arith.constant 3 : index
    %c2_310 = arith.constant 2 : index
    %c0_311 = arith.constant 0 : index
    %436 = vector.load %arg13[%c3_309, %c2_310, %c0_311] : memref<6x24x16xf32, #tpu.memory_space<vmem>>, vector<1x16x16xf32>
    %437 = vector.shape_cast %436 : vector<1x16x16xf32> to vector<16x16xf32>
    %c2_312 = arith.constant 2 : index
    %c0_313 = arith.constant 0 : index
    %438 = vector.load %arg6[%c2_312, %c0_313] : memref<9x16xf32, #tpu.memory_space<vmem>>, vector<1x16xf32>
    %439 = vector.broadcast %438 : vector<1x16xf32> to vector<16x16xf32>
    %440 = arith.mulf %437, %439 : vector<16x16xf32>
    %441 = arith.addf %435, %440 : vector<16x16xf32>
    %c4_314 = arith.constant 4 : index
    %c0_315 = arith.constant 0 : index
    %c0_316 = arith.constant 0 : index
    %442 = vector.load %arg13[%c4_314, %c0_315, %c0_316] : memref<6x24x16xf32, #tpu.memory_space<vmem>>, vector<1x16x16xf32>
    %443 = vector.shape_cast %442 : vector<1x16x16xf32> to vector<16x16xf32>
    %c3_317 = arith.constant 3 : index
    %c0_318 = arith.constant 0 : index
    %444 = vector.load %arg6[%c3_317, %c0_318] : memref<9x16xf32, #tpu.memory_space<vmem>>, vector<1x16xf32>
    %445 = vector.broadcast %444 : vector<1x16xf32> to vector<16x16xf32>
    %446 = arith.mulf %443, %445 : vector<16x16xf32>
    %447 = arith.addf %441, %446 : vector<16x16xf32>
    %c4_319 = arith.constant 4 : index
    %c1_320 = arith.constant 1 : index
    %c0_321 = arith.constant 0 : index
    %448 = vector.load %arg13[%c4_319, %c1_320, %c0_321] : memref<6x24x16xf32, #tpu.memory_space<vmem>>, vector<1x16x16xf32>
    %449 = vector.shape_cast %448 : vector<1x16x16xf32> to vector<16x16xf32>
    %c4_322 = arith.constant 4 : index
    %c0_323 = arith.constant 0 : index
    %450 = vector.load %arg6[%c4_322, %c0_323] : memref<9x16xf32, #tpu.memory_space<vmem>>, vector<1x16xf32>
    %451 = vector.broadcast %450 : vector<1x16xf32> to vector<16x16xf32>
    %452 = arith.mulf %449, %451 : vector<16x16xf32>
    %453 = arith.addf %447, %452 : vector<16x16xf32>
    %c4_324 = arith.constant 4 : index
    %c2_325 = arith.constant 2 : index
    %c0_326 = arith.constant 0 : index
    %454 = vector.load %arg13[%c4_324, %c2_325, %c0_326] : memref<6x24x16xf32, #tpu.memory_space<vmem>>, vector<1x16x16xf32>
    %455 = vector.shape_cast %454 : vector<1x16x16xf32> to vector<16x16xf32>
    %c5_327 = arith.constant 5 : index
    %c0_328 = arith.constant 0 : index
    %456 = vector.load %arg6[%c5_327, %c0_328] : memref<9x16xf32, #tpu.memory_space<vmem>>, vector<1x16xf32>
    %457 = vector.broadcast %456 : vector<1x16xf32> to vector<16x16xf32>
    %458 = arith.mulf %455, %457 : vector<16x16xf32>
    %459 = arith.addf %453, %458 : vector<16x16xf32>
    %c5_329 = arith.constant 5 : index
    %c0_330 = arith.constant 0 : index
    %c0_331 = arith.constant 0 : index
    %460 = vector.load %arg13[%c5_329, %c0_330, %c0_331] : memref<6x24x16xf32, #tpu.memory_space<vmem>>, vector<1x16x16xf32>
    %461 = vector.shape_cast %460 : vector<1x16x16xf32> to vector<16x16xf32>
    %c6_332 = arith.constant 6 : index
    %c0_333 = arith.constant 0 : index
    %462 = vector.load %arg6[%c6_332, %c0_333] : memref<9x16xf32, #tpu.memory_space<vmem>>, vector<1x16xf32>
    %463 = vector.broadcast %462 : vector<1x16xf32> to vector<16x16xf32>
    %464 = arith.mulf %461, %463 : vector<16x16xf32>
    %465 = arith.addf %459, %464 : vector<16x16xf32>
    %c5_334 = arith.constant 5 : index
    %c1_335 = arith.constant 1 : index
    %c0_336 = arith.constant 0 : index
    %466 = vector.load %arg13[%c5_334, %c1_335, %c0_336] : memref<6x24x16xf32, #tpu.memory_space<vmem>>, vector<1x16x16xf32>
    %467 = vector.shape_cast %466 : vector<1x16x16xf32> to vector<16x16xf32>
    %c7_337 = arith.constant 7 : index
    %c0_338 = arith.constant 0 : index
    %468 = vector.load %arg6[%c7_337, %c0_338] : memref<9x16xf32, #tpu.memory_space<vmem>>, vector<1x16xf32>
    %469 = vector.broadcast %468 : vector<1x16xf32> to vector<16x16xf32>
    %470 = arith.mulf %467, %469 : vector<16x16xf32>
    %471 = arith.addf %465, %470 : vector<16x16xf32>
    %c5_339 = arith.constant 5 : index
    %c2_340 = arith.constant 2 : index
    %c0_341 = arith.constant 0 : index
    %472 = vector.load %arg13[%c5_339, %c2_340, %c0_341] : memref<6x24x16xf32, #tpu.memory_space<vmem>>, vector<1x16x16xf32>
    %473 = vector.shape_cast %472 : vector<1x16x16xf32> to vector<16x16xf32>
    %c8_342 = arith.constant 8 : index
    %c0_343 = arith.constant 0 : index
    %474 = vector.load %arg6[%c8_342, %c0_343] : memref<9x16xf32, #tpu.memory_space<vmem>>, vector<1x16xf32>
    %475 = vector.broadcast %474 : vector<1x16xf32> to vector<16x16xf32>
    %476 = arith.mulf %473, %475 : vector<16x16xf32>
    %477 = arith.addf %471, %476 : vector<16x16xf32>
    %c0_344 = arith.constant 0 : index
    %c0_345 = arith.constant 0 : index
    %478 = vector.load %arg7[%c0_344, %c0_345] : memref<1x16xf32, #tpu.memory_space<vmem>>, vector<1x16xf32>
    %479 = vector.broadcast %478 : vector<1x16xf32> to vector<16x16xf32>
    %480 = arith.mulf %477, %479 : vector<16x16xf32>
    %c0_346 = arith.constant 0 : index
    %c0_347 = arith.constant 0 : index
    %481 = vector.load %arg8[%c0_346, %c0_347] : memref<1x16xf32, #tpu.memory_space<vmem>>, vector<1x16xf32>
    %482 = vector.broadcast %481 : vector<1x16xf32> to vector<16x16xf32>
    %483 = arith.addf %480, %482 : vector<16x16xf32>
    %cst_348 = arith.constant 0.000000e+00 : f32
    %cst_349 = arith.constant 6.000000e+00 : f32
    %484 = vector.broadcast %cst_348 : f32 to vector<16x16xf32>
    %485 = arith.maximumf %484, %483 : vector<16x16xf32>
    %486 = vector.broadcast %cst_349 : f32 to vector<16x16xf32>
    %487 = arith.minimumf %486, %485 : vector<16x16xf32>
    %c0_350 = arith.constant 0 : index
    %c0_351 = arith.constant 0 : index
    %488 = vector.load %arg9[%c0_350, %c0_351] : memref<16x4xf32, #tpu.memory_space<vmem>>, vector<16x4xf32>
    %cst_352 = arith.constant dense<0.000000e+00> : vector<16x4xf32>
    %489 = tpu.matmul %487, %488, %cst_352 {dimension_numbers = #tpu.dot_dimension_numbers<[1], [0], [0], [1], [0, 0, 1, 1], [], []>} : vector<16x16xf32>, vector<16x4xf32>, vector<16x4xf32> -> vector<16x4xf32>
    %c0_353 = arith.constant 0 : index
    %c0_354 = arith.constant 0 : index
    %490 = vector.load %arg10[%c0_353, %c0_354] : memref<1x4xf32, #tpu.memory_space<vmem>>, vector<1x4xf32>
    %491 = vector.broadcast %490 : vector<1x4xf32> to vector<16x4xf32>
    %492 = arith.mulf %489, %491 : vector<16x4xf32>
    %c0_355 = arith.constant 0 : index
    %c0_356 = arith.constant 0 : index
    %493 = vector.load %arg11[%c0_355, %c0_356] : memref<1x4xf32, #tpu.memory_space<vmem>>, vector<1x4xf32>
    %494 = vector.broadcast %493 : vector<1x4xf32> to vector<16x4xf32>
    %495 = arith.addf %492, %494 : vector<16x4xf32>
    %c3_i32_357 = arith.constant 3 : i32
    %496 = arith.addi %0, %c3_i32_357 : i32
    %c1_i32_358 = arith.constant 1 : i32
    %497 = arith.addi %496, %c1_i32_358 : i32
    %c0_359 = arith.constant 0 : index
    %498 = arith.index_cast %497 : i32 to index
    %c1_360 = arith.constant 1 : index
    %c0_361 = arith.constant 0 : index
    %499 = vector.load %arg2[%c0_359, %498, %c1_360, %c0_361] : memref<1x18x24x4xf32, #tpu.memory_space<vmem>>, vector<1x1x16x4xf32>
    %500 = vector.shape_cast %499 : vector<1x1x16x4xf32> to vector<16x4xf32>
    %501 = arith.addf %495, %500 : vector<16x4xf32>
    %c0_362 = arith.constant 0 : index
    %c3_363 = arith.constant 3 : index
    %c0_364 = arith.constant 0 : index
    %c0_365 = arith.constant 0 : index
    %502 = vector.load %arg12[%c0_362, %c3_363, %c0_364, %c0_365] : memref<1x4x16x4xf32, #tpu.memory_space<vmem>>, vector<1x1x16x4xf32>
    %503 = vector.shape_cast %502 : vector<1x1x16x4xf32> to vector<16x4xf32>
    %504 = vector.shape_cast %501 : vector<16x4xf32> to vector<1x1x16x4xf32>
    tpu.vector_store %arg12[%c0_362, %c3_363, %c0_364, %c0_365], %504 {strides = array<i32>} : memref<1x4x16x4xf32, #tpu.memory_space<vmem>>, vector<1x1x16x4xf32>,
    return
  }
  func.func @transform_0(%arg0: i32, %arg1: i32) -> (i32, i32, i32, i32) {
    %c0_i32 = arith.constant 0 : i32
    %c0_i32_0 = arith.constant 0 : i32
    %c0_i32_1 = arith.constant 0 : i32
    %c0_i32_2 = arith.constant 0 : i32
    return %arg0, %c0_i32, %c0_i32_0, %c0_i32_1 : i32, i32, i32, i32
  }
  func.func @transform_1(%arg0: i32, %arg1: i32) -> (i32, i32) {
    %c0_i32 = arith.constant 0 : i32
    %c0_i32_0 = arith.constant 0 : i32
    %c0_i32_1 = arith.constant 0 : i32
    return %c0_i32, %c0_i32_0 : i32, i32
  }
  func.func @transform_2(%arg0: i32, %arg1: i32) -> (i32, i32) {
    %c0_i32 = arith.constant 0 : i32
    %c0_i32_0 = arith.constant 0 : i32
    %c0_i32_1 = arith.constant 0 : i32
    return %c0_i32, %c0_i32_0 : i32, i32
  }
  func.func @transform_3(%arg0: i32, %arg1: i32) -> (i32, i32) {
    %c0_i32 = arith.constant 0 : i32
    %c0_i32_0 = arith.constant 0 : i32
    %c0_i32_1 = arith.constant 0 : i32
    return %c0_i32, %c0_i32_0 : i32, i32
  }
  func.func @transform_4(%arg0: i32, %arg1: i32) -> (i32, i32) {
    %c0_i32 = arith.constant 0 : i32
    %c0_i32_0 = arith.constant 0 : i32
    %c0_i32_1 = arith.constant 0 : i32
    return %c0_i32, %c0_i32_0 : i32, i32
  }
  func.func @transform_5(%arg0: i32, %arg1: i32) -> (i32, i32) {
    %c0_i32 = arith.constant 0 : i32
    %c0_i32_0 = arith.constant 0 : i32
    %c0_i32_1 = arith.constant 0 : i32
    return %c0_i32, %c0_i32_0 : i32, i32
  }
  func.func @transform_6(%arg0: i32, %arg1: i32) -> (i32, i32) {
    %c0_i32 = arith.constant 0 : i32
    %c0_i32_0 = arith.constant 0 : i32
    %c0_i32_1 = arith.constant 0 : i32
    return %c0_i32, %c0_i32_0 : i32, i32
  }
  func.func @transform_7(%arg0: i32, %arg1: i32) -> (i32, i32) {
    %c0_i32 = arith.constant 0 : i32
    %c0_i32_0 = arith.constant 0 : i32
    %c0_i32_1 = arith.constant 0 : i32
    return %c0_i32, %c0_i32_0 : i32, i32
  }
  func.func @transform_8(%arg0: i32, %arg1: i32) -> (i32, i32) {
    %c0_i32 = arith.constant 0 : i32
    %c0_i32_0 = arith.constant 0 : i32
    %c0_i32_1 = arith.constant 0 : i32
    return %c0_i32, %c0_i32_0 : i32, i32
  }
  func.func @transform_9(%arg0: i32, %arg1: i32) -> (i32, i32) {
    %c0_i32 = arith.constant 0 : i32
    %c0_i32_0 = arith.constant 0 : i32
    %c0_i32_1 = arith.constant 0 : i32
    return %c0_i32, %c0_i32_0 : i32, i32
  }
  func.func @transform_10(%arg0: i32, %arg1: i32) -> (i32, i32, i32, i32) {
    %c0_i32 = arith.constant 0 : i32
    %c0_i32_0 = arith.constant 0 : i32
    %c0_i32_1 = arith.constant 0 : i32
    return %arg0, %arg1, %c0_i32, %c0_i32_0 : i32, i32, i32, i32
  }
}

</mosaic_0001>

<llo_original>
// kernel: inverted_residual.1
$region0: #{inverted_residual.1}
  #allocation0 [shape = 'u32[]', space=smem, size = 0x4, offset = 0x4, fixed_abs, tag = 'smem constant byte address 0x4 - core index']
  #allocation1 [shape = 'u32[144,128]{1,0:T(1,128)}', space=vmem, size = 0x12000, scoped, tag = 'internal scratch']
  #allocation2 [shape = 'f32[6,24,16]{2,1,0:T(8,128)}', space=vmem, size = 0x12000, scoped, tag = 'scratch operand']
  %s0 = inlined_call_operand.vmem [shape: f32[2,18,24,4], index: 0, kind: input, shape index: {}]
  %s1 = inlined_call_operand.vmem [shape: f32[4,16], index: 1, kind: input, shape index: {}]
  %s2 = inlined_call_operand.vmem [shape: f32[1,16], index: 2, kind: input, shape index: {}]
  %s3 = inlined_call_operand.vmem [shape: f32[1,16], index: 3, kind: input, shape index: {}]
  %s4 = inlined_call_operand.vmem [shape: f32[9,16], index: 4, kind: input, shape index: {}]
  %s5 = inlined_call_operand.vmem [shape: f32[1,16], index: 5, kind: input, shape index: {}]
  %s6 = inlined_call_operand.vmem [shape: f32[1,16], index: 6, kind: input, shape index: {}]
  %s7 = inlined_call_operand.vmem [shape: f32[16,4], index: 7, kind: input, shape index: {}]
  %s8 = inlined_call_operand.vmem [shape: f32[1,4], index: 8, kind: input, shape index: {}]
  %s9 = inlined_call_operand.vmem [shape: f32[1,4], index: 9, kind: input, shape index: {}]
  %s10 = inlined_call_operand.vmem [shape: f32[2,16,16,4], index: 10, kind: output, shape index: {}]
  %s11 = sld [smem:[#allocation0]]
  $region73: #{inverted_residual.1} parent=0
    _
  %s13 = ssub.s32 1, %s11
  %s14 = scalar_select 0, %s13, %s11
  loop: start=0, step=1, limit=10
  $region2: #{inverted_residual.1} parent=0 // loop_pre_header
    _
  $region3: #{inverted_residual.1} parent=0 // loop_header
    %s16 = sphi 0, %s20
    %p17 = scmp.ge.s32.totalorder %s16, 10
    %s23 = sphi 0, %s35
    %s24 = sphi 0, %s31
    %s25 = sphi 0, %s23
    %s26 = sphi 0, %s24
    %s27 = sphi 0, %s25
    %s28 = sphi 0, %s26
    %s38 = sphi 0, %s40
    %s41 = sphi 0, %s38
    %s42 = sphi 0, %s41
    %s58 = sphi 0, %s42
    %s62 = sphi 0, %s62
    %s64 = sphi 0, %s62
    %s65 = sphi 0, %s64
    %s79 = sphi 0, %s65
    %s83 = sphi 0, %s83
    %s85 = sphi 0, %s83
    %s86 = sphi 0, %s85
    %s100 = sphi 0, %s86
    %s104 = sphi 0, %s104
    %s106 = sphi 0, %s104
    %s107 = sphi 0, %s106
    %s121 = sphi 0, %s107
    %s125 = sphi 0, %s125
    %s127 = sphi 0, %s125
    %s128 = sphi 0, %s127
    %s142 = sphi 0, %s128
    %s146 = sphi 0, %s146
    %s148 = sphi 0, %s146
    %s149 = sphi 0, %s148
    %s163 = sphi 0, %s149
    %s167 = sphi 0, %s167
    %s169 = sphi 0, %s167
    %s170 = sphi 0, %s169
    %s184 = sphi 0, %s170
    %s188 = sphi 0, %s188
    %s190 = sphi 0, %s188
    %s191 = sphi 0, %s190
    %s205 = sphi 0, %s191
    %s209 = sphi 0, %s209
    %s211 = sphi 0, %s209
    %s212 = sphi 0, %s211
    %s226 = sphi 0, %s212
    %s230 = sphi 0, %s230
    %s232 = sphi 0, %s230
    %s233 = sphi 0, %s232
    %s247 = sphi 0, %s233
    %s255 = sphi 0, %s257
    %s258 = sphi 0, %s255
    %s259 = sphi 0, %s258
    %s275 = sphi 0, %s259
  $region4: #{inverted_residual.1} parent=0 // loop_header_branch
    %19 = sbr.rel (%p17) target = $region8
  $region5: #{inverted_residual.1} parent=0 // loop_body
    %s21 = ssub.s32 %s16, 1
    %s22 = ssub.s32 %s16, 2
    %s29 = sadd.s32 1, %s24
    %p30 = scmp.ge.s32.totalorder %s29, 4
    %s31 = scalar_select %p30, 0, %s29
    %s32 = sadd.s32 1, %s23
    %s33 = scalar_select %p30, %s32, %s23
    %p34 = scmp.ge.s32.totalorder %s33, 2
    %s35 = scalar_select %p34, 0, %s33
    %s36 = ssub.s32 %s23, %s35
    %p37 = scmp.eq.s32.totalorder %s36, 0
    %s39 = sadd.s32 %s38, 1
    %s40 = scalar_select %p37, %s38, %s39
    %p43 = pneg %p37
    %p44 = scmp.eq.s32.totalorder %s16, 7
    %p45 = por %p43, %p44
    %p46 = scmp.ne.s32.totalorder %s38, %s41
    %p47 = scmp.eq.s32.totalorder %s16, 0
    %p48 = por %p46, %p47
    %p49 = scmp.ne.s32.totalorder %s38, %s41
    %p50 = scmp.eq.s32.totalorder %s21, 7
    %p51 = por %p49, %p50
    %p52 = scmp.ne.s32.totalorder %s41, %s42
    %p53 = scmp.eq.s32.totalorder %s21, 0
    %p54 = por %p52, %p53
    %p55 = scmp.ne.s32.totalorder %s41, %s42
    %p56 = scmp.eq.s32.totalorder %s22, 7
    %p57 = por %p55, %p56
    %p59 = scmp.ne.s32.totalorder %s42, %s58
    %p60 = scmp.eq.s32.totalorder %s22, 0
    %p61 = por %p59, %p60
    %s63 = sadd.s32 %s62, 1
    %p66 = scmp.eq.s32.totalorder %s16, 7
    %p67 = scmp.ne.s32.totalorder %s62, %s64
    %p68 = scmp.eq.s32.totalorder %s16, 0
    %p69 = por %p67, %p68
    %p70 = scmp.ne.s32.totalorder %s62, %s64
    %p71 = scmp.eq.s32.totalorder %s21, 7
    %p72 = por %p70, %p71
    %p73 = scmp.ne.s32.totalorder %s64, %s65
    %p74 = scmp.eq.s32.totalorder %s21, 0
    %p75 = por %p73, %p74
    %p76 = scmp.ne.s32.totalorder %s64, %s65
    %p77 = scmp.eq.s32.totalorder %s22, 7
    %p78 = por %p76, %p77
    %p80 = scmp.ne.s32.totalorder %s65, %s79
    %p81 = scmp.eq.s32.totalorder %s22, 0
    %p82 = por %p80, %p81
    %s84 = sadd.s32 %s83, 1
    %p87 = scmp.eq.s32.totalorder %s16, 7
    %p88 = scmp.ne.s32.totalorder %s83, %s85
    %p89 = scmp.eq.s32.totalorder %s16, 0
    %p90 = por %p88, %p89
    %p91 = scmp.ne.s32.totalorder %s83, %s85
    %p92 = scmp.eq.s32.totalorder %s21, 7
    %p93 = por %p91, %p92
    %p94 = scmp.ne.s32.totalorder %s85, %s86
    %p95 = scmp.eq.s32.totalorder %s21, 0
    %p96 = por %p94, %p95
    %p97 = scmp.ne.s32.totalorder %s85, %s86
    %p98 = scmp.eq.s32.totalorder %s22, 7
    %p99 = por %p97, %p98
    %p101 = scmp.ne.s32.totalorder %s86, %s100
    %p102 = scmp.eq.s32.totalorder %s22, 0
    %p103 = por %p101, %p102
    %s105 = sadd.s32 %s104, 1
    %p108 = scmp.eq.s32.totalorder %s16, 7
    %p109 = scmp.ne.s32.totalorder %s104, %s106
    %p110 = scmp.eq.s32.totalorder %s16, 0
    %p111 = por %p109, %p110
    %p112 = scmp.ne.s32.totalorder %s104, %s106
    %p113 = scmp.eq.s32.totalorder %s21, 7
    %p114 = por %p112, %p113
    %p115 = scmp.ne.s32.totalorder %s106, %s107
    %p116 = scmp.eq.s32.totalorder %s21, 0
    %p117 = por %p115, %p116
    %p118 = scmp.ne.s32.totalorder %s106, %s107
    %p119 = scmp.eq.s32.totalorder %s22, 7
    %p120 = por %p118, %p119
    %p122 = scmp.ne.s32.totalorder %s107, %s121
    %p123 = scmp.eq.s32.totalorder %s22, 0
    %p124 = por %p122, %p123
    %s126 = sadd.s32 %s125, 1
    %p129 = scmp.eq.s32.totalorder %s16, 7
    %p130 = scmp.ne.s32.totalorder %s125, %s127
    %p131 = scmp.eq.s32.totalorder %s16, 0
    %p132 = por %p130, %p131
    %p133 = scmp.ne.s32.totalorder %s125, %s127
    %p134 = scmp.eq.s32.totalorder %s21, 7
    %p135 = por %p133, %p134
    %p136 = scmp.ne.s32.totalorder %s127, %s128
    %p137 = scmp.eq.s32.totalorder %s21, 0
    %p138 = por %p136, %p137
    %p139 = scmp.ne.s32.totalorder %s127, %s128
    %p140 = scmp.eq.s32.totalorder %s22, 7
    %p141 = por %p139, %p140
    %p143 = scmp.ne.s32.totalorder %s128, %s142
    %p144 = scmp.eq.s32.totalorder %s22, 0
    %p145 = por %p143, %p144
    %s147 = sadd.s32 %s146, 1
    %p150 = scmp.eq.s32.totalorder %s16, 7
    %p151 = scmp.ne.s32.totalorder %s146, %s148
    %p152 = scmp.eq.s32.totalorder %s16, 0
    %p153 = por %p151, %p152
    %p154 = scmp.ne.s32.totalorder %s146, %s148
    %p155 = scmp.eq.s32.totalorder %s21, 7
    %p156 = por %p154, %p155
    %p157 = scmp.ne.s32.totalorder %s148, %s149
    %p158 = scmp.eq.s32.totalorder %s21, 0
    %p159 = por %p157, %p158
    %p160 = scmp.ne.s32.totalorder %s148, %s149
    %p161 = scmp.eq.s32.totalorder %s22, 7
    %p162 = por %p160, %p161
    %p164 = scmp.ne.s32.totalorder %s149, %s163
    %p165 = scmp.eq.s32.totalorder %s22, 0
    %p166 = por %p164, %p165
    %s168 = sadd.s32 %s167, 1
    %p171 = scmp.eq.s32.totalorder %s16, 7
    %p172 = scmp.ne.s32.totalorder %s167, %s169
    %p173 = scmp.eq.s32.totalorder %s16, 0
    %p174 = por %p172, %p173
    %p175 = scmp.ne.s32.totalorder %s167, %s169
    %p176 = scmp.eq.s32.totalorder %s21, 7
    %p177 = por %p175, %p176
    %p178 = scmp.ne.s32.totalorder %s169, %s170
    %p179 = scmp.eq.s32.totalorder %s21, 0
    %p180 = por %p178, %p179
    %p181 = scmp.ne.s32.totalorder %s169, %s170
    %p182 = scmp.eq.s32.totalorder %s22, 7
    %p183 = por %p181, %p182
    %p185 = scmp.ne.s32.totalorder %s170, %s184
    %p186 = scmp.eq.s32.totalorder %s22, 0
    %p187 = por %p185, %p186
    %s189 = sadd.s32 %s188, 1
    %p192 = scmp.eq.s32.totalorder %s16, 7
    %p193 = scmp.ne.s32.totalorder %s188, %s190
    %p194 = scmp.eq.s32.totalorder %s16, 0
    %p195 = por %p193, %p194
    %p196 = scmp.ne.s32.totalorder %s188, %s190
    %p197 = scmp.eq.s32.totalorder %s21, 7
    %p198 = por %p196, %p197
    %p199 = scmp.ne.s32.totalorder %s190, %s191
    %p200 = scmp.eq.s32.totalorder %s21, 0
    %p201 = por %p199, %p200
    %p202 = scmp.ne.s32.totalorder %s190, %s191
    %p203 = scmp.eq.s32.totalorder %s22, 7
    %p204 = por %p202, %p203
    %p206 = scmp.ne.s32.totalorder %s191, %s205
    %p207 = scmp.eq.s32.totalorder %s22, 0
    %p208 = por %p206, %p207
    %s210 = sadd.s32 %s209, 1
    %p213 = scmp.eq.s32.totalorder %s16, 7
    %p214 = scmp.ne.s32.totalorder %s209, %s211
    %p215 = scmp.eq.s32.totalorder %s16, 0
    %p216 = por %p214, %p215
    %p217 = scmp.ne.s32.totalorder %s209, %s211
    %p218 = scmp.eq.s32.totalorder %s21, 7
    %p219 = por %p217, %p218
    %p220 = scmp.ne.s32.totalorder %s211, %s212
    %p221 = scmp.eq.s32.totalorder %s21, 0
    %p222 = por %p220, %p221
    %p223 = scmp.ne.s32.totalorder %s211, %s212
    %p224 = scmp.eq.s32.totalorder %s22, 7
    %p225 = por %p223, %p224
    %p227 = scmp.ne.s32.totalorder %s212, %s226
    %p228 = scmp.eq.s32.totalorder %s22, 0
    %p229 = por %p227, %p228
    %s231 = sadd.s32 %s230, 1
    %p234 = scmp.eq.s32.totalorder %s16, 7
    %p235 = scmp.ne.s32.totalorder %s230, %s232
    %p236 = scmp.eq.s32.totalorder %s16, 0
    %p237 = por %p235, %p236
    %p238 = scmp.ne.s32.totalorder %s230, %s232
    %p239 = scmp.eq.s32.totalorder %s21, 7
    %p240 = por %p238, %p239
    %p241 = scmp.ne.s32.totalorder %s232, %s233
    %p242 = scmp.eq.s32.totalorder %s21, 0
    %p243 = por %p241, %p242
    %p244 = scmp.ne.s32.totalorder %s232, %s233
    %p245 = scmp.eq.s32.totalorder %s22, 7
    %p246 = por %p244, %p245
    %p248 = scmp.ne.s32.totalorder %s233, %s247
    %p249 = scmp.eq.s32.totalorder %s22, 0
    %p250 = por %p248, %p249
    %s251 = ssub.s32 %s23, %s35
    %s252 = ssub.s32 %s24, %s31
    %s253 = sor.u32 %s251, %s252
    %p254 = scmp.eq.s32.totalorder %s253, 0
    %s256 = sadd.s32 %s255, 1
    %s257 = scalar_select %p254, %s255, %s256
    %p260 = pneg %p254
    %p261 = scmp.eq.s32.totalorder %s16, 7
    %p262 = por %p260, %p261
    %p263 = scmp.ne.s32.totalorder %s255, %s258
    %p264 = scmp.eq.s32.totalorder %s16, 0
    %p265 = por %p263, %p264
    %p266 = scmp.ne.s32.totalorder %s255, %s258
    %p267 = scmp.eq.s32.totalorder %s21, 7
    %p268 = por %p266, %p267
    %p269 = scmp.ne.s32.totalorder %s258, %s259
    %p270 = scmp.eq.s32.totalorder %s21, 0
    %p271 = por %p269, %p270
    %p272 = scmp.ne.s32.totalorder %s258, %s259
    %p273 = scmp.eq.s32.totalorder %s22, 7
    %p274 = por %p272, %p273
    %p276 = scmp.ne.s32.totalorder %s259, %s275
    %p277 = scmp.eq.s32.totalorder %s22, 0
    %p278 = por %p276, %p277
    %p279 = scmp.le.s32.totalorder 1, %s16
    %p280 = scmp.lt.s32.totalorder %s16, 9
    %p281 = pnand %p279, %p280
    %p282 = pneg %p281
    // Predicated region
    $region9: #{inverted_residual.1} parent=5 // pred_check
      _
    $region10: #{inverted_residual.1} parent=5 // pred_check_branch
      %284 = sbr.rel (%p281) target = $region12
    $region11: #{inverted_residual.1} parent=5 // pred_region
      %s285 = ssub.s32 %s16, 1
      // Predicated region
      $region13: #{inverted_residual.1} parent=11 // pred_check
        %p286 = pneg %p75
      $region14: #{inverted_residual.1} parent=11 // pred_check_branch
        %288 = sbr.rel (%p286) target = $region16
      $region15: #{inverted_residual.1} parent=11 // pred_region
        _
      $region16: #{inverted_residual.1} parent=11 // pred_fallthru
        _
      // Predicated region
      $region17: #{inverted_residual.1} parent=11 // pred_check
        %p289 = pneg %p96
      $region18: #{inverted_residual.1} parent=11 // pred_check_branch
        %291 = sbr.rel (%p289) target = $region20
      $region19: #{inverted_residual.1} parent=11 // pred_region
        _
      $region20: #{inverted_residual.1} parent=11 // pred_fallthru
        _
      // Predicated region
      $region21: #{inverted_residual.1} parent=11 // pred_check
        %p292 = pneg %p117
      $region22: #{inverted_residual.1} parent=11 // pred_check_branch
        %294 = sbr.rel (%p292) target = $region24
      $region23: #{inverted_residual.1} parent=11 // pred_region
        _
      $region24: #{inverted_residual.1} parent=11 // pred_fallthru
        _
      // Predicated region
      $region25: #{inverted_residual.1} parent=11 // pred_check
        %p295 = pneg %p138
      $region26: #{inverted_residual.1} parent=11 // pred_check_branch
        %297 = sbr.rel (%p295) target = $region28
      $region27: #{inverted_residual.1} parent=11 // pred_region
        _
      $region28: #{inverted_residual.1} parent=11 // pred_fallthru
        _
      // Predicated region
      $region29: #{inverted_residual.1} parent=11 // pred_check
        %p298 = pneg %p159
      $region30: #{inverted_residual.1} parent=11 // pred_check_branch
        %300 = sbr.rel (%p298) target = $region32
      $region31: #{inverted_residual.1} parent=11 // pred_region
        _
      $region32: #{inverted_residual.1} parent=11 // pred_fallthru
        _
      // Predicated region
      $region33: #{inverted_residual.1} parent=11 // pred_check
        %p301 = pneg %p180
      $region34: #{inverted_residual.1} parent=11 // pred_check_branch
        %303 = sbr.rel (%p301) target = $region36
      $region35: #{inverted_residual.1} parent=11 // pred_region
        _
      $region36: #{inverted_residual.1} parent=11 // pred_fallthru
        _
      // Predicated region
      $region37: #{inverted_residual.1} parent=11 // pred_check
        %p304 = pneg %p201
      $region38: #{inverted_residual.1} parent=11 // pred_check_branch
        %306 = sbr.rel (%p304) target = $region40
      $region39: #{inverted_residual.1} parent=11 // pred_region
        _
      $region40: #{inverted_residual.1} parent=11 // pred_fallthru
        _
      // Predicated region
      $region41: #{inverted_residual.1} parent=11 // pred_check
        %p307 = pneg %p222
      $region42: #{inverted_residual.1} parent=11 // pred_check_branch
        %309 = sbr.rel (%p307) target = $region44
      $region43: #{inverted_residual.1} parent=11 // pred_region
        _
      $region44: #{inverted_residual.1} parent=11 // pred_fallthru
        _
      // Predicated region
      $region45: #{inverted_residual.1} parent=11 // pred_check
        %p310 = pneg %p243
      $region46: #{inverted_residual.1} parent=11 // pred_check_branch
        %312 = sbr.rel (%p310) target = $region48
      $region47: #{inverted_residual.1} parent=11 // pred_region
        _
      $region48: #{inverted_residual.1} parent=11 // pred_fallthru
        _
    $region12: #{inverted_residual.1} parent=5 // pred_fallthru
      _
    %p313 = scmp.lt.s32.totalorder %s16, 8
    // Predicated region
    $region49: #{inverted_residual.1} parent=5 // pred_check
      %p314 = pneg %p313
    $region50: #{inverted_residual.1} parent=5 // pred_check_branch
      %316 = sbr.rel (%p314) target = $region52
    $region51: #{inverted_residual.1} parent=5 // pred_region
      // Predicated region
      $region53: #{inverted_residual.1} parent=51 // pred_check
        %p317 = pneg %p48
      $region54: #{inverted_residual.1} parent=51 // pred_check_branch
        %319 = sbr.rel (%p317) target = $region56
      $region55: #{inverted_residual.1} parent=51 // pred_region
        %p320 = scmp.lt.s32.totalorder %s23, 1
        %s321 = scalar_select %p320, %s23, 1
        %s322 = smul.addr %s321, 54
        %s323 = smul.addr %s322, 8
        %s324 = scalar_lea.vmem %s0, %s323
      $region56: #{inverted_residual.1} parent=51 // pred_fallthru
        _
    $region52: #{inverted_residual.1} parent=5 // pred_fallthru
      _
    %p325 = scmp.le.s32.totalorder 1, %s16
    %p326 = scmp.lt.s32.totalorder %s16, 9
    %p327 = pnand %p325, %p326
    %p328 = pneg %p327
    // Predicated region
    $region57: #{inverted_residual.1} parent=5 // pred_check
      _
    $region58: #{inverted_residual.1} parent=5 // pred_check_branch
      %330 = sbr.rel (%p327) target = $region60
    $region59: #{inverted_residual.1} parent=5 // pred_region
      %s331 = ssub.s32 %s16, 1
      %p332 = scmp.lt.s32.totalorder %s25, 1
      %s333 = scalar_select %p332, %s25, 1
      %s334 = smul.addr %s333, 54
      %s335 = smul.addr %s334, 8
      %s336 = scalar_lea.vmem %s0, %s335
      %p337 = pneg %p54
      %p338 = pneg %p51
      %p339 = pneg %p75
      %p340 = pneg %p72
      %p341 = pneg %p96
      %p342 = pneg %p93
      %p343 = pneg %p117
      %p344 = pneg %p114
      %p345 = pneg %p138
      %p346 = pneg %p135
      %p347 = pneg %p159
      %p348 = pneg %p156
      %p349 = pneg %p180
      %p350 = pneg %p177
      %p351 = pneg %p201
      %p352 = pneg %p198
      %p353 = pneg %p222
      %p354 = pneg %p219
      %p355 = pneg %p243
      %p356 = pneg %p240
      %p357 = pneg %p271
      %p358 = pneg %p268
      %s359 = smul.u32 4, %s26
      %p360 = scmp.lt.s32.totalorder %s25, 1
      %s361 = scalar_select %p360, %s25, 1
      %p362 = scmp.lt.s32.totalorder %s359, 15
      %s363 = scalar_select %p362, %s359, 15
      %s364 = smul.addr %s363, 2
      %s365 = smul.addr %s361, 32
      %s366 = sadd.s32 %s364, %s365
      %s367 = smul.addr %s366, 8
      %s368 = scalar_lea.vmem %s10, %s367
      %p369 = scmp.lt.s32.totalorder %s25, 1
      %s370 = scalar_select %p369, %s25, 1
      %s371 = smul.addr %s370, 54
      %s372 = smul.addr %s371, 8
      %s373 = scalar_lea.vmem %s0, %s372
      %s374 = smul.u32 4, %s26
      %p375 = scmp.lt.s32.totalorder %s25, 1
      %s376 = scalar_select %p375, %s25, 1
      %p377 = scmp.lt.s32.totalorder %s374, 15
      %s378 = scalar_select %p377, %s374, 15
      %s379 = smul.addr %s378, 2
      %s380 = smul.addr %s376, 32
      %s381 = sadd.s32 %s379, %s380
      %s382 = smul.addr %s381, 8
      %s383 = scalar_lea.vmem %s10, %s382
      %s384 = smul.u32 4, %s26
      %s385 = smul.u32 %s26, 4
      %v386 = vlaneseq
      %v387 = vshrl.u32 %v386, 7
      %v388 = vadd.s32 %v387, 8
      %v389 = vadd.s32 %v387, 16
      %vm390 = vcmp.ge.s32.totalorder %v387, 1
      %vm391 = vcmp.ge.s32.totalorder %v388, 1
      %vm392 = vcmp.ge.s32.totalorder %v389, 1
      %vm393 = vcmp.le.s32.totalorder %v387, 16
      %vm394 = vcmp.le.s32.totalorder %v388, 16
      %vm395 = vcmp.le.s32.totalorder %v389, 16
      %vm396 = vmand %vm390, %vm393
      %vm397 = vmand %vm391, %vm394
      %vm398 = vmand %vm392, %vm395
      %v399 = vsel %vm396, 1, 0
      %v400 = vsel %vm397, 1, 0
      %v401 = vsel %vm398, 1, 0
      %v402 = vcvt.s32.f32 %v399
      %v403 = vcvt.s32.f32 %v400
      %v404 = vcvt.s32.f32 %v401
      %s405 = smul.u32 %s385, 24
      %s406 = scalar_lea.vmem %s373, %s405
      %v407 = vld [vmem:[%s406] sm:$0xff]
      %v408 = vld [vmem:[%s406 + $0x8] sm:$0xff]
      %v409 = vld [vmem:[%s406 + $0x10] sm:$0xff]
      %v410 = vld [vmem:[%s1] sm:$0xf]
      %vm411 = vcmask 31744
      %v413 = vsel %vm411, %v407, 0
      %v416 = vsel %vm411, %v408, 0
      %v419 = vsel %vm411, %v409, 0
      %vm421 = vcmask 1043456
      %v423 = vsel %vm421, %v410, 0
      %425 = vmatprep.subr.mxu0 0.0
      %426 = vmatpush1.msra.mxu0 %v423
      %427 = vmatprep.subr.mxu0 0.0
      %428 = vmatpush1.msra.mxu0 0.0
      %429 = vmatprep.subr.mxu0 0.0
      %430 = vmatpush1.msra.mxu0 0.0
      %431 = vmatprep.subr.mxu0 0.0
      %432 = vmatpush1.msra.mxu0 0.0
      %433 = vmatprep.subr.mxu0 0.0
      %434 = vmatpush1.msra.mxu0 0.0
      %435 = vmatprep.subr.mxu0 0.0
      %436 = vmatpush1.msra.mxu0 0.0
      %437 = vmatprep.subr.mxu0 0.0
      %438 = vmatpush1.msra.mxu0 0.0
      %439 = vmatprep.subr.mxu0 0.0
      %440 = vmatpush1.msra.mxu0 0.0
      %441 = vmatprep.subr.mxu0 0.0
      %442 = vmatpush1.msra.mxu0 0.0
      %443 = vmatprep.subr.mxu0 0.0
      %444 = vmatpush1.msra.mxu0 0.0
      %445 = vmatprep.subr.mxu0 0.0
      %446 = vmatpush1.msra.mxu0 0.0
      %447 = vmatprep.subr.mxu0 0.0
      %448 = vmatpush1.msra.mxu0 0.0
      %449 = vmatprep.subr.mxu0 0.0
      %450 = vmatpush1.msra.mxu0 0.0
      %451 = vmatprep.subr.mxu0 0.0
      %452 = vmatpush1.msra.mxu0 0.0
      %453 = vmatprep.subr.mxu0 0.0
      %454 = vmatpush1.msra.mxu0 0.0
      %455 = vmatprep.subr.mxu0 0.0
      %456 = vmatpush1.msra.mxu0 0.0
      %457 = vmatprep.subr.mxu0 0.0
      %458 = vmatpush1.msra.mxu0 0.0
      %459 = vmatprep.subr.mxu0 0.0
      %460 = vmatpush1.msra.mxu0 0.0
      %461 = vmatprep.subr.mxu0 0.0
      %462 = vmatpush1.msra.mxu0 0.0
      %463 = vmatprep.subr.mxu0 0.0
      %464 = vmatpush1.msra.mxu0 0.0
      %465 = vmatprep.subr.mxu0 0.0
      %466 = vmatpush1.msra.mxu0 0.0
      %467 = vmatprep.subr.mxu0 0.0
      %468 = vmatpush1.msra.mxu0 0.0
      %469 = vmatprep.subr.mxu0 0.0
      %470 = vmatpush1.msra.mxu0 0.0
      %471 = vmatprep.subr.mxu0 0.0
      %472 = vmatpush1.msra.mxu0 0.0
      %473 = vmatprep.subr.mxu0 0.0
      %474 = vmatpush1.msra.mxu0 0.0
      %475 = vmatprep.subr.mxu0 0.0
      %476 = vmatpush1.msra.mxu0 0.0
      %477 = vmatprep.subr.mxu0 0.0
      %478 = vmatpush1.msra.mxu0 0.0
      %479 = vmatprep.subr.mxu0 0.0
      %480 = vmatpush1.msra.mxu0 0.0
      %481 = vmatprep.subr.mxu0 0.0
      %482 = vmatpush1.msra.mxu0 0.0
      %483 = vmatprep.subr.mxu0 0.0
      %484 = vmatpush1.msra.mxu0 0.0
      %485 = vmatprep.subr.mxu0 0.0
      %486 = vmatpush1.msra.mxu0 0.0
      %487 = vmatprep.subr.mxu0 0.0
      %488 = vmatpush1.msra.mxu0 0.0
      %489 = vmatprep.mubr.f32.mxu0 0.0
      %490 = vmatmul.mubr.f32.gmra.mrb[0].mxu0 %v413
      %v491 = vpop.f32.mrb[0].mxu0
      %v492 = vadd.f32 0.0, %v491
      %v493 = vpop.f32.mrb[0].mxu0
      %494 = vmatprep.mubr.f32.mxu0 0.0
      %495 = vmatmul.mubr.f32.gmra.mrb[0].mxu0 %v416
      %v496 = vpop.f32.mrb[0].mxu0
      %v497 = vadd.f32 0.0, %v496
      %v498 = vpop.f32.mrb[0].mxu0
      %499 = vmatprep.mubr.f32.mxu0 0.0
      %500 = vmatmul.mubr.f32.gmra.mrb[0].mxu0 %v419
      %v501 = vpop.f32.mrb[0].mxu0
      %v502 = vadd.f32 0.0, %v501
      %v503 = vpop.f32.mrb[0].mxu0
      %504 = vdwg.mxu0
      %v505 = vld [vmem:[%s2] sm:$0x1]
      %v507 = vlaneseq
      %v508 = vshrl.u32 %v507, 7
      %v509 = vsub.s32 0, %v508
      %v510 = vrot.slane %v505, %v509
      %v512 = vmul.f32 %v492, %v510
      %v513 = vmul.f32 %v497, %v510
      %v514 = vmul.f32 %v502, %v510
      %v515 = vld [vmem:[%s3] sm:$0x1]
      %v517 = vlaneseq
      %v518 = vshrl.u32 %v517, 7
      %v519 = vsub.s32 0, %v518
      %v520 = vrot.slane %v515, %v519
      %v522 = vadd.f32 %v512, %v520
      %v523 = vadd.f32 %v513, %v520
      %v524 = vadd.f32 %v514, %v520
      %v525 = vmax.f32 %v522, 0.0
      %v526 = vmax.f32 %v523, 0.0
      %v527 = vmax.f32 %v524, 0.0
      %v528 = vmin.f32 %v525, 6.0
      %v529 = vmin.f32 %v526, 6.0
      %v530 = vmin.f32 %v527, 6.0
      %p531 = scmp.ge.s32.totalorder %s385, 1
      %p532 = scmp.le.s32.totalorder %s385, 16
      %p533 = pnand %p531, %p532
      %p534 = pneg %p533
      %s535 = scalar_select %p534, 1, 0
      %s536 = scvt.s32.f32 %s535
      %v537 = vstv %s536
      %v538 = vmul.f32 %v402, %v537
      %v539 = vmul.f32 %v403, %v537
      %v540 = vmul.f32 %v404, %v537
      %v541 = vmul.f32 %v528, %v538
      %v542 = vmul.f32 %v529, %v539
      %v543 = vmul.f32 %v530, %v540
      %vm544 = vcmask 130048
      %545 = vst.msk [vmem:[#allocation2] sm:$0xff] %vm544, %v541
      %546 = vst.msk [vmem:[#allocation2 + $0x8] sm:$0xff] %vm544, %v542
      %547 = vst.msk [vmem:[#allocation2 + $0x10] sm:$0xff] %vm544, %v543
      %s548 = sadd.s32 %s385, 1
      %s549 = smul.u32 %s548, 24
      %s550 = scalar_lea.vmem %s373, %s549
      %v551 = vld [vmem:[%s550] sm:$0xff]
      %v552 = vld [vmem:[%s550 + $0x8] sm:$0xff]
      %v553 = vld [vmem:[%s550 + $0x10] sm:$0xff]
      %v554 = vld [vmem:[%s1] sm:$0xf]
      %v556 = vsel %vm411, %v551, 0
      %v559 = vsel %vm411, %v552, 0
      %v562 = vsel %vm411, %v553, 0
      %v565 = vsel %vm421, %v554, 0
      %567 = vmatprep.subr.mxu0 0.0
      %568 = vmatpush1.msra.mxu0 %v565
      %569 = vmatprep.subr.mxu0 0.0
      %570 = vmatpush1.msra.mxu0 0.0
      %571 = vmatprep.subr.mxu0 0.0
      %572 = vmatpush1.msra.mxu0 0.0
      %573 = vmatprep.subr.mxu0 0.0
      %574 = vmatpush1.msra.mxu0 0.0
      %575 = vmatprep.subr.mxu0 0.0
      %576 = vmatpush1.msra.mxu0 0.0
      %577 = vmatprep.subr.mxu0 0.0
      %578 = vmatpush1.msra.mxu0 0.0
      %579 = vmatprep.subr.mxu0 0.0
      %580 = vmatpush1.msra.mxu0 0.0
      %581 = vmatprep.subr.mxu0 0.0
      %582 = vmatpush1.msra.mxu0 0.0
      %583 = vmatprep.subr.mxu0 0.0
      %584 = vmatpush1.msra.mxu0 0.0
      %585 = vmatprep.subr.mxu0 0.0
      %586 = vmatpush1.msra.mxu0 0.0
      %587 = vmatprep.subr.mxu0 0.0
      %588 = vmatpush1.msra.mxu0 0.0
      %589 = vmatprep.subr.mxu0 0.0
      %590 = vmatpush1.msra.mxu0 0.0
      %591 = vmatprep.subr.mxu0 0.0
      %592 = vmatpush1.msra.mxu0 0.0
      %593 = vmatprep.subr.mxu0 0.0
      %594 = vmatpush1.msra.mxu0 0.0
      %595 = vmatprep.subr.mxu0 0.0
      %596 = vmatpush1.msra.mxu0 0.0
      %597 = vmatprep.subr.mxu0 0.0
      %598 = vmatpush1.msra.mxu0 0.0
      %599 = vmatprep.subr.mxu0 0.0
      %600 = vmatpush1.msra.mxu0 0.0
      %601 = vmatprep.subr.mxu0 0.0
      %602 = vmatpush1.msra.mxu0 0.0
      %603 = vmatprep.subr.mxu0 0.0
      %604 = vmatpush1.msra.mxu0 0.0
      %605 = vmatprep.subr.mxu0 0.0
      %606 = vmatpush1.msra.mxu0 0.0
      %607 = vmatprep.subr.mxu0 0.0
      %608 = vmatpush1.msra.mxu0 0.0
      %609 = vmatprep.subr.mxu0 0.0
      %610 = vmatpush1.msra.mxu0 0.0
      %611 = vmatprep.subr.mxu0 0.0
      %612 = vmatpush1.msra.mxu0 0.0
      %613 = vmatprep.subr.mxu0 0.0
      %614 = vmatpush1.msra.mxu0 0.0
      %615 = vmatprep.subr.mxu0 0.0
      %616 = vmatpush1.msra.mxu0 0.0
      %617 = vmatprep.subr.mxu0 0.0
      %618 = vmatpush1.msra.mxu0 0.0
      %619 = vmatprep.subr.mxu0 0.0
      %620 = vmatpush1.msra.mxu0 0.0
      %621 = vmatprep.subr.mxu0 0.0
      %622 = vmatpush1.msra.mxu0 0.0
      %623 = vmatprep.subr.mxu0 0.0
      %624 = vmatpush1.msra.mxu0 0.0
      %625 = vmatprep.subr.mxu0 0.0
      %626 = vmatpush1.msra.mxu0 0.0
      %627 = vmatprep.subr.mxu0 0.0
      %628 = vmatpush1.msra.mxu0 0.0
      %629 = vmatprep.subr.mxu0 0.0
      %630 = vmatpush1.msra.mxu0 0.0
      %631 = vmatprep.mubr.f32.mxu0 0.0
      %632 = vmatmul.mubr.f32.gmra.mrb[0].mxu0 %v556
      %v633 = vpop.f32.mrb[0].mxu0
      %v634 = vadd.f32 0.0, %v633
      %v635 = vpop.f32.mrb[0].mxu0
      %636 = vmatprep.mubr.f32.mxu0 0.0
      %637 = vmatmul.mubr.f32.gmra.mrb[0].mxu0 %v559
      %v638 = vpop.f32.mrb[0].mxu0
      %v639 = vadd.f32 0.0, %v638
      %v640 = vpop.f32.mrb[0].mxu0
      %641 = vmatprep.mubr.f32.mxu0 0.0
      %642 = vmatmul.mubr.f32.gmra.mrb[0].mxu0 %v562
      %v643 = vpop.f32.mrb[0].mxu0
      %v644 = vadd.f32 0.0, %v643
      %v645 = vpop.f32.mrb[0].mxu0
      %646 = vdwg.mxu0
      %v647 = vld [vmem:[%s2] sm:$0x1]
      %v649 = vlaneseq
      %v650 = vshrl.u32 %v649, 7
      %v651 = vsub.s32 0, %v650
      %v652 = vrot.slane %v647, %v651
      %v654 = vmul.f32 %v634, %v652
      %v655 = vmul.f32 %v639, %v652
      %v656 = vmul.f32 %v644, %v652
      %v657 = vld [vmem:[%s3] sm:$0x1]
      %v659 = vlaneseq
      %v660 = vshrl.u32 %v659, 7
      %v661 = vsub.s32 0, %v660
      %v662 = vrot.slane %v657, %v661
      %v664 = vadd.f32 %v654, %v662
      %v665 = vadd.f32 %v655, %v662
      %v666 = vadd.f32 %v656, %v662
      %v667 = vmax.f32 %v664, 0.0
      %v668 = vmax.f32 %v665, 0.0
      %v669 = vmax.f32 %v666, 0.0
      %v670 = vmin.f32 %v667, 6.0
      %v671 = vmin.f32 %v668, 6.0
      %v672 = vmin.f32 %v669, 6.0
      %p673 = scmp.ge.s32.totalorder %s548, 1
      %p674 = scmp.le.s32.totalorder %s548, 16
      %p675 = pnand %p673, %p674
      %p676 = pneg %p675
      %s677 = scalar_select %p676, 1, 0
      %s678 = scvt.s32.f32 %s677
      %v679 = vstv %s678
      %v680 = vmul.f32 %v402, %v679
      %v681 = vmul.f32 %v403, %v679
      %v682 = vmul.f32 %v404, %v679
      %v683 = vmul.f32 %v670, %v680
      %v684 = vmul.f32 %v671, %v681
      %v685 = vmul.f32 %v672, %v682
      %s686 = scalar_lea.vmem [#allocation2], 24
      %687 = vst.msk [vmem:[%s686] sm:$0xff] %vm544, %v683
      %688 = vst.msk [vmem:[%s686 + $0x8] sm:$0xff] %vm544, %v684
      %689 = vst.msk [vmem:[%s686 + $0x10] sm:$0xff] %vm544, %v685
      %s690 = sadd.s32 %s385, 2
      %s691 = smul.u32 %s690, 24
      %s692 = scalar_lea.vmem %s373, %s691
      %v693 = vld [vmem:[%s692] sm:$0xff]
      %v694 = vld [vmem:[%s692 + $0x8] sm:$0xff]
      %v695 = vld [vmem:[%s692 + $0x10] sm:$0xff]
      %v696 = vld [vmem:[%s1] sm:$0xf]
      %v698 = vsel %vm411, %v693, 0
      %v701 = vsel %vm411, %v694, 0
      %v704 = vsel %vm411, %v695, 0
      %v707 = vsel %vm421, %v696, 0
      %709 = vmatprep.subr.mxu0 0.0
      %710 = vmatpush1.msra.mxu0 %v707
      %711 = vmatprep.subr.mxu0 0.0
      %712 = vmatpush1.msra.mxu0 0.0
      %713 = vmatprep.subr.mxu0 0.0
      %714 = vmatpush1.msra.mxu0 0.0
      %715 = vmatprep.subr.mxu0 0.0
      %716 = vmatpush1.msra.mxu0 0.0
      %717 = vmatprep.subr.mxu0 0.0
      %718 = vmatpush1.msra.mxu0 0.0
      %719 = vmatprep.subr.mxu0 0.0
      %720 = vmatpush1.msra.mxu0 0.0
      %721 = vmatprep.subr.mxu0 0.0
      %722 = vmatpush1.msra.mxu0 0.0
      %723 = vmatprep.subr.mxu0 0.0
      %724 = vmatpush1.msra.mxu0 0.0
      %725 = vmatprep.subr.mxu0 0.0
      %726 = vmatpush1.msra.mxu0 0.0
      %727 = vmatprep.subr.mxu0 0.0
      %728 = vmatpush1.msra.mxu0 0.0
      %729 = vmatprep.subr.mxu0 0.0
      %730 = vmatpush1.msra.mxu0 0.0
      %731 = vmatprep.subr.mxu0 0.0
      %732 = vmatpush1.msra.mxu0 0.0
      %733 = vmatprep.subr.mxu0 0.0
      %734 = vmatpush1.msra.mxu0 0.0
      %735 = vmatprep.subr.mxu0 0.0
      %736 = vmatpush1.msra.mxu0 0.0
      %737 = vmatprep.subr.mxu0 0.0
      %738 = vmatpush1.msra.mxu0 0.0
      %739 = vmatprep.subr.mxu0 0.0
      %740 = vmatpush1.msra.mxu0 0.0
      %741 = vmatprep.subr.mxu0 0.0
      %742 = vmatpush1.msra.mxu0 0.0
      %743 = vmatprep.subr.mxu0 0.0
      %744 = vmatpush1.msra.mxu0 0.0
      %745 = vmatprep.subr.mxu0 0.0
      %746 = vmatpush1.msra.mxu0 0.0
      %747 = vmatprep.subr.mxu0 0.0
      %748 = vmatpush1.msra.mxu0 0.0
      %749 = vmatprep.subr.mxu0 0.0
      %750 = vmatpush1.msra.mxu0 0.0
      %751 = vmatprep.subr.mxu0 0.0
      %752 = vmatpush1.msra.mxu0 0.0
      %753 = vmatprep.subr.mxu0 0.0
      %754 = vmatpush1.msra.mxu0 0.0
      %755 = vmatprep.subr.mxu0 0.0
      %756 = vmatpush1.msra.mxu0 0.0
      %757 = vmatprep.subr.mxu0 0.0
      %758 = vmatpush1.msra.mxu0 0.0
      %759 = vmatprep.subr.mxu0 0.0
      %760 = vmatpush1.msra.mxu0 0.0
      %761 = vmatprep.subr.mxu0 0.0
      %762 = vmatpush1.msra.mxu0 0.0
      %763 = vmatprep.subr.mxu0 0.0
      %764 = vmatpush1.msra.mxu0 0.0
      %765 = vmatprep.subr.mxu0 0.0
      %766 = vmatpush1.msra.mxu0 0.0
      %767 = vmatprep.subr.mxu0 0.0
      %768 = vmatpush1.msra.mxu0 0.0
      %769 = vmatprep.subr.mxu0 0.0
      %770 = vmatpush1.msra.mxu0 0.0
      %771 = vmatprep.subr.mxu0 0.0
      %772 = vmatpush1.msra.mxu0 0.0
      %773 = vmatprep.mubr.f32.mxu0 0.0
      %774 = vmatmul.mubr.f32.gmra.mrb[0].mxu0 %v698
      %v775 = vpop.f32.mrb[0].mxu0
      %v776 = vadd.f32 0.0, %v775
      %v777 = vpop.f32.mrb[0].mxu0
      %778 = vmatprep.mubr.f32.mxu0 0.0
      %779 = vmatmul.mubr.f32.gmra.mrb[0].mxu0 %v701
      %v780 = vpop.f32.mrb[0].mxu0
      %v781 = vadd.f32 0.0, %v780
      %v782 = vpop.f32.mrb[0].mxu0
      %783 = vmatprep.mubr.f32.mxu0 0.0
      %784 = vmatmul.mubr.f32.gmra.mrb[0].mxu0 %v704
      %v785 = vpop.f32.mrb[0].mxu0
      %v786 = vadd.f32 0.0, %v785
      %v787 = vpop.f32.mrb[0].mxu0
      %788 = vdwg.mxu0
      %v789 = vld [vmem:[%s2] sm:$0x1]
      %v791 = vlaneseq
      %v792 = vshrl.u32 %v791, 7
      %v793 = vsub.s32 0, %v792
      %v794 = vrot.slane %v789, %v793
      %v796 = vmul.f32 %v776, %v794
      %v797 = vmul.f32 %v781, %v794
      %v798 = vmul.f32 %v786, %v794
      %v799 = vld [vmem:[%s3] sm:$0x1]
      %v801 = vlaneseq
      %v802 = vshrl.u32 %v801, 7
      %v803 = vsub.s32 0, %v802
      %v804 = vrot.slane %v799, %v803
      %v806 = vadd.f32 %v796, %v804
      %v807 = vadd.f32 %v797, %v804
      %v808 = vadd.f32 %v798, %v804
      %v809 = vmax.f32 %v806, 0.0
      %v810 = vmax.f32 %v807, 0.0
      %v811 = vmax.f32 %v808, 0.0
      %v812 = vmin.f32 %v809, 6.0
      %v813 = vmin.f32 %v810, 6.0
      %v814 = vmin.f32 %v811, 6.0
      %p815 = scmp.ge.s32.totalorder %s690, 1
      %p816 = scmp.le.s32.totalorder %s690, 16
      %p817 = pnand %p815, %p816
      %p818 = pneg %p817
      %s819 = scalar_select %p818, 1, 0
      %s820 = scvt.s32.f32 %s819
      %v821 = vstv %s820
      %v822 = vmul.f32 %v402, %v821
      %v823 = vmul.f32 %v403, %v821
      %v824 = vmul.f32 %v404, %v821
      %v825 = vmul.f32 %v812, %v822
      %v826 = vmul.f32 %v813, %v823
      %v827 = vmul.f32 %v814, %v824
      %s828 = scalar_lea.vmem [#allocation2], 48
      %829 = vst.msk [vmem:[%s828] sm:$0xff] %vm544, %v825
      %830 = vst.msk [vmem:[%s828 + $0x8] sm:$0xff] %vm544, %v826
      %831 = vst.msk [vmem:[%s828 + $0x10] sm:$0xff] %vm544, %v827
      %s832 = sadd.s32 %s385, 3
      %s833 = smul.u32 %s832, 24
      %s834 = scalar_lea.vmem %s373, %s833
      %v835 = vld [vmem:[%s834] sm:$0xff]
      %v836 = vld [vmem:[%s834 + $0x8] sm:$0xff]
      %v837 = vld [vmem:[%s834 + $0x10] sm:$0xff]
      %v838 = vld [vmem:[%s1] sm:$0xf]
      %v840 = vsel %vm411, %v835, 0
      %v843 = vsel %vm411, %v836, 0
      %v846 = vsel %vm411, %v837, 0
      %v849 = vsel %vm421, %v838, 0
      %851 = vmatprep.subr.mxu0 0.0
      %852 = vmatpush1.msra.mxu0 %v849
      %853 = vmatprep.subr.mxu0 0.0
      %854 = vmatpush1.msra.mxu0 0.0
      %855 = vmatprep.subr.mxu0 0.0
      %856 = vmatpush1.msra.mxu0 0.0
      %857 = vmatprep.subr.mxu0 0.0
      %858 = vmatpush1.msra.mxu0 0.0
      %859 = vmatprep.subr.mxu0 0.0
      %860 = vmatpush1.msra.mxu0 0.0
      %861 = vmatprep.subr.mxu0 0.0
      %862 = vmatpush1.msra.mxu0 0.0
      %863 = vmatprep.subr.mxu0 0.0
      %864 = vmatpush1.msra.mxu0 0.0
      %865 = vmatprep.subr.mxu0 0.0
      %866 = vmatpush1.msra.mxu0 0.0
      %867 = vmatprep.subr.mxu0 0.0
      %868 = vmatpush1.msra.mxu0 0.0
      %869 = vmatprep.subr.mxu0 0.0
      %870 = vmatpush1.msra.mxu0 0.0
      %871 = vmatprep.subr.mxu0 0.0
      %872 = vmatpush1.msra.mxu0 0.0
      %873 = vmatprep.subr.mxu0 0.0
      %874 = vmatpush1.msra.mxu0 0.0
      %875 = vmatprep.subr.mxu0 0.0
      %876 = vmatpush1.msra.mxu0 0.0
      %877 = vmatprep.subr.mxu0 0.0
      %878 = vmatpush1.msra.mxu0 0.0
      %879 = vmatprep.subr.mxu0 0.0
      %880 = vmatpush1.msra.mxu0 0.0
      %881 = vmatprep.subr.mxu0 0.0
      %882 = vmatpush1.msra.mxu0 0.0
      %883 = vmatprep.subr.mxu0 0.0
      %884 = vmatpush1.msra.mxu0 0.0
      %885 = vmatprep.subr.mxu0 0.0
      %886 = vmatpush1.msra.mxu0 0.0
      %887 = vmatprep.subr.mxu0 0.0
      %888 = vmatpush1.msra.mxu0 0.0
      %889 = vmatprep.subr.mxu0 0.0
      %890 = vmatpush1.msra.mxu0 0.0
      %891 = vmatprep.subr.mxu0 0.0
      %892 = vmatpush1.msra.mxu0 0.0
      %893 = vmatprep.subr.mxu0 0.0
      %894 = vmatpush1.msra.mxu0 0.0
      %895 = vmatprep.subr.mxu0 0.0
      %896 = vmatpush1.msra.mxu0 0.0
      %897 = vmatprep.subr.mxu0 0.0
      %898 = vmatpush1.msra.mxu0 0.0
      %899 = vmatprep.subr.mxu0 0.0
      %900 = vmatpush1.msra.mxu0 0.0
      %901 = vmatprep.subr.mxu0 0.0
      %902 = vmatpush1.msra.mxu0 0.0
      %903 = vmatprep.subr.mxu0 0.0
      %904 = vmatpush1.msra.mxu0 0.0
      %905 = vmatprep.subr.mxu0 0.0
      %906 = vmatpush1.msra.mxu0 0.0
      %907 = vmatprep.subr.mxu0 0.0
      %908 = vmatpush1.msra.mxu0 0.0
      %909 = vmatprep.subr.mxu0 0.0
      %910 = vmatpush1.msra.mxu0 0.0
      %911 = vmatprep.subr.mxu0 0.0
      %912 = vmatpush1.msra.mxu0 0.0
      %913 = vmatprep.subr.mxu0 0.0
      %914 = vmatpush1.msra.mxu0 0.0
      %915 = vmatprep.mubr.f32.mxu0 0.0
      %916 = vmatmul.mubr.f32.gmra.mrb[0].mxu0 %v840
      %v917 = vpop.f32.mrb[0].mxu0
      %v918 = vadd.f32 0.0, %v917
      %v919 = vpop.f32.mrb[0].mxu0
      %920 = vmatprep.mubr.f32.mxu0 0.0
      %921 = vmatmul.mubr.f32.gmra.mrb[0].mxu0 %v843
      %v922 = vpop.f32.mrb[0].mxu0
      %v923 = vadd.f32 0.0, %v922
      %v924 = vpop.f32.mrb[0].mxu0
      %925 = vmatprep.mubr.f32.mxu0 0.0
      %926 = vmatmul.mubr.f32.gmra.mrb[0].mxu0 %v846
      %v927 = vpop.f32.mrb[0].mxu0
      %v928 = vadd.f32 0.0, %v927
      %v929 = vpop.f32.mrb[0].mxu0
      %930 = vdwg.mxu0
      %v931 = vld [vmem:[%s2] sm:$0x1]
      %v933 = vlaneseq
      %v934 = vshrl.u32 %v933, 7
      %v935 = vsub.s32 0, %v934
      %v936 = vrot.slane %v931, %v935
      %v938 = vmul.f32 %v918, %v936
      %v939 = vmul.f32 %v923, %v936
      %v940 = vmul.f32 %v928, %v936
      %v941 = vld [vmem:[%s3] sm:$0x1]
      %v943 = vlaneseq
      %v944 = vshrl.u32 %v943, 7
      %v945 = vsub.s32 0, %v944
      %v946 = vrot.slane %v941, %v945
      %v948 = vadd.f32 %v938, %v946
      %v949 = vadd.f32 %v939, %v946
      %v950 = vadd.f32 %v940, %v946
      %v951 = vmax.f32 %v948, 0.0
      %v952 = vmax.f32 %v949, 0.0
      %v953 = vmax.f32 %v950, 0.0
      %v954 = vmin.f32 %v951, 6.0
      %v955 = vmin.f32 %v952, 6.0
      %v956 = vmin.f32 %v953, 6.0
      %p957 = scmp.ge.s32.totalorder %s832, 1
      %p958 = scmp.le.s32.totalorder %s832, 16
      %p959 = pnand %p957, %p958
      %p960 = pneg %p959
      %s961 = scalar_select %p960, 1, 0
      %s962 = scvt.s32.f32 %s961
      %v963 = vstv %s962
      %v964 = vmul.f32 %v402, %v963
      %v965 = vmul.f32 %v403, %v963
      %v966 = vmul.f32 %v404, %v963
      %v967 = vmul.f32 %v954, %v964
      %v968 = vmul.f32 %v955, %v965
      %v969 = vmul.f32 %v956, %v966
      %s970 = scalar_lea.vmem [#allocation2], 72
      %971 = vst.msk [vmem:[%s970] sm:$0xff] %vm544, %v967
      %972 = vst.msk [vmem:[%s970 + $0x8] sm:$0xff] %vm544, %v968
      %973 = vst.msk [vmem:[%s970 + $0x10] sm:$0xff] %vm544, %v969
      %s974 = sadd.s32 %s385, 4
      %s975 = smul.u32 %s974, 24
      %s976 = scalar_lea.vmem %s373, %s975
      %v977 = vld [vmem:[%s976] sm:$0xff]
      %v978 = vld [vmem:[%s976 + $0x8] sm:$0xff]
      %v979 = vld [vmem:[%s976 + $0x10] sm:$0xff]
      %v980 = vld [vmem:[%s1] sm:$0xf]
      %v982 = vsel %vm411, %v977, 0
      %v985 = vsel %vm411, %v978, 0
      %v988 = vsel %vm411, %v979, 0
      %v991 = vsel %vm421, %v980, 0
      %993 = vmatprep.subr.mxu0 0.0
      %994 = vmatpush1.msra.mxu0 %v991
      %995 = vmatprep.subr.mxu0 0.0
      %996 = vmatpush1.msra.mxu0 0.0
      %997 = vmatprep.subr.mxu0 0.0
      %998 = vmatpush1.msra.mxu0 0.0
      %999 = vmatprep.subr.mxu0 0.0
      %1000 = vmatpush1.msra.mxu0 0.0
      %1001 = vmatprep.subr.mxu0 0.0
      %1002 = vmatpush1.msra.mxu0 0.0
      %1003 = vmatprep.subr.mxu0 0.0
      %1004 = vmatpush1.msra.mxu0 0.0
      %1005 = vmatprep.subr.mxu0 0.0
      %1006 = vmatpush1.msra.mxu0 0.0
      %1007 = vmatprep.subr.mxu0 0.0
      %1008 = vmatpush1.msra.mxu0 0.0
      %1009 = vmatprep.subr.mxu0 0.0
      %1010 = vmatpush1.msra.mxu0 0.0
      %1011 = vmatprep.subr.mxu0 0.0
      %1012 = vmatpush1.msra.mxu0 0.0
      %1013 = vmatprep.subr.mxu0 0.0
      %1014 = vmatpush1.msra.mxu0 0.0
      %1015 = vmatprep.subr.mxu0 0.0
      %1016 = vmatpush1.msra.mxu0 0.0
      %1017 = vmatprep.subr.mxu0 0.0
      %1018 = vmatpush1.msra.mxu0 0.0
      %1019 = vmatprep.subr.mxu0 0.0
      %1020 = vmatpush1.msra.mxu0 0.0
      %1021 = vmatprep.subr.mxu0 0.0
      %1022 = vmatpush1.msra.mxu0 0.0
      %1023 = vmatprep.subr.mxu0 0.0
      %1024 = vmatpush1.msra.mxu0 0.0
      %1025 = vmatprep.subr.mxu0 0.0
      %1026 = vmatpush1.msra.mxu0 0.0
      %1027 = vmatprep.subr.mxu0 0.0
      %1028 = vmatpush1.msra.mxu0 0.0
      %1029 = vmatprep.subr.mxu0 0.0
      %1030 = vmatpush1.msra.mxu0 0.0
      %1031 = vmatprep.subr.mxu0 0.0
      %1032 = vmatpush1.msra.mxu0 0.0
      %1033 = vmatprep.subr.mxu0 0.0
      %1034 = vmatpush1.msra.mxu0 0.0
      %1035 = vmatprep.subr.mxu0 0.0
      %1036 = vmatpush1.msra.mxu0 0.0
      %1037 = vmatprep.subr.mxu0 0.0
      %1038 = vmatpush1.msra.mxu0 0.0
      %1039 = vmatprep.subr.mxu0 0.0
      %1040 = vmatpush1.msra.mxu0 0.0
      %1041 = vmatprep.subr.mxu0 0.0
      %1042 = vmatpush1.msra.mxu0 0.0
      %1043 = vmatprep.subr.mxu0 0.0
      %1044 = vmatpush1.msra.mxu0 0.0
      %1045 = vmatprep.subr.mxu0 0.0
      %1046 = vmatpush1.msra.mxu0 0.0
      %1047 = vmatprep.subr.mxu0 0.0
      %1048 = vmatpush1.msra.mxu0 0.0
      %1049 = vmatprep.subr.mxu0 0.0
      %1050 = vmatpush1.msra.mxu0 0.0
      %1051 = vmatprep.subr.mxu0 0.0
      %1052 = vmatpush1.msra.mxu0 0.0
      %1053 = vmatprep.subr.mxu0 0.0
      %1054 = vmatpush1.msra.mxu0 0.0
      %1055 = vmatprep.subr.mxu0 0.0
      %1056 = vmatpush1.msra.mxu0 0.0
      %1057 = vmatprep.mubr.f32.mxu0 0.0
      %1058 = vmatmul.mubr.f32.gmra.mrb[0].mxu0 %v982
      %v1059 = vpop.f32.mrb[0].mxu0
      %v1060 = vadd.f32 0.0, %v1059
      %v1061 = vpop.f32.mrb[0].mxu0
      %1062 = vmatprep.mubr.f32.mxu0 0.0
      %1063 = vmatmul.mubr.f32.gmra.mrb[0].mxu0 %v985
      %v1064 = vpop.f32.mrb[0].mxu0
      %v1065 = vadd.f32 0.0, %v1064
      %v1066 = vpop.f32.mrb[0].mxu0
      %1067 = vmatprep.mubr.f32.mxu0 0.0
      %1068 = vmatmul.mubr.f32.gmra.mrb[0].mxu0 %v988
      %v1069 = vpop.f32.mrb[0].mxu0
      %v1070 = vadd.f32 0.0, %v1069
      %v1071 = vpop.f32.mrb[0].mxu0
      %1072 = vdwg.mxu0
      %v1073 = vld [vmem:[%s2] sm:$0x1]
      %v1075 = vlaneseq
      %v1076 = vshrl.u32 %v1075, 7
      %v1077 = vsub.s32 0, %v1076
      %v1078 = vrot.slane %v1073, %v1077
      %v1080 = vmul.f32 %v1060, %v1078
      %v1081 = vmul.f32 %v1065, %v1078
      %v1082 = vmul.f32 %v1070, %v1078
      %v1083 = vld [vmem:[%s3] sm:$0x1]
      %v1085 = vlaneseq
      %v1086 = vshrl.u32 %v1085, 7
      %v1087 = vsub.s32 0, %v1086
      %v1088 = vrot.slane %v1083, %v1087
      %v1090 = vadd.f32 %v1080, %v1088
      %v1091 = vadd.f32 %v1081, %v1088
      %v1092 = vadd.f32 %v1082, %v1088
      %v1093 = vmax.f32 %v1090, 0.0
      %v1094 = vmax.f32 %v1091, 0.0
      %v1095 = vmax.f32 %v1092, 0.0
      %v1096 = vmin.f32 %v1093, 6.0
      %v1097 = vmin.f32 %v1094, 6.0
      %v1098 = vmin.f32 %v1095, 6.0
      %p1099 = scmp.ge.s32.totalorder %s974, 1
      %p1100 = scmp.le.s32.totalorder %s974, 16
      %p1101 = pnand %p1099, %p1100
      %p1102 = pneg %p1101
      %s1103 = scalar_select %p1102, 1, 0
      %s1104 = scvt.s32.f32 %s1103
      %v1105 = vstv %s1104
      %v1106 = vmul.f32 %v402, %v1105
      %v1107 = vmul.f32 %v403, %v1105
      %v1108 = vmul.f32 %v404, %v1105
      %v1109 = vmul.f32 %v1096, %v1106
      %v1110 = vmul.f32 %v1097, %v1107
      %v1111 = vmul.f32 %v1098, %v1108
      %s1112 = scalar_lea.vmem [#allocation2], 96
      %1113 = vst.msk [vmem:[%s1112] sm:$0xff] %vm544, %v1109
      %1114 = vst.msk [vmem:[%s1112 + $0x8] sm:$0xff] %vm544, %v1110
      %1115 = vst.msk [vmem:[%s1112 + $0x10] sm:$0xff] %vm544, %v1111
      %s1116 = sadd.s32 %s385, 5
      %s1117 = smul.u32 %s1116, 24
      %s1118 = scalar_lea.vmem %s373, %s1117
      %v1119 = vld [vmem:[%s1118] sm:$0xff]
      %v1120 = vld [vmem:[%s1118 + $0x8] sm:$0xff]
      %v1121 = vld [vmem:[%s1118 + $0x10] sm:$0xff]
      %v1122 = vld [vmem:[%s1] sm:$0xf]
      %v1124 = vsel %vm411, %v1119, 0
      %v1127 = vsel %vm411, %v1120, 0
      %v1130 = vsel %vm411, %v1121, 0
      %v1133 = vsel %vm421, %v1122, 0
      %1135 = vmatprep.subr.mxu0 0.0
      %1136 = vmatpush1.msra.mxu0 %v1133
      %1137 = vmatprep.subr.mxu0 0.0
      %1138 = vmatpush1.msra.mxu0 0.0
      %1139 = vmatprep.subr.mxu0 0.0
      %1140 = vmatpush1.msra.mxu0 0.0
      %1141 = vmatprep.subr.mxu0 0.0
      %1142 = vmatpush1.msra.mxu0 0.0
      %1143 = vmatprep.subr.mxu0 0.0
      %1144 = vmatpush1.msra.mxu0 0.0
      %1145 = vmatprep.subr.mxu0 0.0
      %1146 = vmatpush1.msra.mxu0 0.0
      %1147 = vmatprep.subr.mxu0 0.0
      %1148 = vmatpush1.msra.mxu0 0.0
      %1149 = vmatprep.subr.mxu0 0.0
      %1150 = vmatpush1.msra.mxu0 0.0
      %1151 = vmatprep.subr.mxu0 0.0
      %1152 = vmatpush1.msra.mxu0 0.0
      %1153 = vmatprep.subr.mxu0 0.0
      %1154 = vmatpush1.msra.mxu0 0.0
      %1155 = vmatprep.subr.mxu0 0.0
      %1156 = vmatpush1.msra.mxu0 0.0
      %1157 = vmatprep.subr.mxu0 0.0
      %1158 = vmatpush1.msra.mxu0 0.0
      %1159 = vmatprep.subr.mxu0 0.0
      %1160 = vmatpush1.msra.mxu0 0.0
      %1161 = vmatprep.subr.mxu0 0.0
      %1162 = vmatpush1.msra.mxu0 0.0
      %1163 = vmatprep.subr.mxu0 0.0
      %1164 = vmatpush1.msra.mxu0 0.0
      %1165 = vmatprep.subr.mxu0 0.0
      %1166 = vmatpush1.msra.mxu0 0.0
      %1167 = vmatprep.subr.mxu0 0.0
      %1168 = vmatpush1.msra.mxu0 0.0
      %1169 = vmatprep.subr.mxu0 0.0
      %1170 = vmatpush1.msra.mxu0 0.0
      %1171 = vmatprep.subr.mxu0 0.0
      %1172 = vmatpush1.msra.mxu0 0.0
      %1173 = vmatprep.subr.mxu0 0.0
      %1174 = vmatpush1.msra.mxu0 0.0
      %1175 = vmatprep.subr.mxu0 0.0
      %1176 = vmatpush1.msra.mxu0 0.0
      %1177 = vmatprep.subr.mxu0 0.0
      %1178 = vmatpush1.msra.mxu0 0.0
      %1179 = vmatprep.subr.mxu0 0.0
      %1180 = vmatpush1.msra.mxu0 0.0
      %1181 = vmatprep.subr.mxu0 0.0
      %1182 = vmatpush1.msra.mxu0 0.0
      %1183 = vmatprep.subr.mxu0 0.0
      %1184 = vmatpush1.msra.mxu0 0.0
      %1185 = vmatprep.subr.mxu0 0.0
      %1186 = vmatpush1.msra.mxu0 0.0
      %1187 = vmatprep.subr.mxu0 0.0
      %1188 = vmatpush1.msra.mxu0 0.0
      %1189 = vmatprep.subr.mxu0 0.0
      %1190 = vmatpush1.msra.mxu0 0.0
      %1191 = vmatprep.subr.mxu0 0.0
      %1192 = vmatpush1.msra.mxu0 0.0
      %1193 = vmatprep.subr.mxu0 0.0
      %1194 = vmatpush1.msra.mxu0 0.0
      %1195 = vmatprep.subr.mxu0 0.0
      %1196 = vmatpush1.msra.mxu0 0.0
      %1197 = vmatprep.subr.mxu0 0.0
      %1198 = vmatpush1.msra.mxu0 0.0
      %1199 = vmatprep.mubr.f32.mxu0 0.0
      %1200 = vmatmul.mubr.f32.gmra.mrb[0].mxu0 %v1124
      %v1201 = vpop.f32.mrb[0].mxu0
      %v1202 = vadd.f32 0.0, %v1201
      %v1203 = vpop.f32.mrb[0].mxu0
      %1204 = vmatprep.mubr.f32.mxu0 0.0
      %1205 = vmatmul.mubr.f32.gmra.mrb[0].mxu0 %v1127
      %v1206 = vpop.f32.mrb[0].mxu0
      %v1207 = vadd.f32 0.0, %v1206
      %v1208 = vpop.f32.mrb[0].mxu0
      %1209 = vmatprep.mubr.f32.mxu0 0.0
      %1210 = vmatmul.mubr.f32.gmra.mrb[0].mxu0 %v1130
      %v1211 = vpop.f32.mrb[0].mxu0
      %v1212 = vadd.f32 0.0, %v1211
      %v1213 = vpop.f32.mrb[0].mxu0
      %1214 = vdwg.mxu0
      %v1215 = vld [vmem:[%s2] sm:$0x1]
      %v1217 = vlaneseq
      %v1218 = vshrl.u32 %v1217, 7
      %v1219 = vsub.s32 0, %v1218
      %v1220 = vrot.slane %v1215, %v1219
      %v1222 = vmul.f32 %v1202, %v1220
      %v1223 = vmul.f32 %v1207, %v1220
      %v1224 = vmul.f32 %v1212, %v1220
      %v1225 = vld [vmem:[%s3] sm:$0x1]
      %v1227 = vlaneseq
      %v1228 = vshrl.u32 %v1227, 7
      %v1229 = vsub.s32 0, %v1228
      %v1230 = vrot.slane %v1225, %v1229
      %v1232 = vadd.f32 %v1222, %v1230
      %v1233 = vadd.f32 %v1223, %v1230
      %v1234 = vadd.f32 %v1224, %v1230
      %v1235 = vmax.f32 %v1232, 0.0
      %v1236 = vmax.f32 %v1233, 0.0
      %v1237 = vmax.f32 %v1234, 0.0
      %v1238 = vmin.f32 %v1235, 6.0
      %v1239 = vmin.f32 %v1236, 6.0
      %v1240 = vmin.f32 %v1237, 6.0
      %p1241 = scmp.ge.s32.totalorder %s1116, 1
      %p1242 = scmp.le.s32.totalorder %s1116, 16
      %p1243 = pnand %p1241, %p1242
      %p1244 = pneg %p1243
      %s1245 = scalar_select %p1244, 1, 0
      %s1246 = scvt.s32.f32 %s1245
      %v1247 = vstv %s1246
      %v1248 = vmul.f32 %v402, %v1247
      %v1249 = vmul.f32 %v403, %v1247
      %v1250 = vmul.f32 %v404, %v1247
      %v1251 = vmul.f32 %v1238, %v1248
      %v1252 = vmul.f32 %v1239, %v1249
      %v1253 = vmul.f32 %v1240, %v1250
      %s1254 = scalar_lea.vmem [#allocation2], 120
      %1255 = vst.msk [vmem:[%s1254] sm:$0xff] %vm544, %v1251
      %1256 = vst.msk [vmem:[%s1254 + $0x8] sm:$0xff] %vm544, %v1252
      %1257 = vst.msk [vmem:[%s1254 + $0x10] sm:$0xff] %vm544, %v1253
      %v1258 = vld [vmem:[#allocation2] sm:$0xff]
      %v1259 = vld [vmem:[#allocation2 + $0x8] sm:$0xff]
      %v1260 = vld [vmem:[%s4] sm:$0x1]
      %v1261 = vlaneseq
      %v1262 = vshrl.u32 %v1261, 7
      %v1263 = vsub.s32 0, %v1262
      %v1264 = vrot.slane %v1260, %v1263
      %v1265 = vmul.f32 %v1258, %v1264
      %v1266 = vmul.f32 %v1259, %v1264
      %v1267 = vadd.f32 %v1265, 0.0
      %v1268 = vadd.f32 %v1266, 0.0
      %v1269 = vld [vmem:[#allocation2 + $0x1] sm:$0xff]
      %v1270 = vld [vmem:[#allocation2 + $0x9] sm:$0xff]
      %v1271 = vld [vmem:[%s4 + $0x1] sm:$0x1]
      %v1272 = vlaneseq
      %v1273 = vshrl.u32 %v1272, 7
      %v1274 = vsub.s32 0, %v1273
      %v1275 = vrot.slane %v1271, %v1274
      %v1276 = vmul.f32 %v1269, %v1275
      %v1277 = vmul.f32 %v1270, %v1275
      %v1278 = vadd.f32 %v1267, %v1276
      %v1279 = vadd.f32 %v1268, %v1277
      %v1280 = vld [vmem:[#allocation2 + $0x2] sm:$0xff]
      %v1281 = vld [vmem:[#allocation2 + $0xa] sm:$0xff]
      %v1282 = vld [vmem:[%s4 + $0x2] sm:$0x1]
      %v1283 = vlaneseq
      %v1284 = vshrl.u32 %v1283, 7
      %v1285 = vsub.s32 0, %v1284
      %v1286 = vrot.slane %v1282, %v1285
      %v1287 = vmul.f32 %v1280, %v1286
      %v1288 = vmul.f32 %v1281, %v1286
      %v1289 = vadd.f32 %v1278, %v1287
      %v1290 = vadd.f32 %v1279, %v1288
      %v1291 = vld [vmem:[%s686] sm:$0xff]
      %v1292 = vld [vmem:[%s686 + $0x8] sm:$0xff]
      %v1293 = vld [vmem:[%s4 + $0x3] sm:$0x1]
      %v1294 = vlaneseq
      %v1295 = vshrl.u32 %v1294, 7
      %v1296 = vsub.s32 0, %v1295
      %v1297 = vrot.slane %v1293, %v1296
      %v1298 = vmul.f32 %v1291, %v1297
      %v1299 = vmul.f32 %v1292, %v1297
      %v1300 = vadd.f32 %v1289, %v1298
      %v1301 = vadd.f32 %v1290, %v1299
      %v1302 = vld [vmem:[%s686 + $0x1] sm:$0xff]
      %v1303 = vld [vmem:[%s686 + $0x9] sm:$0xff]
      %v1304 = vld [vmem:[%s4 + $0x4] sm:$0x1]
      %v1305 = vlaneseq
      %v1306 = vshrl.u32 %v1305, 7
      %v1307 = vsub.s32 0, %v1306
      %v1308 = vrot.slane %v1304, %v1307
      %v1309 = vmul.f32 %v1302, %v1308
      %v1310 = vmul.f32 %v1303, %v1308
      %v1311 = vadd.f32 %v1300, %v1309
      %v1312 = vadd.f32 %v1301, %v1310
      %v1313 = vld [vmem:[%s686 + $0x2] sm:$0xff]
      %v1314 = vld [vmem:[%s686 + $0xa] sm:$0xff]
      %v1315 = vld [vmem:[%s4 + $0x5] sm:$0x1]
      %v1316 = vlaneseq
      %v1317 = vshrl.u32 %v1316, 7
      %v1318 = vsub.s32 0, %v1317
      %v1319 = vrot.slane %v1315, %v1318
      %v1320 = vmul.f32 %v1313, %v1319
      %v1321 = vmul.f32 %v1314, %v1319
      %v1322 = vadd.f32 %v1311, %v1320
      %v1323 = vadd.f32 %v1312, %v1321
      %v1324 = vld [vmem:[%s828] sm:$0xff]
      %v1325 = vld [vmem:[%s828 + $0x8] sm:$0xff]
      %v1326 = vld [vmem:[%s4 + $0x6] sm:$0x1]
      %v1327 = vlaneseq
      %v1328 = vshrl.u32 %v1327, 7
      %v1329 = vsub.s32 0, %v1328
      %v1330 = vrot.slane %v1326, %v1329
      %v1331 = vmul.f32 %v1324, %v1330
      %v1332 = vmul.f32 %v1325, %v1330
      %v1333 = vadd.f32 %v1322, %v1331
      %v1334 = vadd.f32 %v1323, %v1332
      %v1335 = vld [vmem:[%s828 + $0x1] sm:$0xff]
      %v1336 = vld [vmem:[%s828 + $0x9] sm:$0xff]
      %v1337 = vld [vmem:[%s4 + $0x7] sm:$0x1]
      %v1338 = vlaneseq
      %v1339 = vshrl.u32 %v1338, 7
      %v1340 = vsub.s32 0, %v1339
      %v1341 = vrot.slane %v1337, %v1340
      %v1342 = vmul.f32 %v1335, %v1341
      %v1343 = vmul.f32 %v1336, %v1341
      %v1344 = vadd.f32 %v1333, %v1342
      %v1345 = vadd.f32 %v1334, %v1343
      %v1346 = vld [vmem:[%s828 + $0x2] sm:$0xff]
      %v1347 = vld [vmem:[%s828 + $0xa] sm:$0xff]
      %v1348 = vld [vmem:[%s4 + $0x8] sm:$0x1]
      %v1349 = vlaneseq
      %v1350 = vshrl.u32 %v1349, 7
      %v1351 = vsub.s32 0, %v1350
      %v1352 = vrot.slane %v1348, %v1351
      %v1353 = vmul.f32 %v1346, %v1352
      %v1354 = vmul.f32 %v1347, %v1352
      %v1355 = vadd.f32 %v1344, %v1353
      %v1356 = vadd.f32 %v1345, %v1354
      %v1357 = vld [vmem:[%s5] sm:$0x1]
      %v1359 = vlaneseq
      %v1360 = vshrl.u32 %v1359, 7
      %v1361 = vsub.s32 0, %v1360
      %v1362 = vrot.slane %v1357, %v1361
      %v1364 = vmul.f32 %v1355, %v1362
      %v1365 = vmul.f32 %v1356, %v1362
      %v1366 = vld [vmem:[%s6] sm:$0x1]
      %v1368 = vlaneseq
      %v1369 = vshrl.u32 %v1368, 7
      %v1370 = vsub.s32 0, %v1369
      %v1371 = vrot.slane %v1366, %v1370
      %v1373 = vadd.f32 %v1364, %v1371
      %v1374 = vadd.f32 %v1365, %v1371
      %v1375 = vmax.f32 %v1373, 0.0
      %v1376 = vmax.f32 %v1374, 0.0
      %v1377 = vmin.f32 %v1375, 6.0
      %v1378 = vmin.f32 %v1376, 6.0
      %v1379 = vld [vmem:[%s7] sm:$0xff]
      %v1380 = vld [vmem:[%s7 + $0x8] sm:$0xff]
      %v1382 = vsel %vm544, %v1377, 0
      %v1385 = vsel %vm544, %v1378, 0
      %1387 = vmatprep.subr.mxu0 0.0
      %1388 = vmatpush1.msra.mxu0 %v1379
      %1389 = vmatprep.subr.mxu0 0.0
      %1390 = vmatpush1.msra.mxu0 %v1380
      %1391 = vmatprep.subr.mxu0 0.0
      %1392 = vmatpush1.msra.mxu0 0.0
      %1393 = vmatprep.subr.mxu0 0.0
      %1394 = vmatpush1.msra.mxu0 0.0
      %1395 = vmatprep.subr.mxu0 0.0
      %1396 = vmatpush1.msra.mxu0 0.0
      %1397 = vmatprep.subr.mxu0 0.0
      %1398 = vmatpush1.msra.mxu0 0.0
      %1399 = vmatprep.subr.mxu0 0.0
      %1400 = vmatpush1.msra.mxu0 0.0
      %1401 = vmatprep.subr.mxu0 0.0
      %1402 = vmatpush1.msra.mxu0 0.0
      %1403 = vmatprep.subr.mxu0 0.0
      %1404 = vmatpush1.msra.mxu0 0.0
      %1405 = vmatprep.subr.mxu0 0.0
      %1406 = vmatpush1.msra.mxu0 0.0
      %1407 = vmatprep.subr.mxu0 0.0
      %1408 = vmatpush1.msra.mxu0 0.0
      %1409 = vmatprep.subr.mxu0 0.0
      %1410 = vmatpush1.msra.mxu0 0.0
      %1411 = vmatprep.subr.mxu0 0.0
      %1412 = vmatpush1.msra.mxu0 0.0
      %1413 = vmatprep.subr.mxu0 0.0
      %1414 = vmatpush1.msra.mxu0 0.0
      %1415 = vmatprep.subr.mxu0 0.0
      %1416 = vmatpush1.msra.mxu0 0.0
      %1417 = vmatprep.subr.mxu0 0.0
      %1418 = vmatpush1.msra.mxu0 0.0
      %1419 = vmatprep.subr.mxu0 0.0
      %1420 = vmatpush1.msra.mxu0 0.0
      %1421 = vmatprep.subr.mxu0 0.0
      %1422 = vmatpush1.msra.mxu0 0.0
      %1423 = vmatprep.subr.mxu0 0.0
      %1424 = vmatpush1.msra.mxu0 0.0
      %1425 = vmatprep.subr.mxu0 0.0
      %1426 = vmatpush1.msra.mxu0 0.0
      %1427 = vmatprep.subr.mxu0 0.0
      %1428 = vmatpush1.msra.mxu0 0.0
      %1429 = vmatprep.subr.mxu0 0.0
      %1430 = vmatpush1.msra.mxu0 0.0
      %1431 = vmatprep.subr.mxu0 0.0
      %1432 = vmatpush1.msra.mxu0 0.0
      %1433 = vmatprep.subr.mxu0 0.0
      %1434 = vmatpush1.msra.mxu0 0.0
      %1435 = vmatprep.subr.mxu0 0.0
      %1436 = vmatpush1.msra.mxu0 0.0
      %1437 = vmatprep.subr.mxu0 0.0
      %1438 = vmatpush1.msra.mxu0 0.0
      %1439 = vmatprep.subr.mxu0 0.0
      %1440 = vmatpush1.msra.mxu0 0.0
      %1441 = vmatprep.subr.mxu0 0.0
      %1442 = vmatpush1.msra.mxu0 0.0
      %1443 = vmatprep.subr.mxu0 0.0
      %1444 = vmatpush1.msra.mxu0 0.0
      %1445 = vmatprep.subr.mxu0 0.0
      %1446 = vmatpush1.msra.mxu0 0.0
      %1447 = vmatprep.subr.mxu0 0.0
      %1448 = vmatpush1.msra.mxu0 0.0
      %1449 = vmatprep.subr.mxu0 0.0
      %1450 = vmatpush1.msra.mxu0 0.0
      %1451 = vmatprep.mubr.f32.mxu0 0.0
      %1452 = vmatmul.mubr.f32.gmra.mrb[0].mxu0 %v1382
      %v1453 = vpop.f32.mrb[0].mxu0
      %v1454 = vadd.f32 0.0, %v1453
      %v1455 = vpop.f32.mrb[0].mxu0
      %1456 = vmatprep.mubr.f32.mxu0 0.0
      %1457 = vmatmul.mubr.f32.gmra.mrb[0].mxu0 %v1385
      %v1458 = vpop.f32.mrb[0].mxu0
      %v1459 = vadd.f32 0.0, %v1458
      %v1460 = vpop.f32.mrb[0].mxu0
      %1461 = vdwg.mxu0
      %v1462 = vld [vmem:[%s8] sm:$0x1]
      %v1464 = vlaneseq
      %v1465 = vshrl.u32 %v1464, 7
      %v1466 = vsub.s32 0, %v1465
      %v1467 = vrot.slane %v1462, %v1466
      %v1469 = vmul.f32 %v1454, %v1467
      %v1470 = vmul.f32 %v1459, %v1467
      %v1471 = vld [vmem:[%s9] sm:$0x1]
      %v1473 = vlaneseq
      %v1474 = vshrl.u32 %v1473, 7
      %v1475 = vsub.s32 0, %v1474
      %v1476 = vrot.slane %v1471, %v1475
      %v1478 = vadd.f32 %v1469, %v1476
      %v1479 = vadd.f32 %v1470, %v1476
      %v1480 = vld [vmem:[%s550 + $0x1] sm:$0xff]
      %v1481 = vld [vmem:[%s550 + $0x9] sm:$0xff]
      %v1482 = vadd.f32 %v1478, %v1480
      %v1483 = vadd.f32 %v1479, %v1481
      %1484 = vst.msk [vmem:[%s383] sm:$0xff] %vm411, %v1482
      %1485 = vst.msk [vmem:[%s383 + $0x8] sm:$0xff] %vm411, %v1483
      %v1486 = vld [vmem:[%s686] sm:$0xff]
      %v1487 = vld [vmem:[%s686 + $0x8] sm:$0xff]
      %v1488 = vld [vmem:[%s4] sm:$0x1]
      %v1489 = vlaneseq
      %v1490 = vshrl.u32 %v1489, 7
      %v1491 = vsub.s32 0, %v1490
      %v1492 = vrot.slane %v1488, %v1491
      %v1493 = vmul.f32 %v1486, %v1492
      %v1494 = vmul.f32 %v1487, %v1492
      %v1495 = vadd.f32 %v1493, 0.0
      %v1496 = vadd.f32 %v1494, 0.0
      %v1497 = vld [vmem:[%s686 + $0x1] sm:$0xff]
      %v1498 = vld [vmem:[%s686 + $0x9] sm:$0xff]
      %v1499 = vld [vmem:[%s4 + $0x1] sm:$0x1]
      %v1500 = vlaneseq
      %v1501 = vshrl.u32 %v1500, 7
      %v1502 = vsub.s32 0, %v1501
      %v1503 = vrot.slane %v1499, %v1502
      %v1504 = vmul.f32 %v1497, %v1503
      %v1505 = vmul.f32 %v1498, %v1503
      %v1506 = vadd.f32 %v1495, %v1504
      %v1507 = vadd.f32 %v1496, %v1505
      %v1508 = vld [vmem:[%s686 + $0x2] sm:$0xff]
      %v1509 = vld [vmem:[%s686 + $0xa] sm:$0xff]
      %v1510 = vld [vmem:[%s4 + $0x2] sm:$0x1]
      %v1511 = vlaneseq
      %v1512 = vshrl.u32 %v1511, 7
      %v1513 = vsub.s32 0, %v1512
      %v1514 = vrot.slane %v1510, %v1513
      %v1515 = vmul.f32 %v1508, %v1514
      %v1516 = vmul.f32 %v1509, %v1514
      %v1517 = vadd.f32 %v1506, %v1515
      %v1518 = vadd.f32 %v1507, %v1516
      %v1519 = vld [vmem:[%s828] sm:$0xff]
      %v1520 = vld [vmem:[%s828 + $0x8] sm:$0xff]
      %v1521 = vld [vmem:[%s4 + $0x3] sm:$0x1]
      %v1522 = vlaneseq
      %v1523 = vshrl.u32 %v1522, 7
      %v1524 = vsub.s32 0, %v1523
      %v1525 = vrot.slane %v1521, %v1524
      %v1526 = vmul.f32 %v1519, %v1525
      %v1527 = vmul.f32 %v1520, %v1525
      %v1528 = vadd.f32 %v1517, %v1526
      %v1529 = vadd.f32 %v1518, %v1527
      %v1530 = vld [vmem:[%s828 + $0x1] sm:$0xff]
      %v1531 = vld [vmem:[%s828 + $0x9] sm:$0xff]
      %v1532 = vld [vmem:[%s4 + $0x4] sm:$0x1]
      %v1533 = vlaneseq
      %v1534 = vshrl.u32 %v1533, 7
      %v1535 = vsub.s32 0, %v1534
      %v1536 = vrot.slane %v1532, %v1535
      %v1537 = vmul.f32 %v1530, %v1536
      %v1538 = vmul.f32 %v1531, %v1536
      %v1539 = vadd.f32 %v1528, %v1537
      %v1540 = vadd.f32 %v1529, %v1538
      %v1541 = vld [vmem:[%s828 + $0x2] sm:$0xff]
      %v1542 = vld [vmem:[%s828 + $0xa] sm:$0xff]
      %v1543 = vld [vmem:[%s4 + $0x5] sm:$0x1]
      %v1544 = vlaneseq
      %v1545 = vshrl.u32 %v1544, 7
      %v1546 = vsub.s32 0, %v1545
      %v1547 = vrot.slane %v1543, %v1546
      %v1548 = vmul.f32 %v1541, %v1547
      %v1549 = vmul.f32 %v1542, %v1547
      %v1550 = vadd.f32 %v1539, %v1548
      %v1551 = vadd.f32 %v1540, %v1549
      %v1552 = vld [vmem:[%s970] sm:$0xff]
      %v1553 = vld [vmem:[%s970 + $0x8] sm:$0xff]
      %v1554 = vld [vmem:[%s4 + $0x6] sm:$0x1]
      %v1555 = vlaneseq
      %v1556 = vshrl.u32 %v1555, 7
      %v1557 = vsub.s32 0, %v1556
      %v1558 = vrot.slane %v1554, %v1557
      %v1559 = vmul.f32 %v1552, %v1558
      %v1560 = vmul.f32 %v1553, %v1558
      %v1561 = vadd.f32 %v1550, %v1559
      %v1562 = vadd.f32 %v1551, %v1560
      %v1563 = vld [vmem:[%s970 + $0x1] sm:$0xff]
      %v1564 = vld [vmem:[%s970 + $0x9] sm:$0xff]
      %v1565 = vld [vmem:[%s4 + $0x7] sm:$0x1]
      %v1566 = vlaneseq
      %v1567 = vshrl.u32 %v1566, 7
      %v1568 = vsub.s32 0, %v1567
      %v1569 = vrot.slane %v1565, %v1568
      %v1570 = vmul.f32 %v1563, %v1569
      %v1571 = vmul.f32 %v1564, %v1569
      %v1572 = vadd.f32 %v1561, %v1570
      %v1573 = vadd.f32 %v1562, %v1571
      %v1574 = vld [vmem:[%s970 + $0x2] sm:$0xff]
      %v1575 = vld [vmem:[%s970 + $0xa] sm:$0xff]
      %v1576 = vld [vmem:[%s4 + $0x8] sm:$0x1]
      %v1577 = vlaneseq
      %v1578 = vshrl.u32 %v1577, 7
      %v1579 = vsub.s32 0, %v1578
      %v1580 = vrot.slane %v1576, %v1579
      %v1581 = vmul.f32 %v1574, %v1580
      %v1582 = vmul.f32 %v1575, %v1580
      %v1583 = vadd.f32 %v1572, %v1581
      %v1584 = vadd.f32 %v1573, %v1582
      %v1585 = vld [vmem:[%s5] sm:$0x1]
      %v1587 = vlaneseq
      %v1588 = vshrl.u32 %v1587, 7
      %v1589 = vsub.s32 0, %v1588
      %v1590 = vrot.slane %v1585, %v1589
      %v1592 = vmul.f32 %v1583, %v1590
      %v1593 = vmul.f32 %v1584, %v1590
      %v1594 = vld [vmem:[%s6] sm:$0x1]
      %v1596 = vlaneseq
      %v1597 = vshrl.u32 %v1596, 7
      %v1598 = vsub.s32 0, %v1597
      %v1599 = vrot.slane %v1594, %v1598
      %v1601 = vadd.f32 %v1592, %v1599
      %v1602 = vadd.f32 %v1593, %v1599
      %v1603 = vmax.f32 %v1601, 0.0
      %v1604 = vmax.f32 %v1602, 0.0
      %v1605 = vmin.f32 %v1603, 6.0
      %v1606 = vmin.f32 %v1604, 6.0
      %v1607 = vld [vmem:[%s7] sm:$0xff]
      %v1608 = vld [vmem:[%s7 + $0x8] sm:$0xff]
      %v1610 = vsel %vm544, %v1605, 0
      %v1613 = vsel %vm544, %v1606, 0
      %1615 = vmatprep.subr.mxu0 0.0
      %1616 = vmatpush1.msra.mxu0 %v1607
      %1617 = vmatprep.subr.mxu0 0.0
      %1618 = vmatpush1.msra.mxu0 %v1608
      %1619 = vmatprep.subr.mxu0 0.0
      %1620 = vmatpush1.msra.mxu0 0.0
      %1621 = vmatprep.subr.mxu0 0.0
      %1622 = vmatpush1.msra.mxu0 0.0
      %1623 = vmatprep.subr.mxu0 0.0
      %1624 = vmatpush1.msra.mxu0 0.0
      %1625 = vmatprep.subr.mxu0 0.0
      %1626 = vmatpush1.msra.mxu0 0.0
      %1627 = vmatprep.subr.mxu0 0.0
      %1628 = vmatpush1.msra.mxu0 0.0
      %1629 = vmatprep.subr.mxu0 0.0
      %1630 = vmatpush1.msra.mxu0 0.0
      %1631 = vmatprep.subr.mxu0 0.0
      %1632 = vmatpush1.msra.mxu0 0.0
      %1633 = vmatprep.subr.mxu0 0.0
      %1634 = vmatpush1.msra.mxu0 0.0
      %1635 = vmatprep.subr.mxu0 0.0
      %1636 = vmatpush1.msra.mxu0 0.0
      %1637 = vmatprep.subr.mxu0 0.0
      %1638 = vmatpush1.msra.mxu0 0.0
      %1639 = vmatprep.subr.mxu0 0.0
      %1640 = vmatpush1.msra.mxu0 0.0
      %1641 = vmatprep.subr.mxu0 0.0
      %1642 = vmatpush1.msra.mxu0 0.0
      %1643 = vmatprep.subr.mxu0 0.0
      %1644 = vmatpush1.msra.mxu0 0.0
      %1645 = vmatprep.subr.mxu0 0.0
      %1646 = vmatpush1.msra.mxu0 0.0
      %1647 = vmatprep.subr.mxu0 0.0
      %1648 = vmatpush1.msra.mxu0 0.0
      %1649 = vmatprep.subr.mxu0 0.0
      %1650 = vmatpush1.msra.mxu0 0.0
      %1651 = vmatprep.subr.mxu0 0.0
      %1652 = vmatpush1.msra.mxu0 0.0
      %1653 = vmatprep.subr.mxu0 0.0
      %1654 = vmatpush1.msra.mxu0 0.0
      %1655 = vmatprep.subr.mxu0 0.0
      %1656 = vmatpush1.msra.mxu0 0.0
      %1657 = vmatprep.subr.mxu0 0.0
      %1658 = vmatpush1.msra.mxu0 0.0
      %1659 = vmatprep.subr.mxu0 0.0
      %1660 = vmatpush1.msra.mxu0 0.0
      %1661 = vmatprep.subr.mxu0 0.0
      %1662 = vmatpush1.msra.mxu0 0.0
      %1663 = vmatprep.subr.mxu0 0.0
      %1664 = vmatpush1.msra.mxu0 0.0
      %1665 = vmatprep.subr.mxu0 0.0
      %1666 = vmatpush1.msra.mxu0 0.0
      %1667 = vmatprep.subr.mxu0 0.0
      %1668 = vmatpush1.msra.mxu0 0.0
      %1669 = vmatprep.subr.mxu0 0.0
      %1670 = vmatpush1.msra.mxu0 0.0
      %1671 = vmatprep.subr.mxu0 0.0
      %1672 = vmatpush1.msra.mxu0 0.0
      %1673 = vmatprep.subr.mxu0 0.0
      %1674 = vmatpush1.msra.mxu0 0.0
      %1675 = vmatprep.subr.mxu0 0.0
      %1676 = vmatpush1.msra.mxu0 0.0
      %1677 = vmatprep.subr.mxu0 0.0
      %1678 = vmatpush1.msra.mxu0 0.0
      %1679 = vmatprep.mubr.f32.mxu0 0.0
      %1680 = vmatmul.mubr.f32.gmra.mrb[0].mxu0 %v1610
      %v1681 = vpop.f32.mrb[0].mxu0
      %v1682 = vadd.f32 0.0, %v1681
      %v1683 = vpop.f32.mrb[0].mxu0
      %1684 = vmatprep.mubr.f32.mxu0 0.0
      %1685 = vmatmul.mubr.f32.gmra.mrb[0].mxu0 %v1613
      %v1686 = vpop.f32.mrb[0].mxu0
      %v1687 = vadd.f32 0.0, %v1686
      %v1688 = vpop.f32.mrb[0].mxu0
      %1689 = vdwg.mxu0
      %v1690 = vld [vmem:[%s8] sm:$0x1]
      %v1692 = vlaneseq
      %v1693 = vshrl.u32 %v1692, 7
      %v1694 = vsub.s32 0, %v1693
      %v1695 = vrot.slane %v1690, %v1694
      %v1697 = vmul.f32 %v1682, %v1695
      %v1698 = vmul.f32 %v1687, %v1695
      %v1699 = vld [vmem:[%s9] sm:$0x1]
      %v1701 = vlaneseq
      %v1702 = vshrl.u32 %v1701, 7
      %v1703 = vsub.s32 0, %v1702
      %v1704 = vrot.slane %v1699, %v1703
      %v1706 = vadd.f32 %v1697, %v1704
      %v1707 = vadd.f32 %v1698, %v1704
      %v1708 = vld [vmem:[%s692 + $0x1] sm:$0xff]
      %v1709 = vld [vmem:[%s692 + $0x9] sm:$0xff]
      %v1710 = vadd.f32 %v1706, %v1708
      %v1711 = vadd.f32 %v1707, %v1709
      %s1712 = scalar_lea.vmem %s383, 16
      %1713 = vst.msk [vmem:[%s1712] sm:$0xff] %vm411, %v1710
      %1714 = vst.msk [vmem:[%s1712 + $0x8] sm:$0xff] %vm411, %v1711
      %v1715 = vld [vmem:[%s828] sm:$0xff]
      %v1716 = vld [vmem:[%s828 + $0x8] sm:$0xff]
      %v1717 = vld [vmem:[%s4] sm:$0x1]
      %v1718 = vlaneseq
      %v1719 = vshrl.u32 %v1718, 7
      %v1720 = vsub.s32 0, %v1719
      %v1721 = vrot.slane %v1717, %v1720
      %v1722 = vmul.f32 %v1715, %v1721
      %v1723 = vmul.f32 %v1716, %v1721
      %v1724 = vadd.f32 %v1722, 0.0
      %v1725 = vadd.f32 %v1723, 0.0
      %v1726 = vld [vmem:[%s828 + $0x1] sm:$0xff]
      %v1727 = vld [vmem:[%s828 + $0x9] sm:$0xff]
      %v1728 = vld [vmem:[%s4 + $0x1] sm:$0x1]
      %v1729 = vlaneseq
      %v1730 = vshrl.u32 %v1729, 7
      %v1731 = vsub.s32 0, %v1730
      %v1732 = vrot.slane %v1728, %v1731
      %v1733 = vmul.f32 %v1726, %v1732
      %v1734 = vmul.f32 %v1727, %v1732
      %v1735 = vadd.f32 %v1724, %v1733
      %v1736 = vadd.f32 %v1725, %v1734
      %v1737 = vld [vmem:[%s828 + $0x2] sm:$0xff]
      %v1738 = vld [vmem:[%s828 + $0xa] sm:$0xff]
      %v1739 = vld [vmem:[%s4 + $0x2] sm:$0x1]
      %v1740 = vlaneseq
      %v1741 = vshrl.u32 %v1740, 7
      %v1742 = vsub.s32 0, %v1741
      %v1743 = vrot.slane %v1739, %v1742
      %v1744 = vmul.f32 %v1737, %v1743
      %v1745 = vmul.f32 %v1738, %v1743
      %v1746 = vadd.f32 %v1735, %v1744
      %v1747 = vadd.f32 %v1736, %v1745
      %v1748 = vld [vmem:[%s970] sm:$0xff]
      %v1749 = vld [vmem:[%s970 + $0x8] sm:$0xff]
      %v1750 = vld [vmem:[%s4 + $0x3] sm:$0x1]
      %v1751 = vlaneseq
      %v1752 = vshrl.u32 %v1751, 7
      %v1753 = vsub.s32 0, %v1752
      %v1754 = vrot.slane %v1750, %v1753
      %v1755 = vmul.f32 %v1748, %v1754
      %v1756 = vmul.f32 %v1749, %v1754
      %v1757 = vadd.f32 %v1746, %v1755
      %v1758 = vadd.f32 %v1747, %v1756
      %v1759 = vld [vmem:[%s970 + $0x1] sm:$0xff]
      %v1760 = vld [vmem:[%s970 + $0x9] sm:$0xff]
      %v1761 = vld [vmem:[%s4 + $0x4] sm:$0x1]
      %v1762 = vlaneseq
      %v1763 = vshrl.u32 %v1762, 7
      %v1764 = vsub.s32 0, %v1763
      %v1765 = vrot.slane %v1761, %v1764
      %v1766 = vmul.f32 %v1759, %v1765
      %v1767 = vmul.f32 %v1760, %v1765
      %v1768 = vadd.f32 %v1757, %v1766
      %v1769 = vadd.f32 %v1758, %v1767
      %v1770 = vld [vmem:[%s970 + $0x2] sm:$0xff]
      %v1771 = vld [vmem:[%s970 + $0xa] sm:$0xff]
      %v1772 = vld [vmem:[%s4 + $0x5] sm:$0x1]
      %v1773 = vlaneseq
      %v1774 = vshrl.u32 %v1773, 7
      %v1775 = vsub.s32 0, %v1774
      %v1776 = vrot.slane %v1772, %v1775
      %v1777 = vmul.f32 %v1770, %v1776
      %v1778 = vmul.f32 %v1771, %v1776
      %v1779 = vadd.f32 %v1768, %v1777
      %v1780 = vadd.f32 %v1769, %v1778
      %v1781 = vld [vmem:[%s1112] sm:$0xff]
      %v1782 = vld [vmem:[%s1112 + $0x8] sm:$0xff]
      %v1783 = vld [vmem:[%s4 + $0x6] sm:$0x1]
      %v1784 = vlaneseq
      %v1785 = vshrl.u32 %v1784, 7
      %v1786 = vsub.s32 0, %v1785
      %v1787 = vrot.slane %v1783, %v1786
      %v1788 = vmul.f32 %v1781, %v1787
      %v1789 = vmul.f32 %v1782, %v1787
      %v1790 = vadd.f32 %v1779, %v1788
      %v1791 = vadd.f32 %v1780, %v1789
      %v1792 = vld [vmem:[%s1112 + $0x1] sm:$0xff]
      %v1793 = vld [vmem:[%s1112 + $0x9] sm:$0xff]
      %v1794 = vld [vmem:[%s4 + $0x7] sm:$0x1]
      %v1795 = vlaneseq
      %v1796 = vshrl.u32 %v1795, 7
      %v1797 = vsub.s32 0, %v1796
      %v1798 = vrot.slane %v1794, %v1797
      %v1799 = vmul.f32 %v1792, %v1798
      %v1800 = vmul.f32 %v1793, %v1798
      %v1801 = vadd.f32 %v1790, %v1799
      %v1802 = vadd.f32 %v1791, %v1800
      %v1803 = vld [vmem:[%s1112 + $0x2] sm:$0xff]
      %v1804 = vld [vmem:[%s1112 + $0xa] sm:$0xff]
      %v1805 = vld [vmem:[%s4 + $0x8] sm:$0x1]
      %v1806 = vlaneseq
      %v1807 = vshrl.u32 %v1806, 7
      %v1808 = vsub.s32 0, %v1807
      %v1809 = vrot.slane %v1805, %v1808
      %v1810 = vmul.f32 %v1803, %v1809
      %v1811 = vmul.f32 %v1804, %v1809
      %v1812 = vadd.f32 %v1801, %v1810
      %v1813 = vadd.f32 %v1802, %v1811
      %v1814 = vld [vmem:[%s5] sm:$0x1]
      %v1816 = vlaneseq
      %v1817 = vshrl.u32 %v1816, 7
      %v1818 = vsub.s32 0, %v1817
      %v1819 = vrot.slane %v1814, %v1818
      %v1821 = vmul.f32 %v1812, %v1819
      %v1822 = vmul.f32 %v1813, %v1819
      %v1823 = vld [vmem:[%s6] sm:$0x1]
      %v1825 = vlaneseq
      %v1826 = vshrl.u32 %v1825, 7
      %v1827 = vsub.s32 0, %v1826
      %v1828 = vrot.slane %v1823, %v1827
      %v1830 = vadd.f32 %v1821, %v1828
      %v1831 = vadd.f32 %v1822, %v1828
      %v1832 = vmax.f32 %v1830, 0.0
      %v1833 = vmax.f32 %v1831, 0.0
      %v1834 = vmin.f32 %v1832, 6.0
      %v1835 = vmin.f32 %v1833, 6.0
      %v1836 = vld [vmem:[%s7] sm:$0xff]
      %v1837 = vld [vmem:[%s7 + $0x8] sm:$0xff]
      %v1839 = vsel %vm544, %v1834, 0
      %v1842 = vsel %vm544, %v1835, 0
      %1844 = vmatprep.subr.mxu0 0.0
      %1845 = vmatpush1.msra.mxu0 %v1836
      %1846 = vmatprep.subr.mxu0 0.0
      %1847 = vmatpush1.msra.mxu0 %v1837
      %1848 = vmatprep.subr.mxu0 0.0
      %1849 = vmatpush1.msra.mxu0 0.0
      %1850 = vmatprep.subr.mxu0 0.0
      %1851 = vmatpush1.msra.mxu0 0.0
      %1852 = vmatprep.subr.mxu0 0.0
      %1853 = vmatpush1.msra.mxu0 0.0
      %1854 = vmatprep.subr.mxu0 0.0
      %1855 = vmatpush1.msra.mxu0 0.0
      %1856 = vmatprep.subr.mxu0 0.0
      %1857 = vmatpush1.msra.mxu0 0.0
      %1858 = vmatprep.subr.mxu0 0.0
      %1859 = vmatpush1.msra.mxu0 0.0
      %1860 = vmatprep.subr.mxu0 0.0
      %1861 = vmatpush1.msra.mxu0 0.0
      %1862 = vmatprep.subr.mxu0 0.0
      %1863 = vmatpush1.msra.mxu0 0.0
      %1864 = vmatprep.subr.mxu0 0.0
      %1865 = vmatpush1.msra.mxu0 0.0
      %1866 = vmatprep.subr.mxu0 0.0
      %1867 = vmatpush1.msra.mxu0 0.0
      %1868 = vmatprep.subr.mxu0 0.0
      %1869 = vmatpush1.msra.mxu0 0.0
      %1870 = vmatprep.subr.mxu0 0.0
      %1871 = vmatpush1.msra.mxu0 0.0
      %1872 = vmatprep.subr.mxu0 0.0
      %1873 = vmatpush1.msra.mxu0 0.0
      %1874 = vmatprep.subr.mxu0 0.0
      %1875 = vmatpush1.msra.mxu0 0.0
      %1876 = vmatprep.subr.mxu0 0.0
      %1877 = vmatpush1.msra.mxu0 0.0
      %1878 = vmatprep.subr.mxu0 0.0
      %1879 = vmatpush1.msra.mxu0 0.0
      %1880 = vmatprep.subr.mxu0 0.0
      %1881 = vmatpush1.msra.mxu0 0.0
      %1882 = vmatprep.subr.mxu0 0.0
      %1883 = vmatpush1.msra.mxu0 0.0
      %1884 = vmatprep.subr.mxu0 0.0
      %1885 = vmatpush1.msra.mxu0 0.0
      %1886 = vmatprep.subr.mxu0 0.0
      %1887 = vmatpush1.msra.mxu0 0.0
      %1888 = vmatprep.subr.mxu0 0.0
      %1889 = vmatpush1.msra.mxu0 0.0
      %1890 = vmatprep.subr.mxu0 0.0
      %1891 = vmatpush1.msra.mxu0 0.0
      %1892 = vmatprep.subr.mxu0 0.0
      %1893 = vmatpush1.msra.mxu0 0.0
      %1894 = vmatprep.subr.mxu0 0.0
      %1895 = vmatpush1.msra.mxu0 0.0
      %1896 = vmatprep.subr.mxu0 0.0
      %1897 = vmatpush1.msra.mxu0 0.0
      %1898 = vmatprep.subr.mxu0 0.0
      %1899 = vmatpush1.msra.mxu0 0.0
      %1900 = vmatprep.subr.mxu0 0.0
      %1901 = vmatpush1.msra.mxu0 0.0
      %1902 = vmatprep.subr.mxu0 0.0
      %1903 = vmatpush1.msra.mxu0 0.0
      %1904 = vmatprep.subr.mxu0 0.0
      %1905 = vmatpush1.msra.mxu0 0.0
      %1906 = vmatprep.subr.mxu0 0.0
      %1907 = vmatpush1.msra.mxu0 0.0
      %1908 = vmatprep.mubr.f32.mxu0 0.0
      %1909 = vmatmul.mubr.f32.gmra.mrb[0].mxu0 %v1839
      %v1910 = vpop.f32.mrb[0].mxu0
      %v1911 = vadd.f32 0.0, %v1910
      %v1912 = vpop.f32.mrb[0].mxu0
      %1913 = vmatprep.mubr.f32.mxu0 0.0
      %1914 = vmatmul.mubr.f32.gmra.mrb[0].mxu0 %v1842
      %v1915 = vpop.f32.mrb[0].mxu0
      %v1916 = vadd.f32 0.0, %v1915
      %v1917 = vpop.f32.mrb[0].mxu0
      %1918 = vdwg.mxu0
      %v1919 = vld [vmem:[%s8] sm:$0x1]
      %v1921 = vlaneseq
      %v1922 = vshrl.u32 %v1921, 7
      %v1923 = vsub.s32 0, %v1922
      %v1924 = vrot.slane %v1919, %v1923
      %v1926 = vmul.f32 %v1911, %v1924
      %v1927 = vmul.f32 %v1916, %v1924
      %v1928 = vld [vmem:[%s9] sm:$0x1]
      %v1930 = vlaneseq
      %v1931 = vshrl.u32 %v1930, 7
      %v1932 = vsub.s32 0, %v1931
      %v1933 = vrot.slane %v1928, %v1932
      %v1935 = vadd.f32 %v1926, %v1933
      %v1936 = vadd.f32 %v1927, %v1933
      %v1937 = vld [vmem:[%s834 + $0x1] sm:$0xff]
      %v1938 = vld [vmem:[%s834 + $0x9] sm:$0xff]
      %v1939 = vadd.f32 %v1935, %v1937
      %v1940 = vadd.f32 %v1936, %v1938
      %s1941 = scalar_lea.vmem %s383, 32
      %1942 = vst.msk [vmem:[%s1941] sm:$0xff] %vm411, %v1939
      %1943 = vst.msk [vmem:[%s1941 + $0x8] sm:$0xff] %vm411, %v1940
      %v1944 = vld [vmem:[%s970] sm:$0xff]
      %v1945 = vld [vmem:[%s970 + $0x8] sm:$0xff]
      %v1946 = vld [vmem:[%s4] sm:$0x1]
      %v1947 = vlaneseq
      %v1948 = vshrl.u32 %v1947, 7
      %v1949 = vsub.s32 0, %v1948
      %v1950 = vrot.slane %v1946, %v1949
      %v1951 = vmul.f32 %v1944, %v1950
      %v1952 = vmul.f32 %v1945, %v1950
      %v1953 = vadd.f32 %v1951, 0.0
      %v1954 = vadd.f32 %v1952, 0.0
      %v1955 = vld [vmem:[%s970 + $0x1] sm:$0xff]
      %v1956 = vld [vmem:[%s970 + $0x9] sm:$0xff]
      %v1957 = vld [vmem:[%s4 + $0x1] sm:$0x1]
      %v1958 = vlaneseq
      %v1959 = vshrl.u32 %v1958, 7
      %v1960 = vsub.s32 0, %v1959
      %v1961 = vrot.slane %v1957, %v1960
      %v1962 = vmul.f32 %v1955, %v1961
      %v1963 = vmul.f32 %v1956, %v1961
      %v1964 = vadd.f32 %v1953, %v1962
      %v1965 = vadd.f32 %v1954, %v1963
      %v1966 = vld [vmem:[%s970 + $0x2] sm:$0xff]
      %v1967 = vld [vmem:[%s970 + $0xa] sm:$0xff]
      %v1968 = vld [vmem:[%s4 + $0x2] sm:$0x1]
      %v1969 = vlaneseq
      %v1970 = vshrl.u32 %v1969, 7
      %v1971 = vsub.s32 0, %v1970
      %v1972 = vrot.slane %v1968, %v1971
      %v1973 = vmul.f32 %v1966, %v1972
      %v1974 = vmul.f32 %v1967, %v1972
      %v1975 = vadd.f32 %v1964, %v1973
      %v1976 = vadd.f32 %v1965, %v1974
      %v1977 = vld [vmem:[%s1112] sm:$0xff]
      %v1978 = vld [vmem:[%s1112 + $0x8] sm:$0xff]
      %v1979 = vld [vmem:[%s4 + $0x3] sm:$0x1]
      %v1980 = vlaneseq
      %v1981 = vshrl.u32 %v1980, 7
      %v1982 = vsub.s32 0, %v1981
      %v1983 = vrot.slane %v1979, %v1982
      %v1984 = vmul.f32 %v1977, %v1983
      %v1985 = vmul.f32 %v1978, %v1983
      %v1986 = vadd.f32 %v1975, %v1984
      %v1987 = vadd.f32 %v1976, %v1985
      %v1988 = vld [vmem:[%s1112 + $0x1] sm:$0xff]
      %v1989 = vld [vmem:[%s1112 + $0x9] sm:$0xff]
      %v1990 = vld [vmem:[%s4 + $0x4] sm:$0x1]
      %v1991 = vlaneseq
      %v1992 = vshrl.u32 %v1991, 7
      %v1993 = vsub.s32 0, %v1992
      %v1994 = vrot.slane %v1990, %v1993
      %v1995 = vmul.f32 %v1988, %v1994
      %v1996 = vmul.f32 %v1989, %v1994
      %v1997 = vadd.f32 %v1986, %v1995
      %v1998 = vadd.f32 %v1987, %v1996
      %v1999 = vld [vmem:[%s1112 + $0x2] sm:$0xff]
      %v2000 = vld [vmem:[%s1112 + $0xa] sm:$0xff]
      %v2001 = vld [vmem:[%s4 + $0x5] sm:$0x1]
      %v2002 = vlaneseq
      %v2003 = vshrl.u32 %v2002, 7
      %v2004 = vsub.s32 0, %v2003
      %v2005 = vrot.slane %v2001, %v2004
      %v2006 = vmul.f32 %v1999, %v2005
      %v2007 = vmul.f32 %v2000, %v2005
      %v2008 = vadd.f32 %v1997, %v2006
      %v2009 = vadd.f32 %v1998, %v2007
      %v2010 = vld [vmem:[%s1254] sm:$0xff]
      %v2011 = vld [vmem:[%s1254 + $0x8] sm:$0xff]
      %v2012 = vld [vmem:[%s4 + $0x6] sm:$0x1]
      %v2013 = vlaneseq
      %v2014 = vshrl.u32 %v2013, 7
      %v2015 = vsub.s32 0, %v2014
      %v2016 = vrot.slane %v2012, %v2015
      %v2017 = vmul.f32 %v2010, %v2016
      %v2018 = vmul.f32 %v2011, %v2016
      %v2019 = vadd.f32 %v2008, %v2017
      %v2020 = vadd.f32 %v2009, %v2018
      %v2021 = vld [vmem:[%s1254 + $0x1] sm:$0xff]
      %v2022 = vld [vmem:[%s1254 + $0x9] sm:$0xff]
      %v2023 = vld [vmem:[%s4 + $0x7] sm:$0x1]
      %v2024 = vlaneseq
      %v2025 = vshrl.u32 %v2024, 7
      %v2026 = vsub.s32 0, %v2025
      %v2027 = vrot.slane %v2023, %v2026
      %v2028 = vmul.f32 %v2021, %v2027
      %v2029 = vmul.f32 %v2022, %v2027
      %v2030 = vadd.f32 %v2019, %v2028
      %v2031 = vadd.f32 %v2020, %v2029
      %v2032 = vld [vmem:[%s1254 + $0x2] sm:$0xff]
      %v2033 = vld [vmem:[%s1254 + $0xa] sm:$0xff]
      %v2034 = vld [vmem:[%s4 + $0x8] sm:$0x1]
      %v2035 = vlaneseq
      %v2036 = vshrl.u32 %v2035, 7
      %v2037 = vsub.s32 0, %v2036
      %v2038 = vrot.slane %v2034, %v2037
      %v2039 = vmul.f32 %v2032, %v2038
      %v2040 = vmul.f32 %v2033, %v2038
      %v2041 = vadd.f32 %v2030, %v2039
      %v2042 = vadd.f32 %v2031, %v2040
      %v2043 = vld [vmem:[%s5] sm:$0x1]
      %v2045 = vlaneseq
      %v2046 = vshrl.u32 %v2045, 7
      %v2047 = vsub.s32 0, %v2046
      %v2048 = vrot.slane %v2043, %v2047
      %v2050 = vmul.f32 %v2041, %v2048
      %v2051 = vmul.f32 %v2042, %v2048
      %v2052 = vld [vmem:[%s6] sm:$0x1]
      %v2054 = vlaneseq
      %v2055 = vshrl.u32 %v2054, 7
      %v2056 = vsub.s32 0, %v2055
      %v2057 = vrot.slane %v2052, %v2056
      %v2059 = vadd.f32 %v2050, %v2057
      %v2060 = vadd.f32 %v2051, %v2057
      %v2061 = vmax.f32 %v2059, 0.0
      %v2062 = vmax.f32 %v2060, 0.0
      %v2063 = vmin.f32 %v2061, 6.0
      %v2064 = vmin.f32 %v2062, 6.0
      %v2065 = vld [vmem:[%s7] sm:$0xff]
      %v2066 = vld [vmem:[%s7 + $0x8] sm:$0xff]
      %v2068 = vsel %vm544, %v2063, 0
      %v2071 = vsel %vm544, %v2064, 0
      %2073 = vmatprep.subr.mxu0 0.0
      %2074 = vmatpush1.msra.mxu0 %v2065
      %2075 = vmatprep.subr.mxu0 0.0
      %2076 = vmatpush1.msra.mxu0 %v2066
      %2077 = vmatprep.subr.mxu0 0.0
      %2078 = vmatpush1.msra.mxu0 0.0
      %2079 = vmatprep.subr.mxu0 0.0
      %2080 = vmatpush1.msra.mxu0 0.0
      %2081 = vmatprep.subr.mxu0 0.0
      %2082 = vmatpush1.msra.mxu0 0.0
      %2083 = vmatprep.subr.mxu0 0.0
      %2084 = vmatpush1.msra.mxu0 0.0
      %2085 = vmatprep.subr.mxu0 0.0
      %2086 = vmatpush1.msra.mxu0 0.0
      %2087 = vmatprep.subr.mxu0 0.0
      %2088 = vmatpush1.msra.mxu0 0.0
      %2089 = vmatprep.subr.mxu0 0.0
      %2090 = vmatpush1.msra.mxu0 0.0
      %2091 = vmatprep.subr.mxu0 0.0
      %2092 = vmatpush1.msra.mxu0 0.0
      %2093 = vmatprep.subr.mxu0 0.0
      %2094 = vmatpush1.msra.mxu0 0.0
      %2095 = vmatprep.subr.mxu0 0.0
      %2096 = vmatpush1.msra.mxu0 0.0
      %2097 = vmatprep.subr.mxu0 0.0
      %2098 = vmatpush1.msra.mxu0 0.0
      %2099 = vmatprep.subr.mxu0 0.0
      %2100 = vmatpush1.msra.mxu0 0.0
      %2101 = vmatprep.subr.mxu0 0.0
      %2102 = vmatpush1.msra.mxu0 0.0
      %2103 = vmatprep.subr.mxu0 0.0
      %2104 = vmatpush1.msra.mxu0 0.0
      %2105 = vmatprep.subr.mxu0 0.0
      %2106 = vmatpush1.msra.mxu0 0.0
      %2107 = vmatprep.subr.mxu0 0.0
      %2108 = vmatpush1.msra.mxu0 0.0
      %2109 = vmatprep.subr.mxu0 0.0
      %2110 = vmatpush1.msra.mxu0 0.0
      %2111 = vmatprep.subr.mxu0 0.0
      %2112 = vmatpush1.msra.mxu0 0.0
      %2113 = vmatprep.subr.mxu0 0.0
      %2114 = vmatpush1.msra.mxu0 0.0
      %2115 = vmatprep.subr.mxu0 0.0
      %2116 = vmatpush1.msra.mxu0 0.0
      %2117 = vmatprep.subr.mxu0 0.0
      %2118 = vmatpush1.msra.mxu0 0.0
      %2119 = vmatprep.subr.mxu0 0.0
      %2120 = vmatpush1.msra.mxu0 0.0
      %2121 = vmatprep.subr.mxu0 0.0
      %2122 = vmatpush1.msra.mxu0 0.0
      %2123 = vmatprep.subr.mxu0 0.0
      %2124 = vmatpush1.msra.mxu0 0.0
      %2125 = vmatprep.subr.mxu0 0.0
      %2126 = vmatpush1.msra.mxu0 0.0
      %2127 = vmatprep.subr.mxu0 0.0
      %2128 = vmatpush1.msra.mxu0 0.0
      %2129 = vmatprep.subr.mxu0 0.0
      %2130 = vmatpush1.msra.mxu0 0.0
      %2131 = vmatprep.subr.mxu0 0.0
      %2132 = vmatpush1.msra.mxu0 0.0
      %2133 = vmatprep.subr.mxu0 0.0
      %2134 = vmatpush1.msra.mxu0 0.0
      %2135 = vmatprep.subr.mxu0 0.0
      %2136 = vmatpush1.msra.mxu0 0.0
      %2137 = vmatprep.mubr.f32.mxu0 0.0
      %2138 = vmatmul.mubr.f32.gmra.mrb[0].mxu0 %v2068
      %v2139 = vpop.f32.mrb[0].mxu0
      %v2140 = vadd.f32 0.0, %v2139
      %v2141 = vpop.f32.mrb[0].mxu0
      %2142 = vmatprep.mubr.f32.mxu0 0.0
      %2143 = vmatmul.mubr.f32.gmra.mrb[0].mxu0 %v2071
      %v2144 = vpop.f32.mrb[0].mxu0
      %v2145 = vadd.f32 0.0, %v2144
      %v2146 = vpop.f32.mrb[0].mxu0
      %2147 = vdwg.mxu0
      %v2148 = vld [vmem:[%s8] sm:$0x1]
      %v2150 = vlaneseq
      %v2151 = vshrl.u32 %v2150, 7
      %v2152 = vsub.s32 0, %v2151
      %v2153 = vrot.slane %v2148, %v2152
      %v2155 = vmul.f32 %v2140, %v2153
      %v2156 = vmul.f32 %v2145, %v2153
      %v2157 = vld [vmem:[%s9] sm:$0x1]
      %v2159 = vlaneseq
      %v2160 = vshrl.u32 %v2159, 7
      %v2161 = vsub.s32 0, %v2160
      %v2162 = vrot.slane %v2157, %v2161
      %v2164 = vadd.f32 %v2155, %v2162
      %v2165 = vadd.f32 %v2156, %v2162
      %v2166 = vld [vmem:[%s976 + $0x1] sm:$0xff]
      %v2167 = vld [vmem:[%s976 + $0x9] sm:$0xff]
      %v2168 = vadd.f32 %v2164, %v2166
      %v2169 = vadd.f32 %v2165, %v2167
      %s2170 = scalar_lea.vmem %s383, 48
      %2171 = vst.msk [vmem:[%s2170] sm:$0xff] %vm411, %v2168
      %2172 = vst.msk [vmem:[%s2170 + $0x8] sm:$0xff] %vm411, %v2169
      %s2173 = smul.u32 4, %s26
      %p2174 = scmp.lt.s32.totalorder %s25, 1
      %s2175 = scalar_select %p2174, %s25, 1
      %p2176 = scmp.lt.s32.totalorder %s2173, 15
      %s2177 = scalar_select %p2176, %s2173, 15
      %s2178 = smul.addr %s2177, 2
      %s2179 = smul.addr %s2175, 32
      %s2180 = sadd.s32 %s2178, %s2179
      %s2181 = smul.addr %s2180, 8
      %s2182 = scalar_lea.vmem %s10, %s2181
      // Predicated region
      $region61: #{inverted_residual.1} parent=59 // pred_check
        %p2183 = pneg %p268
      $region62: #{inverted_residual.1} parent=59 // pred_check_branch
        %2185 = sbr.rel (%p2183) target = $region64
      $region63: #{inverted_residual.1} parent=59 // pred_region
        %s2186 = smul.u32 4, %s26
      $region64: #{inverted_residual.1} parent=59 // pred_fallthru
        _
    $region60: #{inverted_residual.1} parent=5 // pred_fallthru
      _
    %p2187 = scmp.le.s32.totalorder 2, %s16
    // Predicated region
    $region65: #{inverted_residual.1} parent=5 // pred_check
      %p2188 = pneg %p2187
    $region66: #{inverted_residual.1} parent=5 // pred_check_branch
      %2190 = sbr.rel (%p2188) target = $region68
    $region67: #{inverted_residual.1} parent=5 // pred_region
      %s2191 = ssub.s32 %s16, 2
      // Predicated region
      $region69: #{inverted_residual.1} parent=67 // pred_check
        %p2192 = pneg %p274
      $region70: #{inverted_residual.1} parent=67 // pred_check_branch
        %2194 = sbr.rel (%p2192) target = $region72
      $region71: #{inverted_residual.1} parent=67 // pred_region
        %s2195 = smul.u32 4, %s28
        %p2196 = scmp.lt.s32.totalorder %s27, 1
        %s2197 = scalar_select %p2196, %s27, 1
        %p2198 = scmp.lt.s32.totalorder %s2195, 15
        %s2199 = scalar_select %p2198, %s2195, 15
        %s2200 = smul.addr %s2199, 2
        %s2201 = smul.addr %s2197, 32
        %s2202 = sadd.s32 %s2200, %s2201
        %s2203 = smul.addr %s2202, 8
        %s2204 = scalar_lea.vmem %s10, %s2203
      $region72: #{inverted_residual.1} parent=67 // pred_fallthru
        _
    $region68: #{inverted_residual.1} parent=5 // pred_fallthru
      _
  $region6: #{inverted_residual.1} parent=0 // loop_footer
    %s20 = sadd.s32 1, %s16
  $region7: #{inverted_residual.1} parent=0 // loop_footer_branch
    %15 = sbr.rel target = $region3
  $region8: #{inverted_residual.1} parent=0 // loop_exit
    _

</llo_original>
